<compile_context>
chip_gen: v6e
topology: v6e:2x2x1
jax: 0.10.0
libtpu: 0.0.40
codegen_flags: <defaults>
</compile_context>

<pallas_src>
import jax
import jax.numpy as jnp
from jax import lax
from jax.experimental import pallas as pl
from jax.experimental.pallas import tpu as pltpu

D_MODEL = 32
NHEAD = 4
DIM_FF = 64
HEAD_DIM = D_MODEL // NHEAD
LN_EPS = 1e-5
ATTN_SCALE = 1.0 / float(HEAD_DIM) ** 0.5


def _layernorm(x, g, b):
    """One-pass LayerNorm statistics: var = E[x^2] - mu^2."""
    mu = jnp.mean(x, axis=-1, keepdims=True)
    ms = jnp.mean(x * x, axis=-1, keepdims=True)
    var = ms - mu * mu
    return (x - mu) * lax.rsqrt(var + LN_EPS) * g + b


def _attention(q2, k2, v2, wo, bo, n, lq, skv, head_masks):
    """q2: (n*lq, E); k2/v2: (n*skv, E), all already projected (+bias).

    Heads remain packed along the 32-lane axis. Per-head contraction is done by
    lane-masking one operand of each batched einsum instead of slicing 8-lane
    sub-vregs; the masked head outputs sum directly into the packed (n, lq, E)
    buffer (equivalent to concat over heads), followed by a single output
    projection matmul."""
    q3 = q2.reshape(n, lq, D_MODEL)
    k3 = k2.reshape(n, skv, D_MODEL)
    v3 = v2.reshape(n, skv, D_MODEL)
    o = jnp.zeros((n, lq, D_MODEL), jnp.float32)
    for m in head_masks:  # static, unrolled (NHEAD = 4)
        s = jnp.einsum('bld,bsd->bls', q3 * m, k3,
                       preferred_element_type=jnp.float32) * ATTN_SCALE
        s = s - jnp.max(s, axis=-1, keepdims=True)
        p = jnp.exp(s)
        p = p / jnp.sum(p, axis=-1, keepdims=True)
        o = o + jnp.einsum('bls,bsd->bld', p, v3 * m,
                           preferred_element_type=jnp.float32)
    o2 = o.reshape(n * lq, D_MODEL)
    return jnp.dot(o2, wo, preferred_element_type=jnp.float32) + bo


def decoder_layer_kernel(tgt_ref, mem_ref, qpos_ref, pos_ref,
                         sa_wqk_ref, sa_wv_ref, sa_wo_ref, sa_b_ref,
                         ca_wq_ref, ca_wk_ref, ca_wv_ref, ca_wo_ref, ca_b_ref,
                         w1_ref, b1_ref, w2_ref, b2_ref,
                         ln_g_ref, ln_b_ref, out_ref):
    n, l, e = tgt_ref.shape
    s = mem_ref.shape[1]

    # Fold batch into the matmul M dimension (leading-dim merge, layout-free).
    tgt = tgt_ref[...].reshape(n * l, e)
    qpos = qpos_ref[...].reshape(n * l, e)
    mem = mem_ref[...].reshape(n * s, e)
    pos = pos_ref[...].reshape(n * s, e)

    # Load small parameter tables once; slice the loaded values.
    ln_g = ln_g_ref[...]
    ln_b = ln_b_ref[...]
    sa_b = sa_b_ref[...]
    ca_b = ca_b_ref[...]

    # Per-head lane masks (compile-time constants), shape (1, E).
    lane = lax.broadcasted_iota(jnp.int32, (1, e), 1)
    head_masks = [
        ((lane >= h * HEAD_DIM) & (lane < (h + 1) * HEAD_DIM)).astype(jnp.float32)
        for h in range(NHEAD)
    ]

    # ---- self-attention block (fused Q/K projection: identical input) ----
    x_qk = tgt + qpos
    qk = jnp.dot(x_qk, sa_wqk_ref[...], preferred_element_type=jnp.float32)
    q = qk[:, :e] + sa_b[0:1]
    k = qk[:, e:] + sa_b[1:2]
    v = jnp.dot(tgt, sa_wv_ref[...], preferred_element_type=jnp.float32) + sa_b[2:3]
    sa_out = _attention(q, k, v, sa_wo_ref[...], sa_b[3:4], n, l, l, head_masks)
    t = _layernorm(tgt + sa_out, ln_g[0:1], ln_b[0:1])

    # ---- cross-attention block (q/k/v come from different inputs) ----
    cq = jnp.dot(t + qpos, ca_wq_ref[...], preferred_element_type=jnp.float32) + ca_b[0:1]
    ck = jnp.dot(mem + pos, ca_wk_ref[...], preferred_element_type=jnp.float32) + ca_b[1:2]
    cv = jnp.dot(mem, ca_wv_ref[...], preferred_element_type=jnp.float32) + ca_b[2:3]
    ca_out = _attention(cq, ck, cv, ca_wo_ref[...], ca_b[3:4], n, l, s, head_masks)
    t = _layernorm(t + ca_out, ln_g[1:2], ln_b[1:2])

    # ---- feed-forward block (relu) ----
    h1 = jnp.maximum(
        jnp.dot(t, w1_ref[...], preferred_element_type=jnp.float32) + b1_ref[...], 0.0)
    ff = jnp.dot(h1, w2_ref[...], preferred_element_type=jnp.float32) + b2_ref[...]
    t = _layernorm(t + ff, ln_g[2:3], ln_b[2:3])

    out_ref[...] = t.reshape(n, l, e)


def _decoder_layer_impl(tgt, memory, query_pos, pos, params):
    """tgt/query_pos: (L, N, E); memory/pos: (S, N, E). Returns (L, N, E)."""
    L, N, E = tgt.shape
    S = memory.shape[0]
    # seq-first -> batch-first; these transposes live inside the same jit as
    # the kernel so they are compiled into the single dispatch.
    tgt_b = jnp.transpose(tgt, (1, 0, 2))
    mem_b = jnp.transpose(memory, (1, 0, 2))
    qpos_b = jnp.transpose(query_pos, (1, 0, 2))
    pos_b = jnp.transpose(pos, (1, 0, 2))

    vmem = pl.BlockSpec(memory_space=pltpu.MemorySpace.VMEM)
    out = pl.pallas_call(
        decoder_layer_kernel,
        out_shape=jax.ShapeDtypeStruct((N, L, E), jnp.float32),
        in_specs=[vmem] * 19,      # gridless: whole arrays resident in VMEM
        out_specs=vmem,
    )(tgt_b, mem_b, qpos_b, pos_b,
      params["sa_wqk"], params["sa_wv"], params["sa_wo"], params["sa_b"],
      params["ca_wq"], params["ca_wk"], params["ca_wv"], params["ca_wo"], params["ca_b"],
      params["w1"], params["b1"], params["w2"], params["b2"],
      params["ln_g"], params["ln_b"])
    return jnp.transpose(out, (1, 0, 2))


transformer_decoder_layer = jax.jit(_decoder_layer_impl)


def _reference(tgt_b, mem_b, qpos_b, pos_b, p):
    """Pure-JAX reference with the same math (batch-first, exact softmax/LN)."""
    def attn(q, k, v, wo, bo):
        outs = []
        for h in range(NHEAD):
            s0, e0 = h * HEAD_DIM, (h + 1) * HEAD_DIM
            sc = jnp.einsum('bld,bsd->bls', q[..., s0:e0], k[..., s0:e0]) / (HEAD_DIM ** 0.5)
            a = jax.nn.softmax(sc, axis=-1)
            outs.append(jnp.einsum('bls,bsd->bld', a, v[..., s0:e0]))
        o = jnp.concatenate(outs, axis=-1)
        return o @ wo + bo

    def ln(x, g, b):
        mu = x.mean(-1, keepdims=True)
        var = ((x - mu) ** 2).mean(-1, keepdims=True)
        return (x - mu) / jnp.sqrt(var + LN_EPS) * g + b

    x_qk = tgt_b + qpos_b
    qk = x_qk @ p["sa_wqk"]
    q = qk[..., :D_MODEL] + p["sa_b"][0]
    k = qk[..., D_MODEL:] + p["sa_b"][1]
    v = tgt_b @ p["sa_wv"] + p["sa_b"][2]
    t = ln(tgt_b + attn(q, k, v, p["sa_wo"], p["sa_b"][3]),
           p["ln_g"][0], p["ln_b"][0])

    cq = (t + qpos_b) @ p["ca_wq"] + p["ca_b"][0]
    ck = (mem_b + pos_b) @ p["ca_wk"] + p["ca_b"][1]
    cv = mem_b @ p["ca_wv"] + p["ca_b"][2]
    t = ln(t + attn(cq, ck, cv, p["ca_wo"], p["ca_b"][3]),
           p["ln_g"][1], p["ln_b"][1])

    h1 = jnp.maximum(t @ p["w1"] + p["b1"][0], 0.0)
    t = ln(t + h1 @ p["w2"] + p["b2"][0], p["ln_g"][2], p["ln_b"][2])
    return t


if __name__ == "__main__":
    key = jax.random.PRNGKey(0)
    L, S, N = 8, 16, 2
    ks = jax.random.split(key, 17)

    def init(k, shape, scale=0.1):
        return jax.random.normal(k, shape, jnp.float32) * scale

    params = {
        "sa_wqk": init(ks[0], (D_MODEL, 2 * D_MODEL)),   # [Wq | Wk] fused
        "sa_wv": init(ks[1], (D_MODEL, D_MODEL)),
        "sa_wo": init(ks[2], (D_MODEL, D_MODEL)),
        "sa_b": init(ks[3], (4, D_MODEL)),               # rows: bq, bk, bv, bo
        "ca_wq": init(ks[4], (D_MODEL, D_MODEL)),
        "ca_wk": init(ks[5], (D_MODEL, D_MODEL)),
        "ca_wv": init(ks[6], (D_MODEL, D_MODEL)),
        "ca_wo": init(ks[7], (D_MODEL, D_MODEL)),
        "ca_b": init(ks[8], (4, D_MODEL)),               # rows: bq, bk, bv, bo
        "w1": init(ks[9], (D_MODEL, DIM_FF)),
        "b1": init(ks[10], (1, DIM_FF)),
        "w2": init(ks[11], (DIM_FF, D_MODEL)),
        "b2": init(ks[12], (1, D_MODEL)),
        "ln_g": jnp.ones((3, D_MODEL), jnp.float32),
        "ln_b": jnp.zeros((3, D_MODEL), jnp.float32),
    }

    tgt = jax.random.normal(ks[13], (L, N, D_MODEL), jnp.float32)
    memory = jax.random.normal(ks[14], (S, N, D_MODEL), jnp.float32)
    query_pos = jax.random.normal(ks[15], (L, N, D_MODEL), jnp.float32)
    pos = jax.random.normal(ks[16], (S, N, D_MODEL), jnp.float32)

    out = transformer_decoder_layer(tgt, memory, query_pos, pos, params)
    out = jax.block_until_ready(out)

    ref_b = _reference(jnp.transpose(tgt, (1, 0, 2)),
                       jnp.transpose(memory, (1, 0, 2)),
                       jnp.transpose(query_pos, (1, 0, 2)),
                       jnp.transpose(pos, (1, 0, 2)), params)
    ref = jnp.transpose(ref_b, (1, 0, 2))

    assert out.shape == (L, N, D_MODEL)
    assert jnp.allclose(out, ref, atol=1e-4, rtol=1e-4)
    print("KERNEL_OK")
</pallas_src>

<mosaic_0001>
module attributes {stable_mosaic.version = 11 : i64} {
  func.func @decoder_layer_kernel(%arg0: memref<2x8x32xf32, #tpu.memory_space<vmem>>, %arg1: memref<2x16x32xf32, #tpu.memory_space<vmem>>, %arg2: memref<2x8x32xf32, #tpu.memory_space<vmem>>, %arg3: memref<2x16x32xf32, #tpu.memory_space<vmem>>, %arg4: memref<32x64xf32, #tpu.memory_space<vmem>>, %arg5: memref<32x32xf32, #tpu.memory_space<vmem>>, %arg6: memref<32x32xf32, #tpu.memory_space<vmem>>, %arg7: memref<4x32xf32, #tpu.memory_space<vmem>>, %arg8: memref<32x32xf32, #tpu.memory_space<vmem>>, %arg9: memref<32x32xf32, #tpu.memory_space<vmem>>, %arg10: memref<32x32xf32, #tpu.memory_space<vmem>>, %arg11: memref<32x32xf32, #tpu.memory_space<vmem>>, %arg12: memref<4x32xf32, #tpu.memory_space<vmem>>, %arg13: memref<32x64xf32, #tpu.memory_space<vmem>>, %arg14: memref<1x64xf32, #tpu.memory_space<vmem>>, %arg15: memref<64x32xf32, #tpu.memory_space<vmem>>, %arg16: memref<1x32xf32, #tpu.memory_space<vmem>>, %arg17: memref<3x32xf32, #tpu.memory_space<vmem>>, %arg18: memref<3x32xf32, #tpu.memory_space<vmem>>, %arg19: memref<2x8x32xf32, #tpu.memory_space<vmem>>) attributes {dimension_semantics = [], scalar_prefetch = 0 : i64, scratch_operands = 0 : i64, tpu.core_type = #tpu.core_type<tc>} {
    %c0 = arith.constant 0 : index
    %c0_0 = arith.constant 0 : index
    %c0_1 = arith.constant 0 : index
    %0 = vector.load %arg0[%c0, %c0_0, %c0_1] : memref<2x8x32xf32, #tpu.memory_space<vmem>>, vector<2x8x32xf32>
    %1 = vector.shape_cast %0 : vector<2x8x32xf32> to vector<16x32xf32>
    %c0_2 = arith.constant 0 : index
    %c0_3 = arith.constant 0 : index
    %c0_4 = arith.constant 0 : index
    %2 = vector.load %arg2[%c0_2, %c0_3, %c0_4] : memref<2x8x32xf32, #tpu.memory_space<vmem>>, vector<2x8x32xf32>
    %3 = vector.shape_cast %2 : vector<2x8x32xf32> to vector<16x32xf32>
    %c0_5 = arith.constant 0 : index
    %c0_6 = arith.constant 0 : index
    %c0_7 = arith.constant 0 : index
    %4 = vector.load %arg1[%c0_5, %c0_6, %c0_7] : memref<2x16x32xf32, #tpu.memory_space<vmem>>, vector<2x16x32xf32>
    %5 = vector.shape_cast %4 : vector<2x16x32xf32> to vector<32x32xf32>
    %c0_8 = arith.constant 0 : index
    %c0_9 = arith.constant 0 : index
    %c0_10 = arith.constant 0 : index
    %6 = vector.load %arg3[%c0_8, %c0_9, %c0_10] : memref<2x16x32xf32, #tpu.memory_space<vmem>>, vector<2x16x32xf32>
    %7 = vector.shape_cast %6 : vector<2x16x32xf32> to vector<32x32xf32>
    %c0_11 = arith.constant 0 : index
    %c0_12 = arith.constant 0 : index
    %8 = vector.load %arg17[%c0_11, %c0_12] : memref<3x32xf32, #tpu.memory_space<vmem>>, vector<3x32xf32>
    %c0_13 = arith.constant 0 : index
    %c0_14 = arith.constant 0 : index
    %9 = vector.load %arg18[%c0_13, %c0_14] : memref<3x32xf32, #tpu.memory_space<vmem>>, vector<3x32xf32>
    %c0_15 = arith.constant 0 : index
    %c0_16 = arith.constant 0 : index
    %10 = vector.load %arg7[%c0_15, %c0_16] : memref<4x32xf32, #tpu.memory_space<vmem>>, vector<4x32xf32>
    %c0_17 = arith.constant 0 : index
    %c0_18 = arith.constant 0 : index
    %11 = vector.load %arg12[%c0_17, %c0_18] : memref<4x32xf32, #tpu.memory_space<vmem>>, vector<4x32xf32>
    %12 = tpu.iota {dimensions = array<i32: 1>} : vector<1x32xi32>
    %c0_i32 = arith.constant 0 : i32
    %13 = vector.broadcast %c0_i32 : i32 to vector<1x32xi32>
    %14 = arith.cmpi sge, %12, %13 : vector<1x32xi32>
    %c8_i32 = arith.constant 8 : i32
    %15 = vector.broadcast %c8_i32 : i32 to vector<1x32xi32>
    %16 = arith.cmpi slt, %12, %15 : vector<1x32xi32>
    %17 = arith.andi %14, %16 : vector<1x32xi1>
    %18 = arith.extui %17 : vector<1x32xi1> to vector<1x32xi32>
    %19 = arith.sitofp %18 : vector<1x32xi32> to vector<1x32xf32>
    %c8_i32_19 = arith.constant 8 : i32
    %20 = vector.broadcast %c8_i32_19 : i32 to vector<1x32xi32>
    %21 = arith.cmpi sge, %12, %20 : vector<1x32xi32>
    %c16_i32 = arith.constant 16 : i32
    %22 = vector.broadcast %c16_i32 : i32 to vector<1x32xi32>
    %23 = arith.cmpi slt, %12, %22 : vector<1x32xi32>
    %24 = arith.andi %21, %23 : vector<1x32xi1>
    %25 = arith.extui %24 : vector<1x32xi1> to vector<1x32xi32>
    %26 = arith.sitofp %25 : vector<1x32xi32> to vector<1x32xf32>
    %c16_i32_20 = arith.constant 16 : i32
    %27 = vector.broadcast %c16_i32_20 : i32 to vector<1x32xi32>
    %28 = arith.cmpi sge, %12, %27 : vector<1x32xi32>
    %c24_i32 = arith.constant 24 : i32
    %29 = vector.broadcast %c24_i32 : i32 to vector<1x32xi32>
    %30 = arith.cmpi slt, %12, %29 : vector<1x32xi32>
    %31 = arith.andi %28, %30 : vector<1x32xi1>
    %32 = arith.extui %31 : vector<1x32xi1> to vector<1x32xi32>
    %33 = arith.sitofp %32 : vector<1x32xi32> to vector<1x32xf32>
    %c24_i32_21 = arith.constant 24 : i32
    %34 = vector.broadcast %c24_i32_21 : i32 to vector<1x32xi32>
    %35 = arith.cmpi sge, %12, %34 : vector<1x32xi32>
    %c32_i32 = arith.constant 32 : i32
    %36 = vector.broadcast %c32_i32 : i32 to vector<1x32xi32>
    %37 = arith.cmpi slt, %12, %36 : vector<1x32xi32>
    %38 = arith.andi %35, %37 : vector<1x32xi1>
    %39 = arith.extui %38 : vector<1x32xi1> to vector<1x32xi32>
    %40 = arith.sitofp %39 : vector<1x32xi32> to vector<1x32xf32>
    %41 = arith.addf %1, %3 : vector<16x32xf32>
    %c0_22 = arith.constant 0 : index
    %c0_23 = arith.constant 0 : index
    %42 = vector.load %arg4[%c0_22, %c0_23] : memref<32x64xf32, #tpu.memory_space<vmem>>, vector<32x64xf32>
    %cst = arith.constant dense<0.000000e+00> : vector<16x64xf32>
    %43 = tpu.matmul %41, %42, %cst {dimension_numbers = #tpu.dot_dimension_numbers<[1], [0], [0], [1], [0, 0, 1, 1], [], []>} : vector<16x32xf32>, vector<32x64xf32>, vector<16x64xf32> -> vector<16x64xf32>
    %44 = vector.extract_strided_slice %43 {offsets = [0, 0], sizes = [16, 32], strides = [1, 1]} : vector<16x64xf32> to vector<16x32xf32>
    %45 = vector.extract_strided_slice %10 {offsets = [0, 0], sizes = [1, 32], strides = [1, 1]} : vector<4x32xf32> to vector<1x32xf32>
    %46 = vector.broadcast %45 : vector<1x32xf32> to vector<16x32xf32>
    %47 = arith.addf %44, %46 : vector<16x32xf32>
    %48 = vector.extract_strided_slice %43 {offsets = [0, 32], sizes = [16, 32], strides = [1, 1]} : vector<16x64xf32> to vector<16x32xf32>
    %49 = vector.extract_strided_slice %10 {offsets = [1, 0], sizes = [1, 32], strides = [1, 1]} : vector<4x32xf32> to vector<1x32xf32>
    %50 = vector.broadcast %49 : vector<1x32xf32> to vector<16x32xf32>
    %51 = arith.addf %48, %50 : vector<16x32xf32>
    %c0_24 = arith.constant 0 : index
    %c0_25 = arith.constant 0 : index
    %52 = vector.load %arg5[%c0_24, %c0_25] : memref<32x32xf32, #tpu.memory_space<vmem>>, vector<32x32xf32>
    %cst_26 = arith.constant dense<0.000000e+00> : vector<16x32xf32>
    %53 = tpu.matmul %1, %52, %cst_26 {dimension_numbers = #tpu.dot_dimension_numbers<[1], [0], [0], [1], [0, 0, 1, 1], [], []>} : vector<16x32xf32>, vector<32x32xf32>, vector<16x32xf32> -> vector<16x32xf32>
    %54 = vector.extract_strided_slice %10 {offsets = [2, 0], sizes = [1, 32], strides = [1, 1]} : vector<4x32xf32> to vector<1x32xf32>
    %55 = vector.broadcast %54 : vector<1x32xf32> to vector<16x32xf32>
    %56 = arith.addf %53, %55 : vector<16x32xf32>
    %c0_27 = arith.constant 0 : index
    %c0_28 = arith.constant 0 : index
    %57 = vector.load %arg6[%c0_27, %c0_28] : memref<32x32xf32, #tpu.memory_space<vmem>>, vector<32x32xf32>
    %58 = vector.extract_strided_slice %10 {offsets = [3, 0], sizes = [1, 32], strides = [1, 1]} : vector<4x32xf32> to vector<1x32xf32>
    %59 = vector.shape_cast %47 : vector<16x32xf32> to vector<2x8x32xf32>
    %60 = vector.shape_cast %51 : vector<16x32xf32> to vector<2x8x32xf32>
    %61 = vector.shape_cast %56 : vector<16x32xf32> to vector<2x8x32xf32>
    %cst_29 = arith.constant 0.000000e+00 : f32
    %62 = vector.broadcast %cst_29 : f32 to vector<2x8x32xf32>
    %63 = vector.shape_cast %19 : vector<1x32xf32> to vector<1x1x32xf32>
    %64 = vector.broadcast %63 : vector<1x1x32xf32> to vector<2x8x32xf32>
    %65 = arith.mulf %59, %64 : vector<2x8x32xf32>
    "tpu.trace_start"() <{level = 10 : i32, message = "bld,bsd->bls"}> : () -> ()
    %cst_30 = arith.constant dense<0.000000e+00> : vector<2x8x8xf32>
    %66 = tpu.matmul %65, %60, %cst_30 {dimension_numbers = #tpu.dot_dimension_numbers<[2], [2], [1], [1], [0, 0, 0, 1, 1, 1], [0], [0]>} : vector<2x8x32xf32>, vector<2x8x32xf32>, vector<2x8x8xf32> -> vector<2x8x8xf32>
    "tpu.trace_stop"() : () -> ()
    %cst_31 = arith.constant 0.353553385 : f32
    %67 = vector.broadcast %cst_31 : f32 to vector<2x8x8xf32>
    %68 = arith.mulf %66, %67 : vector<2x8x8xf32>
    %cst_32 = arith.constant dense<0xFF800000> : vector<2x8xf32>
    %69 = vector.multi_reduction <maximumf>, %68, %cst_32 [2] : vector<2x8x8xf32> to vector<2x8xf32>
    %70 = vector.shape_cast %69 : vector<2x8xf32> to vector<2x8x1xf32>
    %71 = vector.broadcast %70 : vector<2x8x1xf32> to vector<2x8x8xf32>
    %72 = arith.subf %68, %71 : vector<2x8x8xf32>
    %73 = math.exp %72 : vector<2x8x8xf32>
    %cst_33 = arith.constant dense<0.000000e+00> : vector<2x8xf32>
    %74 = vector.multi_reduction <add>, %73, %cst_33 [2] : vector<2x8x8xf32> to vector<2x8xf32>
    %75 = vector.shape_cast %74 : vector<2x8xf32> to vector<2x8x1xf32>
    %76 = vector.broadcast %75 : vector<2x8x1xf32> to vector<2x8x8xf32>
    %77 = arith.divf %73, %76 : vector<2x8x8xf32>
    %78 = vector.shape_cast %19 : vector<1x32xf32> to vector<1x1x32xf32>
    %79 = vector.broadcast %78 : vector<1x1x32xf32> to vector<2x8x32xf32>
    %80 = arith.mulf %61, %79 : vector<2x8x32xf32>
    "tpu.trace_start"() <{level = 10 : i32, message = "bls,bsd->bld"}> : () -> ()
    %cst_34 = arith.constant dense<0.000000e+00> : vector<2x8x32xf32>
    %81 = tpu.matmul %77, %80, %cst_34 {dimension_numbers = #tpu.dot_dimension_numbers<[2], [1], [1], [2], [0, 0, 0, 1, 1, 2], [0], [0]>} : vector<2x8x8xf32>, vector<2x8x32xf32>, vector<2x8x32xf32> -> vector<2x8x32xf32>
    "tpu.trace_stop"() : () -> ()
    %82 = arith.addf %62, %81 : vector<2x8x32xf32>
    %83 = vector.shape_cast %26 : vector<1x32xf32> to vector<1x1x32xf32>
    %84 = vector.broadcast %83 : vector<1x1x32xf32> to vector<2x8x32xf32>
    %85 = arith.mulf %59, %84 : vector<2x8x32xf32>
    "tpu.trace_start"() <{level = 10 : i32, message = "bld,bsd->bls"}> : () -> ()
    %cst_35 = arith.constant dense<0.000000e+00> : vector<2x8x8xf32>
    %86 = tpu.matmul %85, %60, %cst_35 {dimension_numbers = #tpu.dot_dimension_numbers<[2], [2], [1], [1], [0, 0, 0, 1, 1, 1], [0], [0]>} : vector<2x8x32xf32>, vector<2x8x32xf32>, vector<2x8x8xf32> -> vector<2x8x8xf32>
    "tpu.trace_stop"() : () -> ()
    %cst_36 = arith.constant 0.353553385 : f32
    %87 = vector.broadcast %cst_36 : f32 to vector<2x8x8xf32>
    %88 = arith.mulf %86, %87 : vector<2x8x8xf32>
    %cst_37 = arith.constant dense<0xFF800000> : vector<2x8xf32>
    %89 = vector.multi_reduction <maximumf>, %88, %cst_37 [2] : vector<2x8x8xf32> to vector<2x8xf32>
    %90 = vector.shape_cast %89 : vector<2x8xf32> to vector<2x8x1xf32>
    %91 = vector.broadcast %90 : vector<2x8x1xf32> to vector<2x8x8xf32>
    %92 = arith.subf %88, %91 : vector<2x8x8xf32>
    %93 = math.exp %92 : vector<2x8x8xf32>
    %cst_38 = arith.constant dense<0.000000e+00> : vector<2x8xf32>
    %94 = vector.multi_reduction <add>, %93, %cst_38 [2] : vector<2x8x8xf32> to vector<2x8xf32>
    %95 = vector.shape_cast %94 : vector<2x8xf32> to vector<2x8x1xf32>
    %96 = vector.broadcast %95 : vector<2x8x1xf32> to vector<2x8x8xf32>
    %97 = arith.divf %93, %96 : vector<2x8x8xf32>
    %98 = vector.shape_cast %26 : vector<1x32xf32> to vector<1x1x32xf32>
    %99 = vector.broadcast %98 : vector<1x1x32xf32> to vector<2x8x32xf32>
    %100 = arith.mulf %61, %99 : vector<2x8x32xf32>
    "tpu.trace_start"() <{level = 10 : i32, message = "bls,bsd->bld"}> : () -> ()
    %cst_39 = arith.constant dense<0.000000e+00> : vector<2x8x32xf32>
    %101 = tpu.matmul %97, %100, %cst_39 {dimension_numbers = #tpu.dot_dimension_numbers<[2], [1], [1], [2], [0, 0, 0, 1, 1, 2], [0], [0]>} : vector<2x8x8xf32>, vector<2x8x32xf32>, vector<2x8x32xf32> -> vector<2x8x32xf32>
    "tpu.trace_stop"() : () -> ()
    %102 = arith.addf %82, %101 : vector<2x8x32xf32>
    %103 = vector.shape_cast %33 : vector<1x32xf32> to vector<1x1x32xf32>
    %104 = vector.broadcast %103 : vector<1x1x32xf32> to vector<2x8x32xf32>
    %105 = arith.mulf %59, %104 : vector<2x8x32xf32>
    "tpu.trace_start"() <{level = 10 : i32, message = "bld,bsd->bls"}> : () -> ()
    %cst_40 = arith.constant dense<0.000000e+00> : vector<2x8x8xf32>
    %106 = tpu.matmul %105, %60, %cst_40 {dimension_numbers = #tpu.dot_dimension_numbers<[2], [2], [1], [1], [0, 0, 0, 1, 1, 1], [0], [0]>} : vector<2x8x32xf32>, vector<2x8x32xf32>, vector<2x8x8xf32> -> vector<2x8x8xf32>
    "tpu.trace_stop"() : () -> ()
    %cst_41 = arith.constant 0.353553385 : f32
    %107 = vector.broadcast %cst_41 : f32 to vector<2x8x8xf32>
    %108 = arith.mulf %106, %107 : vector<2x8x8xf32>
    %cst_42 = arith.constant dense<0xFF800000> : vector<2x8xf32>
    %109 = vector.multi_reduction <maximumf>, %108, %cst_42 [2] : vector<2x8x8xf32> to vector<2x8xf32>
    %110 = vector.shape_cast %109 : vector<2x8xf32> to vector<2x8x1xf32>
    %111 = vector.broadcast %110 : vector<2x8x1xf32> to vector<2x8x8xf32>
    %112 = arith.subf %108, %111 : vector<2x8x8xf32>
    %113 = math.exp %112 : vector<2x8x8xf32>
    %cst_43 = arith.constant dense<0.000000e+00> : vector<2x8xf32>
    %114 = vector.multi_reduction <add>, %113, %cst_43 [2] : vector<2x8x8xf32> to vector<2x8xf32>
    %115 = vector.shape_cast %114 : vector<2x8xf32> to vector<2x8x1xf32>
    %116 = vector.broadcast %115 : vector<2x8x1xf32> to vector<2x8x8xf32>
    %117 = arith.divf %113, %116 : vector<2x8x8xf32>
    %118 = vector.shape_cast %33 : vector<1x32xf32> to vector<1x1x32xf32>
    %119 = vector.broadcast %118 : vector<1x1x32xf32> to vector<2x8x32xf32>
    %120 = arith.mulf %61, %119 : vector<2x8x32xf32>
    "tpu.trace_start"() <{level = 10 : i32, message = "bls,bsd->bld"}> : () -> ()
    %cst_44 = arith.constant dense<0.000000e+00> : vector<2x8x32xf32>
    %121 = tpu.matmul %117, %120, %cst_44 {dimension_numbers = #tpu.dot_dimension_numbers<[2], [1], [1], [2], [0, 0, 0, 1, 1, 2], [0], [0]>} : vector<2x8x8xf32>, vector<2x8x32xf32>, vector<2x8x32xf32> -> vector<2x8x32xf32>
    "tpu.trace_stop"() : () -> ()
    %122 = arith.addf %102, %121 : vector<2x8x32xf32>
    %123 = vector.shape_cast %40 : vector<1x32xf32> to vector<1x1x32xf32>
    %124 = vector.broadcast %123 : vector<1x1x32xf32> to vector<2x8x32xf32>
    %125 = arith.mulf %59, %124 : vector<2x8x32xf32>
    "tpu.trace_start"() <{level = 10 : i32, message = "bld,bsd->bls"}> : () -> ()
    %cst_45 = arith.constant dense<0.000000e+00> : vector<2x8x8xf32>
    %126 = tpu.matmul %125, %60, %cst_45 {dimension_numbers = #tpu.dot_dimension_numbers<[2], [2], [1], [1], [0, 0, 0, 1, 1, 1], [0], [0]>} : vector<2x8x32xf32>, vector<2x8x32xf32>, vector<2x8x8xf32> -> vector<2x8x8xf32>
    "tpu.trace_stop"() : () -> ()
    %cst_46 = arith.constant 0.353553385 : f32
    %127 = vector.broadcast %cst_46 : f32 to vector<2x8x8xf32>
    %128 = arith.mulf %126, %127 : vector<2x8x8xf32>
    %cst_47 = arith.constant dense<0xFF800000> : vector<2x8xf32>
    %129 = vector.multi_reduction <maximumf>, %128, %cst_47 [2] : vector<2x8x8xf32> to vector<2x8xf32>
    %130 = vector.shape_cast %129 : vector<2x8xf32> to vector<2x8x1xf32>
    %131 = vector.broadcast %130 : vector<2x8x1xf32> to vector<2x8x8xf32>
    %132 = arith.subf %128, %131 : vector<2x8x8xf32>
    %133 = math.exp %132 : vector<2x8x8xf32>
    %cst_48 = arith.constant dense<0.000000e+00> : vector<2x8xf32>
    %134 = vector.multi_reduction <add>, %133, %cst_48 [2] : vector<2x8x8xf32> to vector<2x8xf32>
    %135 = vector.shape_cast %134 : vector<2x8xf32> to vector<2x8x1xf32>
    %136 = vector.broadcast %135 : vector<2x8x1xf32> to vector<2x8x8xf32>
    %137 = arith.divf %133, %136 : vector<2x8x8xf32>
    %138 = vector.shape_cast %40 : vector<1x32xf32> to vector<1x1x32xf32>
    %139 = vector.broadcast %138 : vector<1x1x32xf32> to vector<2x8x32xf32>
    %140 = arith.mulf %61, %139 : vector<2x8x32xf32>
    "tpu.trace_start"() <{level = 10 : i32, message = "bls,bsd->bld"}> : () -> ()
    %cst_49 = arith.constant dense<0.000000e+00> : vector<2x8x32xf32>
    %141 = tpu.matmul %137, %140, %cst_49 {dimension_numbers = #tpu.dot_dimension_numbers<[2], [1], [1], [2], [0, 0, 0, 1, 1, 2], [0], [0]>} : vector<2x8x8xf32>, vector<2x8x32xf32>, vector<2x8x32xf32> -> vector<2x8x32xf32>
    "tpu.trace_stop"() : () -> ()
    %142 = arith.addf %122, %141 : vector<2x8x32xf32>
    %143 = vector.shape_cast %142 : vector<2x8x32xf32> to vector<16x32xf32>
    %cst_50 = arith.constant dense<0.000000e+00> : vector<16x32xf32>
    %144 = tpu.matmul %143, %57, %cst_50 {dimension_numbers = #tpu.dot_dimension_numbers<[1], [0], [0], [1], [0, 0, 1, 1], [], []>} : vector<16x32xf32>, vector<32x32xf32>, vector<16x32xf32> -> vector<16x32xf32>
    %145 = vector.broadcast %58 : vector<1x32xf32> to vector<16x32xf32>
    %146 = arith.addf %144, %145 : vector<16x32xf32>
    %147 = arith.addf %1, %146 : vector<16x32xf32>
    %148 = vector.extract_strided_slice %8 {offsets = [0, 0], sizes = [1, 32], strides = [1, 1]} : vector<3x32xf32> to vector<1x32xf32>
    %149 = vector.extract_strided_slice %9 {offsets = [0, 0], sizes = [1, 32], strides = [1, 1]} : vector<3x32xf32> to vector<1x32xf32>
    %cst_51 = arith.constant dense<0.000000e+00> : vector<16xf32>
    %150 = vector.multi_reduction <add>, %147, %cst_51 [1] : vector<16x32xf32> to vector<16xf32>
    %151 = vector.shape_cast %150 : vector<16xf32> to vector<16x1xf32>
    %cst_52 = arith.constant 3.200000e+01 : f32
    %152 = vector.broadcast %cst_52 : f32 to vector<16x1xf32>
    %153 = arith.divf %151, %152 : vector<16x1xf32>
    %154 = arith.mulf %147, %147 : vector<16x32xf32>
    %cst_53 = arith.constant dense<0.000000e+00> : vector<16xf32>
    %155 = vector.multi_reduction <add>, %154, %cst_53 [1] : vector<16x32xf32> to vector<16xf32>
    %156 = vector.shape_cast %155 : vector<16xf32> to vector<16x1xf32>
    %cst_54 = arith.constant 3.200000e+01 : f32
    %157 = vector.broadcast %cst_54 : f32 to vector<16x1xf32>
    %158 = arith.divf %156, %157 : vector<16x1xf32>
    %159 = arith.mulf %153, %153 : vector<16x1xf32>
    %160 = arith.subf %158, %159 : vector<16x1xf32>
    %161 = vector.broadcast %153 : vector<16x1xf32> to vector<16x32xf32>
    %162 = arith.subf %147, %161 : vector<16x32xf32>
    %cst_55 = arith.constant 9.99999974E-6 : f32
    %163 = vector.broadcast %cst_55 : f32 to vector<16x1xf32>
    %164 = arith.addf %160, %163 : vector<16x1xf32>
    %165 = math.rsqrt %164 : vector<16x1xf32>
    %166 = vector.broadcast %165 : vector<16x1xf32> to vector<16x32xf32>
    %167 = arith.mulf %162, %166 : vector<16x32xf32>
    %168 = vector.broadcast %148 : vector<1x32xf32> to vector<16x32xf32>
    %169 = arith.mulf %167, %168 : vector<16x32xf32>
    %170 = vector.broadcast %149 : vector<1x32xf32> to vector<16x32xf32>
    %171 = arith.addf %169, %170 : vector<16x32xf32>
    %172 = arith.addf %171, %3 : vector<16x32xf32>
    %c0_56 = arith.constant 0 : index
    %c0_57 = arith.constant 0 : index
    %173 = vector.load %arg8[%c0_56, %c0_57] : memref<32x32xf32, #tpu.memory_space<vmem>>, vector<32x32xf32>
    %cst_58 = arith.constant dense<0.000000e+00> : vector<16x32xf32>
    %174 = tpu.matmul %172, %173, %cst_58 {dimension_numbers = #tpu.dot_dimension_numbers<[1], [0], [0], [1], [0, 0, 1, 1], [], []>} : vector<16x32xf32>, vector<32x32xf32>, vector<16x32xf32> -> vector<16x32xf32>
    %175 = vector.extract_strided_slice %11 {offsets = [0, 0], sizes = [1, 32], strides = [1, 1]} : vector<4x32xf32> to vector<1x32xf32>
    %176 = vector.broadcast %175 : vector<1x32xf32> to vector<16x32xf32>
    %177 = arith.addf %174, %176 : vector<16x32xf32>
    %178 = arith.addf %5, %7 : vector<32x32xf32>
    %c0_59 = arith.constant 0 : index
    %c0_60 = arith.constant 0 : index
    %179 = vector.load %arg9[%c0_59, %c0_60] : memref<32x32xf32, #tpu.memory_space<vmem>>, vector<32x32xf32>
    %cst_61 = arith.constant dense<0.000000e+00> : vector<32x32xf32>
    %180 = tpu.matmul %178, %179, %cst_61 {dimension_numbers = #tpu.dot_dimension_numbers<[1], [0], [0], [1], [0, 0, 1, 1], [], []>} : vector<32x32xf32>, vector<32x32xf32>, vector<32x32xf32> -> vector<32x32xf32>
    %181 = vector.extract_strided_slice %11 {offsets = [1, 0], sizes = [1, 32], strides = [1, 1]} : vector<4x32xf32> to vector<1x32xf32>
    %182 = vector.broadcast %181 : vector<1x32xf32> to vector<32x32xf32>
    %183 = arith.addf %180, %182 : vector<32x32xf32>
    %c0_62 = arith.constant 0 : index
    %c0_63 = arith.constant 0 : index
    %184 = vector.load %arg10[%c0_62, %c0_63] : memref<32x32xf32, #tpu.memory_space<vmem>>, vector<32x32xf32>
    %cst_64 = arith.constant dense<0.000000e+00> : vector<32x32xf32>
    %185 = tpu.matmul %5, %184, %cst_64 {dimension_numbers = #tpu.dot_dimension_numbers<[1], [0], [0], [1], [0, 0, 1, 1], [], []>} : vector<32x32xf32>, vector<32x32xf32>, vector<32x32xf32> -> vector<32x32xf32>
    %186 = vector.extract_strided_slice %11 {offsets = [2, 0], sizes = [1, 32], strides = [1, 1]} : vector<4x32xf32> to vector<1x32xf32>
    %187 = vector.broadcast %186 : vector<1x32xf32> to vector<32x32xf32>
    %188 = arith.addf %185, %187 : vector<32x32xf32>
    %c0_65 = arith.constant 0 : index
    %c0_66 = arith.constant 0 : index
    %189 = vector.load %arg11[%c0_65, %c0_66] : memref<32x32xf32, #tpu.memory_space<vmem>>, vector<32x32xf32>
    %190 = vector.extract_strided_slice %11 {offsets = [3, 0], sizes = [1, 32], strides = [1, 1]} : vector<4x32xf32> to vector<1x32xf32>
    %191 = vector.shape_cast %177 : vector<16x32xf32> to vector<2x8x32xf32>
    %192 = vector.shape_cast %183 : vector<32x32xf32> to vector<2x16x32xf32>
    %193 = vector.shape_cast %188 : vector<32x32xf32> to vector<2x16x32xf32>
    %cst_67 = arith.constant 0.000000e+00 : f32
    %194 = vector.broadcast %cst_67 : f32 to vector<2x8x32xf32>
    %195 = vector.shape_cast %19 : vector<1x32xf32> to vector<1x1x32xf32>
    %196 = vector.broadcast %195 : vector<1x1x32xf32> to vector<2x8x32xf32>
    %197 = arith.mulf %191, %196 : vector<2x8x32xf32>
    "tpu.trace_start"() <{level = 10 : i32, message = "bld,bsd->bls"}> : () -> ()
    %cst_68 = arith.constant dense<0.000000e+00> : vector<2x8x16xf32>
    %198 = tpu.matmul %197, %192, %cst_68 {dimension_numbers = #tpu.dot_dimension_numbers<[2], [2], [1], [1], [0, 0, 0, 1, 1, 1], [0], [0]>} : vector<2x8x32xf32>, vector<2x16x32xf32>, vector<2x8x16xf32> -> vector<2x8x16xf32>
    "tpu.trace_stop"() : () -> ()
    %cst_69 = arith.constant 0.353553385 : f32
    %199 = vector.broadcast %cst_69 : f32 to vector<2x8x16xf32>
    %200 = arith.mulf %198, %199 : vector<2x8x16xf32>
    %cst_70 = arith.constant dense<0xFF800000> : vector<2x8xf32>
    %201 = vector.multi_reduction <maximumf>, %200, %cst_70 [2] : vector<2x8x16xf32> to vector<2x8xf32>
    %202 = vector.shape_cast %201 : vector<2x8xf32> to vector<2x8x1xf32>
    %203 = vector.broadcast %202 : vector<2x8x1xf32> to vector<2x8x16xf32>
    %204 = arith.subf %200, %203 : vector<2x8x16xf32>
    %205 = math.exp %204 : vector<2x8x16xf32>
    %cst_71 = arith.constant dense<0.000000e+00> : vector<2x8xf32>
    %206 = vector.multi_reduction <add>, %205, %cst_71 [2] : vector<2x8x16xf32> to vector<2x8xf32>
    %207 = vector.shape_cast %206 : vector<2x8xf32> to vector<2x8x1xf32>
    %208 = vector.broadcast %207 : vector<2x8x1xf32> to vector<2x8x16xf32>
    %209 = arith.divf %205, %208 : vector<2x8x16xf32>
    %210 = vector.shape_cast %19 : vector<1x32xf32> to vector<1x1x32xf32>
    %211 = vector.broadcast %210 : vector<1x1x32xf32> to vector<2x16x32xf32>
    %212 = arith.mulf %193, %211 : vector<2x16x32xf32>
    "tpu.trace_start"() <{level = 10 : i32, message = "bls,bsd->bld"}> : () -> ()
    %cst_72 = arith.constant dense<0.000000e+00> : vector<2x8x32xf32>
    %213 = tpu.matmul %209, %212, %cst_72 {dimension_numbers = #tpu.dot_dimension_numbers<[2], [1], [1], [2], [0, 0, 0, 1, 1, 2], [0], [0]>} : vector<2x8x16xf32>, vector<2x16x32xf32>, vector<2x8x32xf32> -> vector<2x8x32xf32>
    "tpu.trace_stop"() : () -> ()
    %214 = arith.addf %194, %213 : vector<2x8x32xf32>
    %215 = vector.shape_cast %26 : vector<1x32xf32> to vector<1x1x32xf32>
    %216 = vector.broadcast %215 : vector<1x1x32xf32> to vector<2x8x32xf32>
    %217 = arith.mulf %191, %216 : vector<2x8x32xf32>
    "tpu.trace_start"() <{level = 10 : i32, message = "bld,bsd->bls"}> : () -> ()
    %cst_73 = arith.constant dense<0.000000e+00> : vector<2x8x16xf32>
    %218 = tpu.matmul %217, %192, %cst_73 {dimension_numbers = #tpu.dot_dimension_numbers<[2], [2], [1], [1], [0, 0, 0, 1, 1, 1], [0], [0]>} : vector<2x8x32xf32>, vector<2x16x32xf32>, vector<2x8x16xf32> -> vector<2x8x16xf32>
    "tpu.trace_stop"() : () -> ()
    %cst_74 = arith.constant 0.353553385 : f32
    %219 = vector.broadcast %cst_74 : f32 to vector<2x8x16xf32>
    %220 = arith.mulf %218, %219 : vector<2x8x16xf32>
    %cst_75 = arith.constant dense<0xFF800000> : vector<2x8xf32>
    %221 = vector.multi_reduction <maximumf>, %220, %cst_75 [2] : vector<2x8x16xf32> to vector<2x8xf32>
    %222 = vector.shape_cast %221 : vector<2x8xf32> to vector<2x8x1xf32>
    %223 = vector.broadcast %222 : vector<2x8x1xf32> to vector<2x8x16xf32>
    %224 = arith.subf %220, %223 : vector<2x8x16xf32>
    %225 = math.exp %224 : vector<2x8x16xf32>
    %cst_76 = arith.constant dense<0.000000e+00> : vector<2x8xf32>
    %226 = vector.multi_reduction <add>, %225, %cst_76 [2] : vector<2x8x16xf32> to vector<2x8xf32>
    %227 = vector.shape_cast %226 : vector<2x8xf32> to vector<2x8x1xf32>
    %228 = vector.broadcast %227 : vector<2x8x1xf32> to vector<2x8x16xf32>
    %229 = arith.divf %225, %228 : vector<2x8x16xf32>
    %230 = vector.shape_cast %26 : vector<1x32xf32> to vector<1x1x32xf32>
    %231 = vector.broadcast %230 : vector<1x1x32xf32> to vector<2x16x32xf32>
    %232 = arith.mulf %193, %231 : vector<2x16x32xf32>
    "tpu.trace_start"() <{level = 10 : i32, message = "bls,bsd->bld"}> : () -> ()
    %cst_77 = arith.constant dense<0.000000e+00> : vector<2x8x32xf32>
    %233 = tpu.matmul %229, %232, %cst_77 {dimension_numbers = #tpu.dot_dimension_numbers<[2], [1], [1], [2], [0, 0, 0, 1, 1, 2], [0], [0]>} : vector<2x8x16xf32>, vector<2x16x32xf32>, vector<2x8x32xf32> -> vector<2x8x32xf32>
    "tpu.trace_stop"() : () -> ()
    %234 = arith.addf %214, %233 : vector<2x8x32xf32>
    %235 = vector.shape_cast %33 : vector<1x32xf32> to vector<1x1x32xf32>
    %236 = vector.broadcast %235 : vector<1x1x32xf32> to vector<2x8x32xf32>
    %237 = arith.mulf %191, %236 : vector<2x8x32xf32>
    "tpu.trace_start"() <{level = 10 : i32, message = "bld,bsd->bls"}> : () -> ()
    %cst_78 = arith.constant dense<0.000000e+00> : vector<2x8x16xf32>
    %238 = tpu.matmul %237, %192, %cst_78 {dimension_numbers = #tpu.dot_dimension_numbers<[2], [2], [1], [1], [0, 0, 0, 1, 1, 1], [0], [0]>} : vector<2x8x32xf32>, vector<2x16x32xf32>, vector<2x8x16xf32> -> vector<2x8x16xf32>
    "tpu.trace_stop"() : () -> ()
    %cst_79 = arith.constant 0.353553385 : f32
    %239 = vector.broadcast %cst_79 : f32 to vector<2x8x16xf32>
    %240 = arith.mulf %238, %239 : vector<2x8x16xf32>
    %cst_80 = arith.constant dense<0xFF800000> : vector<2x8xf32>
    %241 = vector.multi_reduction <maximumf>, %240, %cst_80 [2] : vector<2x8x16xf32> to vector<2x8xf32>
    %242 = vector.shape_cast %241 : vector<2x8xf32> to vector<2x8x1xf32>
    %243 = vector.broadcast %242 : vector<2x8x1xf32> to vector<2x8x16xf32>
    %244 = arith.subf %240, %243 : vector<2x8x16xf32>
    %245 = math.exp %244 : vector<2x8x16xf32>
    %cst_81 = arith.constant dense<0.000000e+00> : vector<2x8xf32>
    %246 = vector.multi_reduction <add>, %245, %cst_81 [2] : vector<2x8x16xf32> to vector<2x8xf32>
    %247 = vector.shape_cast %246 : vector<2x8xf32> to vector<2x8x1xf32>
    %248 = vector.broadcast %247 : vector<2x8x1xf32> to vector<2x8x16xf32>
    %249 = arith.divf %245, %248 : vector<2x8x16xf32>
    %250 = vector.shape_cast %33 : vector<1x32xf32> to vector<1x1x32xf32>
    %251 = vector.broadcast %250 : vector<1x1x32xf32> to vector<2x16x32xf32>
    %252 = arith.mulf %193, %251 : vector<2x16x32xf32>
    "tpu.trace_start"() <{level = 10 : i32, message = "bls,bsd->bld"}> : () -> ()
    %cst_82 = arith.constant dense<0.000000e+00> : vector<2x8x32xf32>
    %253 = tpu.matmul %249, %252, %cst_82 {dimension_numbers = #tpu.dot_dimension_numbers<[2], [1], [1], [2], [0, 0, 0, 1, 1, 2], [0], [0]>} : vector<2x8x16xf32>, vector<2x16x32xf32>, vector<2x8x32xf32> -> vector<2x8x32xf32>
    "tpu.trace_stop"() : () -> ()
    %254 = arith.addf %234, %253 : vector<2x8x32xf32>
    %255 = vector.shape_cast %40 : vector<1x32xf32> to vector<1x1x32xf32>
    %256 = vector.broadcast %255 : vector<1x1x32xf32> to vector<2x8x32xf32>
    %257 = arith.mulf %191, %256 : vector<2x8x32xf32>
    "tpu.trace_start"() <{level = 10 : i32, message = "bld,bsd->bls"}> : () -> ()
    %cst_83 = arith.constant dense<0.000000e+00> : vector<2x8x16xf32>
    %258 = tpu.matmul %257, %192, %cst_83 {dimension_numbers = #tpu.dot_dimension_numbers<[2], [2], [1], [1], [0, 0, 0, 1, 1, 1], [0], [0]>} : vector<2x8x32xf32>, vector<2x16x32xf32>, vector<2x8x16xf32> -> vector<2x8x16xf32>
    "tpu.trace_stop"() : () -> ()
    %cst_84 = arith.constant 0.353553385 : f32
    %259 = vector.broadcast %cst_84 : f32 to vector<2x8x16xf32>
    %260 = arith.mulf %258, %259 : vector<2x8x16xf32>
    %cst_85 = arith.constant dense<0xFF800000> : vector<2x8xf32>
    %261 = vector.multi_reduction <maximumf>, %260, %cst_85 [2] : vector<2x8x16xf32> to vector<2x8xf32>
    %262 = vector.shape_cast %261 : vector<2x8xf32> to vector<2x8x1xf32>
    %263 = vector.broadcast %262 : vector<2x8x1xf32> to vector<2x8x16xf32>
    %264 = arith.subf %260, %263 : vector<2x8x16xf32>
    %265 = math.exp %264 : vector<2x8x16xf32>
    %cst_86 = arith.constant dense<0.000000e+00> : vector<2x8xf32>
    %266 = vector.multi_reduction <add>, %265, %cst_86 [2] : vector<2x8x16xf32> to vector<2x8xf32>
    %267 = vector.shape_cast %266 : vector<2x8xf32> to vector<2x8x1xf32>
    %268 = vector.broadcast %267 : vector<2x8x1xf32> to vector<2x8x16xf32>
    %269 = arith.divf %265, %268 : vector<2x8x16xf32>
    %270 = vector.shape_cast %40 : vector<1x32xf32> to vector<1x1x32xf32>
    %271 = vector.broadcast %270 : vector<1x1x32xf32> to vector<2x16x32xf32>
    %272 = arith.mulf %193, %271 : vector<2x16x32xf32>
    "tpu.trace_start"() <{level = 10 : i32, message = "bls,bsd->bld"}> : () -> ()
    %cst_87 = arith.constant dense<0.000000e+00> : vector<2x8x32xf32>
    %273 = tpu.matmul %269, %272, %cst_87 {dimension_numbers = #tpu.dot_dimension_numbers<[2], [1], [1], [2], [0, 0, 0, 1, 1, 2], [0], [0]>} : vector<2x8x16xf32>, vector<2x16x32xf32>, vector<2x8x32xf32> -> vector<2x8x32xf32>
    "tpu.trace_stop"() : () -> ()
    %274 = arith.addf %254, %273 : vector<2x8x32xf32>
    %275 = vector.shape_cast %274 : vector<2x8x32xf32> to vector<16x32xf32>
    %cst_88 = arith.constant dense<0.000000e+00> : vector<16x32xf32>
    %276 = tpu.matmul %275, %189, %cst_88 {dimension_numbers = #tpu.dot_dimension_numbers<[1], [0], [0], [1], [0, 0, 1, 1], [], []>} : vector<16x32xf32>, vector<32x32xf32>, vector<16x32xf32> -> vector<16x32xf32>
    %277 = vector.broadcast %190 : vector<1x32xf32> to vector<16x32xf32>
    %278 = arith.addf %276, %277 : vector<16x32xf32>
    %279 = arith.addf %171, %278 : vector<16x32xf32>
    %280 = vector.extract_strided_slice %8 {offsets = [1, 0], sizes = [1, 32], strides = [1, 1]} : vector<3x32xf32> to vector<1x32xf32>
    %281 = vector.extract_strided_slice %9 {offsets = [1, 0], sizes = [1, 32], strides = [1, 1]} : vector<3x32xf32> to vector<1x32xf32>
    %cst_89 = arith.constant dense<0.000000e+00> : vector<16xf32>
    %282 = vector.multi_reduction <add>, %279, %cst_89 [1] : vector<16x32xf32> to vector<16xf32>
    %283 = vector.shape_cast %282 : vector<16xf32> to vector<16x1xf32>
    %cst_90 = arith.constant 3.200000e+01 : f32
    %284 = vector.broadcast %cst_90 : f32 to vector<16x1xf32>
    %285 = arith.divf %283, %284 : vector<16x1xf32>
    %286 = arith.mulf %279, %279 : vector<16x32xf32>
    %cst_91 = arith.constant dense<0.000000e+00> : vector<16xf32>
    %287 = vector.multi_reduction <add>, %286, %cst_91 [1] : vector<16x32xf32> to vector<16xf32>
    %288 = vector.shape_cast %287 : vector<16xf32> to vector<16x1xf32>
    %cst_92 = arith.constant 3.200000e+01 : f32
    %289 = vector.broadcast %cst_92 : f32 to vector<16x1xf32>
    %290 = arith.divf %288, %289 : vector<16x1xf32>
    %291 = arith.mulf %285, %285 : vector<16x1xf32>
    %292 = arith.subf %290, %291 : vector<16x1xf32>
    %293 = vector.broadcast %285 : vector<16x1xf32> to vector<16x32xf32>
    %294 = arith.subf %279, %293 : vector<16x32xf32>
    %cst_93 = arith.constant 9.99999974E-6 : f32
    %295 = vector.broadcast %cst_93 : f32 to vector<16x1xf32>
    %296 = arith.addf %292, %295 : vector<16x1xf32>
    %297 = math.rsqrt %296 : vector<16x1xf32>
    %298 = vector.broadcast %297 : vector<16x1xf32> to vector<16x32xf32>
    %299 = arith.mulf %294, %298 : vector<16x32xf32>
    %300 = vector.broadcast %280 : vector<1x32xf32> to vector<16x32xf32>
    %301 = arith.mulf %299, %300 : vector<16x32xf32>
    %302 = vector.broadcast %281 : vector<1x32xf32> to vector<16x32xf32>
    %303 = arith.addf %301, %302 : vector<16x32xf32>
    %c0_94 = arith.constant 0 : index
    %c0_95 = arith.constant 0 : index
    %304 = vector.load %arg13[%c0_94, %c0_95] : memref<32x64xf32, #tpu.memory_space<vmem>>, vector<32x64xf32>
    %cst_96 = arith.constant dense<0.000000e+00> : vector<16x64xf32>
    %305 = tpu.matmul %303, %304, %cst_96 {dimension_numbers = #tpu.dot_dimension_numbers<[1], [0], [0], [1], [0, 0, 1, 1], [], []>} : vector<16x32xf32>, vector<32x64xf32>, vector<16x64xf32> -> vector<16x64xf32>
    %c0_97 = arith.constant 0 : index
    %c0_98 = arith.constant 0 : index
    %306 = vector.load %arg14[%c0_97, %c0_98] : memref<1x64xf32, #tpu.memory_space<vmem>>, vector<1x64xf32>
    %307 = vector.broadcast %306 : vector<1x64xf32> to vector<16x64xf32>
    %308 = arith.addf %305, %307 : vector<16x64xf32>
    %cst_99 = arith.constant 0.000000e+00 : f32
    %309 = vector.broadcast %cst_99 : f32 to vector<16x64xf32>
    %310 = arith.maximumf %308, %309 : vector<16x64xf32>
    %c0_100 = arith.constant 0 : index
    %c0_101 = arith.constant 0 : index
    %311 = vector.load %arg15[%c0_100, %c0_101] : memref<64x32xf32, #tpu.memory_space<vmem>>, vector<64x32xf32>
    %cst_102 = arith.constant dense<0.000000e+00> : vector<16x32xf32>
    %312 = tpu.matmul %310, %311, %cst_102 {dimension_numbers = #tpu.dot_dimension_numbers<[1], [0], [0], [1], [0, 0, 1, 1], [], []>} : vector<16x64xf32>, vector<64x32xf32>, vector<16x32xf32> -> vector<16x32xf32>
    %c0_103 = arith.constant 0 : index
    %c0_104 = arith.constant 0 : index
    %313 = vector.load %arg16[%c0_103, %c0_104] : memref<1x32xf32, #tpu.memory_space<vmem>>, vector<1x32xf32>
    %314 = vector.broadcast %313 : vector<1x32xf32> to vector<16x32xf32>
    %315 = arith.addf %312, %314 : vector<16x32xf32>
    %316 = arith.addf %303, %315 : vector<16x32xf32>
    %317 = vector.extract_strided_slice %8 {offsets = [2, 0], sizes = [1, 32], strides = [1, 1]} : vector<3x32xf32> to vector<1x32xf32>
    %318 = vector.extract_strided_slice %9 {offsets = [2, 0], sizes = [1, 32], strides = [1, 1]} : vector<3x32xf32> to vector<1x32xf32>
    %cst_105 = arith.constant dense<0.000000e+00> : vector<16xf32>
    %319 = vector.multi_reduction <add>, %316, %cst_105 [1] : vector<16x32xf32> to vector<16xf32>
    %320 = vector.shape_cast %319 : vector<16xf32> to vector<16x1xf32>
    %cst_106 = arith.constant 3.200000e+01 : f32
    %321 = vector.broadcast %cst_106 : f32 to vector<16x1xf32>
    %322 = arith.divf %320, %321 : vector<16x1xf32>
    %323 = arith.mulf %316, %316 : vector<16x32xf32>
    %cst_107 = arith.constant dense<0.000000e+00> : vector<16xf32>
    %324 = vector.multi_reduction <add>, %323, %cst_107 [1] : vector<16x32xf32> to vector<16xf32>
    %325 = vector.shape_cast %324 : vector<16xf32> to vector<16x1xf32>
    %cst_108 = arith.constant 3.200000e+01 : f32
    %326 = vector.broadcast %cst_108 : f32 to vector<16x1xf32>
    %327 = arith.divf %325, %326 : vector<16x1xf32>
    %328 = arith.mulf %322, %322 : vector<16x1xf32>
    %329 = arith.subf %327, %328 : vector<16x1xf32>
    %330 = vector.broadcast %322 : vector<16x1xf32> to vector<16x32xf32>
    %331 = arith.subf %316, %330 : vector<16x32xf32>
    %cst_109 = arith.constant 9.99999974E-6 : f32
    %332 = vector.broadcast %cst_109 : f32 to vector<16x1xf32>
    %333 = arith.addf %329, %332 : vector<16x1xf32>
    %334 = math.rsqrt %333 : vector<16x1xf32>
    %335 = vector.broadcast %334 : vector<16x1xf32> to vector<16x32xf32>
    %336 = arith.mulf %331, %335 : vector<16x32xf32>
    %337 = vector.broadcast %317 : vector<1x32xf32> to vector<16x32xf32>
    %338 = arith.mulf %336, %337 : vector<16x32xf32>
    %339 = vector.broadcast %318 : vector<1x32xf32> to vector<16x32xf32>
    %340 = arith.addf %338, %339 : vector<16x32xf32>
    %341 = vector.shape_cast %340 : vector<16x32xf32> to vector<2x8x32xf32>
    %c0_110 = arith.constant 0 : index
    %c0_111 = arith.constant 0 : index
    %c0_112 = arith.constant 0 : index
    %342 = vector.load %arg19[%c0_110, %c0_111, %c0_112] : memref<2x8x32xf32, #tpu.memory_space<vmem>>, vector<2x8x32xf32>
    tpu.vector_store %arg19[%c0_110, %c0_111, %c0_112], %341 {strides = array<i32>} : memref<2x8x32xf32, #tpu.memory_space<vmem>>, vector<2x8x32xf32>,
    return
  }
}

</mosaic_0001>

<llo_original>
// kernel: _decoder_layer_impl.1
$region0: #{_decoder_layer_impl.1}
  #allocation0 [shape = 'u32[]', space=smem, size = 0x4, offset = 0x4, fixed_abs, tag = 'smem constant byte address 0x4 - core index']
  #allocation1 [shape = 'u32[144,128]{1,0:T(1,128)}', space=vmem, size = 0x12000, scoped, tag = 'internal scratch']
  %s0 = inlined_call_operand.vmem [shape: f32[2,8,32], index: 0, kind: input, shape index: {}]
  %s1 = inlined_call_operand.vmem [shape: f32[2,16,32], index: 1, kind: input, shape index: {}]
  %s2 = inlined_call_operand.vmem [shape: f32[2,8,32], index: 2, kind: input, shape index: {}]
  %s3 = inlined_call_operand.vmem [shape: f32[2,16,32], index: 3, kind: input, shape index: {}]
  %s4 = inlined_call_operand.vmem [shape: f32[32,64], index: 4, kind: input, shape index: {}]
  %s5 = inlined_call_operand.vmem [shape: f32[32,32], index: 5, kind: input, shape index: {}]
  %s6 = inlined_call_operand.vmem [shape: f32[32,32], index: 6, kind: input, shape index: {}]
  %s7 = inlined_call_operand.hbm [shape: f32[4,32], index: 7, kind: input, shape index: {}]
  %s8 = inlined_call_operand.vmem [shape: f32[32,32], index: 8, kind: input, shape index: {}]
  %s9 = inlined_call_operand.vmem [shape: f32[32,32], index: 9, kind: input, shape index: {}]
  %s10 = inlined_call_operand.vmem [shape: f32[32,32], index: 10, kind: input, shape index: {}]
  %s11 = inlined_call_operand.hbm [shape: f32[32,32], index: 11, kind: input, shape index: {}]
  %s12 = inlined_call_operand.hbm [shape: f32[4,32], index: 12, kind: input, shape index: {}]
  %s13 = inlined_call_operand.vmem [shape: f32[32,64], index: 13, kind: input, shape index: {}]
  %s14 = inlined_call_operand.hbm [shape: f32[1,64], index: 14, kind: input, shape index: {}]
  %s15 = inlined_call_operand.vmem [shape: f32[64,32], index: 15, kind: input, shape index: {}]
  %s16 = inlined_call_operand.hbm [shape: f32[1,32], index: 16, kind: input, shape index: {}]
  %s17 = inlined_call_operand.hbm [shape: f32[3,32], index: 17, kind: input, shape index: {}]
  %s18 = inlined_call_operand.hbm [shape: f32[3,32], index: 18, kind: input, shape index: {}]
  %s19 = inlined_call_operand.vmem [shape: f32[2,8,32], index: 19, kind: output, shape index: {}]
  %s20 = sld [smem:[#allocation0]]
  $region114: #{_decoder_layer_impl.1} parent=0
    _
  %s22 = ssub.s32 1, %s20
  %s23 = scalar_select 0, %s22, %s20
  $region1: #{_decoder_layer_impl.1} parent=0
    #allocation2 [shape = 'u8[2048]{0}', space=vmem, size = 0x800, scoped, tag = 'input window, operand 7, single buffered']
    #allocation3 [shape = 's32[1]{0}', space=sflag, size = 0x4, scoped, tag = 'scoped memory for _decoder_layer_impl.1']
    #allocation4 [shape = 'u8[16384]{0}', space=vmem, size = 0x4000, scoped, tag = 'input window, operand 11, single buffered']
    #allocation5 [shape = 's32[1]{0}', space=sflag, size = 0x4, scoped, tag = 'scoped memory for _decoder_layer_impl.1']
    #allocation6 [shape = 'u8[2048]{0}', space=vmem, size = 0x800, scoped, tag = 'input window, operand 12, single buffered']
    #allocation7 [shape = 'u8[512]{0}', space=vmem, size = 0x400, scoped, tag = 'input window, operand 14, single buffered']
    #allocation8 [shape = 's32[1]{0}', space=sflag, size = 0x4, scoped, tag = 'scoped memory for _decoder_layer_impl.1']
    #allocation9 [shape = 'u8[512]{0}', space=vmem, size = 0x400, scoped, tag = 'input window, operand 16, single buffered']
    #allocation10 [shape = 'u8[2048]{0}', space=vmem, size = 0x800, scoped, tag = 'input window, operand 17, single buffered']
    #allocation11 [shape = 's32[1]{0}', space=sflag, size = 0x4, scoped, tag = 'scoped memory for _decoder_layer_impl.1']
    #allocation12 [shape = 'u8[2048]{0}', space=vmem, size = 0x800, scoped, tag = 'input window, operand 18, single buffered']
    %24 = vsyncpa [#allocation3], 0
    %25 = vsyncpa [#allocation5], 0
    %26 = vsyncpa [#allocation8], 0
    %27 = vsyncpa [#allocation11], 0
    // Predicated region
    $region2: #{_decoder_layer_impl.1} parent=1 // pred_check
      _
    $region3: #{_decoder_layer_impl.1} parent=1 // pred_check_branch
      %29 = sbr.rel (0) target = $region5
    $region4: #{_decoder_layer_impl.1} parent=1 // pred_region
      _
    $region5: #{_decoder_layer_impl.1} parent=1 // pred_fallthru
      _
    // Predicated region
    $region6: #{_decoder_layer_impl.1} parent=1 // pred_check
      _
    $region7: #{_decoder_layer_impl.1} parent=1 // pred_check_branch
      %31 = sbr.rel (0) target = $region9
    $region8: #{_decoder_layer_impl.1} parent=1 // pred_region
      _
    $region9: #{_decoder_layer_impl.1} parent=1 // pred_fallthru
      _
    // Predicated region
    $region10: #{_decoder_layer_impl.1} parent=1 // pred_check
      _
    $region11: #{_decoder_layer_impl.1} parent=1 // pred_check_branch
      %33 = sbr.rel (0) target = $region13
    $region12: #{_decoder_layer_impl.1} parent=1 // pred_region
      _
    $region13: #{_decoder_layer_impl.1} parent=1 // pred_fallthru
      _
    // Predicated region
    $region14: #{_decoder_layer_impl.1} parent=1 // pred_check
      _
    $region15: #{_decoder_layer_impl.1} parent=1 // pred_check_branch
      %35 = sbr.rel (0) target = $region17
    $region16: #{_decoder_layer_impl.1} parent=1 // pred_region
      _
    $region17: #{_decoder_layer_impl.1} parent=1 // pred_fallthru
      _
    // Predicated region
    $region18: #{_decoder_layer_impl.1} parent=1 // pred_check
      _
    $region19: #{_decoder_layer_impl.1} parent=1 // pred_check_branch
      %37 = sbr.rel (0) target = $region21
    $region20: #{_decoder_layer_impl.1} parent=1 // pred_region
      _
    $region21: #{_decoder_layer_impl.1} parent=1 // pred_fallthru
      _
    // Predicated region
    $region22: #{_decoder_layer_impl.1} parent=1 // pred_check
      _
    $region23: #{_decoder_layer_impl.1} parent=1 // pred_check_branch
      %39 = sbr.rel (0) target = $region25
    $region24: #{_decoder_layer_impl.1} parent=1 // pred_region
      _
    $region25: #{_decoder_layer_impl.1} parent=1 // pred_fallthru
      _
    // Predicated region
    $region26: #{_decoder_layer_impl.1} parent=1 // pred_check
      _
    $region27: #{_decoder_layer_impl.1} parent=1 // pred_check_branch
      %41 = sbr.rel (0) target = $region29
    $region28: #{_decoder_layer_impl.1} parent=1 // pred_region
      _
    $region29: #{_decoder_layer_impl.1} parent=1 // pred_fallthru
      _
    // Predicated region
    $region30: #{_decoder_layer_impl.1} parent=1 // pred_check
      _
    $region31: #{_decoder_layer_impl.1} parent=1 // pred_check_branch
      %43 = sbr.rel (0) target = $region33
    $region32: #{_decoder_layer_impl.1} parent=1 // pred_region
      %s45 = ssub.s32 64, 64
      %46 = vsyncadd [#allocation3], %s45
      %s48 = sshll.u32 [#allocation2], 4
      %s49 = int_to_ptr.vmem [resolvable:$true] %s48
      %51 = dma.hbm_to_vmem [thread:$0]  %s7, 64, %s49, [#allocation3]
    $region33: #{_decoder_layer_impl.1} parent=1 // pred_fallthru
      _
    // Predicated region
    $region34: #{_decoder_layer_impl.1} parent=1 // pred_check
      _
    $region35: #{_decoder_layer_impl.1} parent=1 // pred_check_branch
      %53 = sbr.rel (0) target = $region37
    $region36: #{_decoder_layer_impl.1} parent=1 // pred_region
      _
    $region37: #{_decoder_layer_impl.1} parent=1 // pred_fallthru
      _
    // Predicated region
    $region38: #{_decoder_layer_impl.1} parent=1 // pred_check
      _
    $region39: #{_decoder_layer_impl.1} parent=1 // pred_check_branch
      %55 = sbr.rel (0) target = $region41
    $region40: #{_decoder_layer_impl.1} parent=1 // pred_region
      _
    $region41: #{_decoder_layer_impl.1} parent=1 // pred_fallthru
      _
    // Predicated region
    $region42: #{_decoder_layer_impl.1} parent=1 // pred_check
      _
    $region43: #{_decoder_layer_impl.1} parent=1 // pred_check_branch
      %57 = sbr.rel (0) target = $region45
    $region44: #{_decoder_layer_impl.1} parent=1 // pred_region
      _
    $region45: #{_decoder_layer_impl.1} parent=1 // pred_fallthru
      _
    // Predicated region
    $region46: #{_decoder_layer_impl.1} parent=1 // pred_check
      _
    $region47: #{_decoder_layer_impl.1} parent=1 // pred_check_branch
      %59 = sbr.rel (0) target = $region49
    $region48: #{_decoder_layer_impl.1} parent=1 // pred_region
      %s61 = ssub.s32 512, 512
      %62 = vsyncadd [#allocation5], %s61
      %s63 = sshll.u32 [#allocation4], 4
      %s64 = int_to_ptr.vmem [resolvable:$true] %s63
      %69 = dma.hbm_to_vmem [thread:$0]  %s11, 512, %s64, [#allocation5], 128, 128, 8
    $region49: #{_decoder_layer_impl.1} parent=1 // pred_fallthru
      _
    // Predicated region
    $region50: #{_decoder_layer_impl.1} parent=1 // pred_check
      _
    $region51: #{_decoder_layer_impl.1} parent=1 // pred_check_branch
      %71 = sbr.rel (0) target = $region53
    $region52: #{_decoder_layer_impl.1} parent=1 // pred_region
      %s73 = ssub.s32 64, 64
      %74 = vsyncadd [#allocation5], %s73
      %s76 = sshll.u32 [#allocation6], 4
      %s77 = int_to_ptr.vmem [resolvable:$true] %s76
      %79 = dma.hbm_to_vmem [thread:$0]  %s12, 64, %s77, [#allocation5]
    $region53: #{_decoder_layer_impl.1} parent=1 // pred_fallthru
      _
    // Predicated region
    $region54: #{_decoder_layer_impl.1} parent=1 // pred_check
      _
    $region55: #{_decoder_layer_impl.1} parent=1 // pred_check_branch
      %81 = sbr.rel (0) target = $region57
    $region56: #{_decoder_layer_impl.1} parent=1 // pred_region
      _
    $region57: #{_decoder_layer_impl.1} parent=1 // pred_fallthru
      _
    // Predicated region
    $region58: #{_decoder_layer_impl.1} parent=1 // pred_check
      _
    $region59: #{_decoder_layer_impl.1} parent=1 // pred_check_branch
      %83 = sbr.rel (0) target = $region61
    $region60: #{_decoder_layer_impl.1} parent=1 // pred_region
      %s85 = ssub.s32 16, 16
      %86 = vsyncadd [#allocation8], %s85
      %s88 = sshll.u32 [#allocation7], 4
      %s89 = int_to_ptr.vmem [resolvable:$true] %s88
      %91 = dma.hbm_to_vmem [thread:$0]  %s14, 16, %s89, [#allocation8]
    $region61: #{_decoder_layer_impl.1} parent=1 // pred_fallthru
      _
    // Predicated region
    $region62: #{_decoder_layer_impl.1} parent=1 // pred_check
      _
    $region63: #{_decoder_layer_impl.1} parent=1 // pred_check_branch
      %93 = sbr.rel (0) target = $region65
    $region64: #{_decoder_layer_impl.1} parent=1 // pred_region
      _
    $region65: #{_decoder_layer_impl.1} parent=1 // pred_fallthru
      _
    // Predicated region
    $region66: #{_decoder_layer_impl.1} parent=1 // pred_check
      _
    $region67: #{_decoder_layer_impl.1} parent=1 // pred_check_branch
      %95 = sbr.rel (0) target = $region69
    $region68: #{_decoder_layer_impl.1} parent=1 // pred_region
      %s97 = ssub.s32 16, 16
      %98 = vsyncadd [#allocation8], %s97
      %s100 = sshll.u32 [#allocation9], 4
      %s101 = int_to_ptr.vmem [resolvable:$true] %s100
      %103 = dma.hbm_to_vmem [thread:$0]  %s16, 16, %s101, [#allocation8]
    $region69: #{_decoder_layer_impl.1} parent=1 // pred_fallthru
      _
    // Predicated region
    $region70: #{_decoder_layer_impl.1} parent=1 // pred_check
      _
    $region71: #{_decoder_layer_impl.1} parent=1 // pred_check_branch
      %105 = sbr.rel (0) target = $region73
    $region72: #{_decoder_layer_impl.1} parent=1 // pred_region
      %s107 = ssub.s32 64, 64
      %108 = vsyncadd [#allocation11], %s107
      %s110 = sshll.u32 [#allocation10], 4
      %s111 = int_to_ptr.vmem [resolvable:$true] %s110
      %113 = dma.hbm_to_vmem [thread:$0]  %s17, 64, %s111, [#allocation11]
    $region73: #{_decoder_layer_impl.1} parent=1 // pred_fallthru
      _
    // Predicated region
    $region74: #{_decoder_layer_impl.1} parent=1 // pred_check
      _
    $region75: #{_decoder_layer_impl.1} parent=1 // pred_check_branch
      %115 = sbr.rel (0) target = $region77
    $region76: #{_decoder_layer_impl.1} parent=1 // pred_region
      %s117 = ssub.s32 64, 64
      %118 = vsyncadd [#allocation11], %s117
      %s120 = sshll.u32 [#allocation12], 4
      %s121 = int_to_ptr.vmem [resolvable:$true] %s120
      %123 = dma.hbm_to_vmem [thread:$0]  %s18, 64, %s121, [#allocation11]
    $region77: #{_decoder_layer_impl.1} parent=1 // pred_fallthru
      _
    // Predicated region
    $region78: #{_decoder_layer_impl.1} parent=1 // pred_check
      _
    $region79: #{_decoder_layer_impl.1} parent=1 // pred_check_branch
      %125 = sbr.rel (0) target = $region81
    $region80: #{_decoder_layer_impl.1} parent=1 // pred_region
      %126 = dma.done [#allocation3], 64
    $region81: #{_decoder_layer_impl.1} parent=1 // pred_fallthru
      _
    // Predicated region
    $region82: #{_decoder_layer_impl.1} parent=1 // pred_check
      _
    $region83: #{_decoder_layer_impl.1} parent=1 // pred_check_branch
      %128 = sbr.rel (0) target = $region85
    $region84: #{_decoder_layer_impl.1} parent=1 // pred_region
      %129 = dma.done [#allocation5], 512
    $region85: #{_decoder_layer_impl.1} parent=1 // pred_fallthru
      _
    // Predicated region
    $region86: #{_decoder_layer_impl.1} parent=1 // pred_check
      _
    $region87: #{_decoder_layer_impl.1} parent=1 // pred_check_branch
      %131 = sbr.rel (0) target = $region89
    $region88: #{_decoder_layer_impl.1} parent=1 // pred_region
      %132 = dma.done [#allocation5], 64
    $region89: #{_decoder_layer_impl.1} parent=1 // pred_fallthru
      _
    // Predicated region
    $region90: #{_decoder_layer_impl.1} parent=1 // pred_check
      _
    $region91: #{_decoder_layer_impl.1} parent=1 // pred_check_branch
      %134 = sbr.rel (0) target = $region93
    $region92: #{_decoder_layer_impl.1} parent=1 // pred_region
      %135 = dma.done [#allocation8], 16
    $region93: #{_decoder_layer_impl.1} parent=1 // pred_fallthru
      _
    // Predicated region
    $region94: #{_decoder_layer_impl.1} parent=1 // pred_check
      _
    $region95: #{_decoder_layer_impl.1} parent=1 // pred_check_branch
      %137 = sbr.rel (0) target = $region97
    $region96: #{_decoder_layer_impl.1} parent=1 // pred_region
      %138 = dma.done [#allocation8], 16
    $region97: #{_decoder_layer_impl.1} parent=1 // pred_fallthru
      _
    // Predicated region
    $region98: #{_decoder_layer_impl.1} parent=1 // pred_check
      _
    $region99: #{_decoder_layer_impl.1} parent=1 // pred_check_branch
      %140 = sbr.rel (0) target = $region101
    $region100: #{_decoder_layer_impl.1} parent=1 // pred_region
      %141 = dma.done [#allocation11], 64
    $region101: #{_decoder_layer_impl.1} parent=1 // pred_fallthru
      _
    // Predicated region
    $region102: #{_decoder_layer_impl.1} parent=1 // pred_check
      _
    $region103: #{_decoder_layer_impl.1} parent=1 // pred_check_branch
      %143 = sbr.rel (0) target = $region105
    $region104: #{_decoder_layer_impl.1} parent=1 // pred_region
      %144 = dma.done [#allocation11], 64
    $region105: #{_decoder_layer_impl.1} parent=1 // pred_fallthru
      _
    %v145 = vld [vmem:[%s0] sm:$0xff]
    %v146 = vld [vmem:[%s0 + $0x8] sm:$0xff]
    %v147 = vld [vmem:[%s2] sm:$0xff]
    %v148 = vld [vmem:[%s2 + $0x8] sm:$0xff]
    %v149 = vld [vmem:[%s1] sm:$0xff]
    %v150 = vld [vmem:[%s1 + $0x8] sm:$0xff]
    %v151 = vld [vmem:[%s1 + $0x10] sm:$0xff]
    %v152 = vld [vmem:[%s1 + $0x18] sm:$0xff]
    %v153 = vld [vmem:[%s3] sm:$0xff]
    %v154 = vld [vmem:[%s3 + $0x8] sm:$0xff]
    %v155 = vld [vmem:[%s3 + $0x10] sm:$0xff]
    %v156 = vld [vmem:[%s3 + $0x18] sm:$0xff]
    %v157 = vld [vmem:[#allocation10] sm:$0x7]
    %v158 = vld [vmem:[#allocation12] sm:$0x7]
    %v159 = vld [vmem:[#allocation2] sm:$0xf]
    %v160 = vld [vmem:[#allocation6] sm:$0xf]
    %v161 = vlaneseq
    %v162 = vand.u32 %v161, 127
    %vm163 = vcmp.ge.s32.totalorder %v162, 0
    %vm164 = vcmp.lt.s32.totalorder %v162, 8
    %vm165 = vmand %vm163, %vm164
    %v166 = vsel %vm165, 1, 0
    %v167 = vcvt.s32.f32 %v166
    %vm168 = vcmp.ge.s32.totalorder %v162, 8
    %vm169 = vcmp.lt.s32.totalorder %v162, 16
    %vm170 = vmand %vm168, %vm169
    %v171 = vsel %vm170, 1, 0
    %v172 = vcvt.s32.f32 %v171
    %vm173 = vcmp.ge.s32.totalorder %v162, 16
    %vm174 = vcmp.lt.s32.totalorder %v162, 24
    %vm175 = vmand %vm173, %vm174
    %v176 = vsel %vm175, 1, 0
    %v177 = vcvt.s32.f32 %v176
    %vm178 = vcmp.ge.s32.totalorder %v162, 24
    %vm179 = vcmp.lt.s32.totalorder %v162, 32
    %vm180 = vmand %vm178, %vm179
    %v181 = vsel %vm180, 1, 0
    %v182 = vcvt.s32.f32 %v181
    %v183 = vadd.f32 %v145, %v147
    %v184 = vadd.f32 %v146, %v148
    %v185 = vld [vmem:[%s4] sm:$0xff]
    %v186 = vld [vmem:[%s4 + $0x8] sm:$0xff]
    %v187 = vld [vmem:[%s4 + $0x10] sm:$0xff]
    %v188 = vld [vmem:[%s4 + $0x18] sm:$0xff]
    %vm189 = vcmask 261120
    %v191 = vsel %vm189, %v183, 0
    %v194 = vsel %vm189, %v184, 0
    %196 = vmatprep.subr.mxu0 0.0
    %197 = vmatpush1.msra.mxu0 0.0
    %198 = vmatprep.subr.mxu0 0.0
    %199 = vmatpush1.msra.mxu0 0.0
    %200 = vmatprep.subr.mxu0 0.0
    %201 = vmatpush1.msra.mxu0 0.0
    %202 = vmatprep.subr.mxu0 0.0
    %203 = vmatpush1.msra.mxu0 0.0
    %204 = vmatprep.subr.mxu0 0.0
    %205 = vmatpush1.msra.mxu0 0.0
    %206 = vmatprep.subr.mxu0 0.0
    %207 = vmatpush1.msra.mxu0 0.0
    %208 = vmatprep.subr.mxu0 0.0
    %209 = vmatpush1.msra.mxu0 0.0
    %210 = vmatprep.subr.mxu0 0.0
    %211 = vmatpush1.msra.mxu0 0.0
    %212 = vmatprep.subr.mxu0 0.0
    %213 = vmatpush1.msra.mxu0 0.0
    %214 = vmatprep.subr.mxu0 0.0
    %215 = vmatpush1.msra.mxu0 0.0
    %216 = vmatprep.subr.mxu0 0.0
    %217 = vmatpush1.msra.mxu0 0.0
    %218 = vmatprep.subr.mxu0 0.0
    %219 = vmatpush1.msra.mxu0 0.0
    %220 = vmatprep.subr.mxu0 0.0
    %221 = vmatpush1.msra.mxu0 %v188
    %222 = vmatprep.subr.mxu0 0.0
    %223 = vmatpush1.msra.mxu0 %v187
    %224 = vmatprep.subr.mxu0 0.0
    %225 = vmatpush1.msra.mxu0 %v186
    %226 = vmatprep.subr.mxu0 0.0
    %227 = vmatpush1.msra.mxu0 %v185
    %228 = vmatprep.subr.mxu0 0.0
    %229 = vmatpush2.msra.mxu0 0.0
    %230 = vmatprep.subr.mxu0 0.0
    %231 = vmatpush2.msra.mxu0 0.0
    %232 = vmatprep.subr.mxu0 0.0
    %233 = vmatpush2.msra.mxu0 0.0
    %234 = vmatprep.subr.mxu0 0.0
    %235 = vmatpush2.msra.mxu0 0.0
    %236 = vmatprep.subr.mxu0 0.0
    %237 = vmatpush2.msra.mxu0 0.0
    %238 = vmatprep.subr.mxu0 0.0
    %239 = vmatpush2.msra.mxu0 0.0
    %240 = vmatprep.subr.mxu0 0.0
    %241 = vmatpush2.msra.mxu0 0.0
    %242 = vmatprep.subr.mxu0 0.0
    %243 = vmatpush2.msra.mxu0 0.0
    %244 = vmatprep.subr.mxu0 0.0
    %245 = vmatpush2.msra.mxu0 0.0
    %246 = vmatprep.subr.mxu0 0.0
    %247 = vmatpush2.msra.mxu0 0.0
    %248 = vmatprep.subr.mxu0 0.0
    %249 = vmatpush2.msra.mxu0 0.0
    %250 = vmatprep.subr.mxu0 0.0
    %251 = vmatpush2.msra.mxu0 0.0
    %252 = vmatprep.subr.mxu0 0.0
    %253 = vmatpush2.msra.mxu0 0.0
    %254 = vmatprep.subr.mxu0 0.0
    %255 = vmatpush2.msra.mxu0 0.0
    %256 = vmatprep.subr.mxu0 0.0
    %257 = vmatpush2.msra.mxu0 0.0
    %258 = vmatprep.subr.mxu0 0.0
    %259 = vmatpush2.msra.mxu0 0.0
    %260 = vmatprep.mubr.f32.mxu0 0.0
    %261 = vmatmul.mubr.f32.gmra.mxu0 %v191
    %v262 = vpop.f32.mrf.mxu0
    %v263 = vadd.f32 0.0, %v262
    %v264 = vpop.f32.mrf.mxu0
    %265 = vmatprep.mubr.f32.mxu0 0.0
    %266 = vmatmul.mubr.f32.gmra.mxu0 %v194
    %v267 = vpop.f32.mrf.mxu0
    %v268 = vadd.f32 0.0, %v267
    %v269 = vpop.f32.mrf.mxu0
    %270 = vdwg.mxu0
    %v271 = vlaneseq
    %v272 = vshrl.u32 %v271, 7
    %v273 = vsub.s32 0, %v272
    %v274 = vrot.slane %v159, %v273
    %v275 = vadd.f32 %v263, %v274
    %v276 = vadd.f32 %v268, %v274
    %v277 = vlaneseq
    %v278 = vshrl.u32 %v277, 7
    %v279 = vsub.s32 1, %v278
    %v280 = vrot.slane %v159, %v279
    %282 = vrot.lane.b32.xlu0 %v280, 32
    %v283 = vpop.permute.xlu0 %282
    %v285 = vadd.f32 %v263, %v283
    %v286 = vadd.f32 %v268, %v283
    %v287 = vld [vmem:[%s5] sm:$0xff]
    %v288 = vld [vmem:[%s5 + $0x8] sm:$0xff]
    %v289 = vld [vmem:[%s5 + $0x10] sm:$0xff]
    %v290 = vld [vmem:[%s5 + $0x18] sm:$0xff]
    %v291 = vlaneseq
    %v292 = vshrl.u32 %v291, 7
    %v293 = vsub.s32 2, %v292
    %v294 = vrot.slane %v159, %v293
    %v296 = vsel %vm189, %v145, 0
    %v299 = vsel %vm189, %v146, 0
    %301 = vmatprep.subr.mxu0 0.0
    %302 = vmatpush1.msra.mxu0 0.0
    %303 = vmatprep.subr.mxu0 0.0
    %304 = vmatpush1.msra.mxu0 0.0
    %305 = vmatprep.subr.mxu0 0.0
    %306 = vmatpush1.msra.mxu0 0.0
    %307 = vmatprep.subr.mxu0 0.0
    %308 = vmatpush1.msra.mxu0 0.0
    %309 = vmatprep.subr.mxu0 0.0
    %310 = vmatpush1.msra.mxu0 0.0
    %311 = vmatprep.subr.mxu0 0.0
    %312 = vmatpush1.msra.mxu0 0.0
    %313 = vmatprep.subr.mxu0 0.0
    %314 = vmatpush1.msra.mxu0 0.0
    %315 = vmatprep.subr.mxu0 0.0
    %316 = vmatpush1.msra.mxu0 0.0
    %317 = vmatprep.subr.mxu0 0.0
    %318 = vmatpush1.msra.mxu0 0.0
    %319 = vmatprep.subr.mxu0 0.0
    %320 = vmatpush1.msra.mxu0 0.0
    %321 = vmatprep.subr.mxu0 0.0
    %322 = vmatpush1.msra.mxu0 0.0
    %323 = vmatprep.subr.mxu0 0.0
    %324 = vmatpush1.msra.mxu0 0.0
    %325 = vmatprep.subr.mxu0 0.0
    %326 = vmatpush1.msra.mxu0 %v290
    %327 = vmatprep.subr.mxu0 0.0
    %328 = vmatpush1.msra.mxu0 %v289
    %329 = vmatprep.subr.mxu0 0.0
    %330 = vmatpush1.msra.mxu0 %v288
    %331 = vmatprep.subr.mxu0 0.0
    %332 = vmatpush1.msra.mxu0 %v287
    %333 = vmatprep.subr.mxu0 0.0
    %334 = vmatpush2.msra.mxu0 0.0
    %335 = vmatprep.subr.mxu0 0.0
    %336 = vmatpush2.msra.mxu0 0.0
    %337 = vmatprep.subr.mxu0 0.0
    %338 = vmatpush2.msra.mxu0 0.0
    %339 = vmatprep.subr.mxu0 0.0
    %340 = vmatpush2.msra.mxu0 0.0
    %341 = vmatprep.subr.mxu0 0.0
    %342 = vmatpush2.msra.mxu0 0.0
    %343 = vmatprep.subr.mxu0 0.0
    %344 = vmatpush2.msra.mxu0 0.0
    %345 = vmatprep.subr.mxu0 0.0
    %346 = vmatpush2.msra.mxu0 0.0
    %347 = vmatprep.subr.mxu0 0.0
    %348 = vmatpush2.msra.mxu0 0.0
    %349 = vmatprep.subr.mxu0 0.0
    %350 = vmatpush2.msra.mxu0 0.0
    %351 = vmatprep.subr.mxu0 0.0
    %352 = vmatpush2.msra.mxu0 0.0
    %353 = vmatprep.subr.mxu0 0.0
    %354 = vmatpush2.msra.mxu0 0.0
    %355 = vmatprep.subr.mxu0 0.0
    %356 = vmatpush2.msra.mxu0 0.0
    %357 = vmatprep.subr.mxu0 0.0
    %358 = vmatpush2.msra.mxu0 0.0
    %359 = vmatprep.subr.mxu0 0.0
    %360 = vmatpush2.msra.mxu0 0.0
    %361 = vmatprep.subr.mxu0 0.0
    %362 = vmatpush2.msra.mxu0 0.0
    %363 = vmatprep.subr.mxu0 0.0
    %364 = vmatpush2.msra.mxu0 0.0
    %365 = vmatprep.mubr.f32.mxu0 0.0
    %366 = vmatmul.mubr.f32.gmra.mxu0 %v296
    %v367 = vpop.f32.mrf.mxu0
    %v368 = vadd.f32 %v294, %v367
    %v369 = vpop.f32.mrf.mxu0
    %370 = vmatprep.mubr.f32.mxu0 0.0
    %371 = vmatmul.mubr.f32.gmra.mxu0 %v299
    %v372 = vpop.f32.mrf.mxu0
    %v373 = vadd.f32 %v294, %v372
    %v374 = vpop.f32.mrf.mxu0
    %375 = vdwg.mxu0
    %v376 = vld [vmem:[%s6] sm:$0xff]
    %v377 = vld [vmem:[%s6 + $0x8] sm:$0xff]
    %v378 = vld [vmem:[%s6 + $0x10] sm:$0xff]
    %v379 = vld [vmem:[%s6 + $0x18] sm:$0xff]
    %v380 = vmul.f32 %v275, %v167
    %v381 = vmul.f32 %v276, %v167
    %383 = vrot.lane.b32.xlu0 %v285, 96
    %v384 = vpop.permute.xlu0 %383
    %v386 = vsel %vm189, %v380, 0
    %v388 = vsel %vm189, %v384, 0
    %390 = vmatprep.subr.mxu0 0.0
    %391 = vmatpush1.xpose.msra.mxu0 0.0
    %392 = vmatprep.subr.mxu0 0.0
    %393 = vmatpush1.xpose.msra.mxu0 0.0
    %394 = vmatprep.subr.mxu0 0.0
    %395 = vmatpush1.xpose.msra.mxu0 0.0
    %396 = vmatprep.subr.mxu0 0.0
    %397 = vmatpush1.xpose.msra.mxu0 0.0
    %398 = vmatprep.subr.mxu0 0.0
    %399 = vmatpush1.xpose.msra.mxu0 0.0
    %400 = vmatprep.subr.mxu0 0.0
    %401 = vmatpush1.xpose.msra.mxu0 0.0
    %402 = vmatprep.subr.mxu0 0.0
    %403 = vmatpush1.xpose.msra.mxu0 0.0
    %404 = vmatprep.subr.mxu0 0.0
    %405 = vmatpush1.xpose.msra.mxu0 0.0
    %406 = vmatprep.subr.mxu0 0.0
    %407 = vmatpush1.xpose.msra.mxu0 0.0
    %408 = vmatprep.subr.mxu0 0.0
    %409 = vmatpush1.xpose.msra.mxu0 0.0
    %410 = vmatprep.subr.mxu0 0.0
    %411 = vmatpush1.xpose.msra.mxu0 0.0
    %412 = vmatprep.subr.mxu0 0.0
    %413 = vmatpush1.xpose.msra.mxu0 0.0
    %414 = vmatprep.subr.mxu0 0.0
    %415 = vmatpush1.xpose.msra.mxu0 0.0
    %416 = vmatprep.subr.mxu0 0.0
    %417 = vmatpush1.xpose.msra.mxu0 0.0
    %418 = vmatprep.subr.mxu0 0.0
    %419 = vmatpush1.xpose.msra.mxu0 0.0
    %420 = vmatprep.subr.mxu0 0.0
    %421 = vmatpush1.xpose.msra.mxu0 %v388
    %422 = vmatprep.subr.mxu0 0.0
    %423 = vmatpush2.xpose.msra.mxu0 0.0
    %424 = vmatprep.subr.mxu0 0.0
    %425 = vmatpush2.xpose.msra.mxu0 0.0
    %426 = vmatprep.subr.mxu0 0.0
    %427 = vmatpush2.xpose.msra.mxu0 0.0
    %428 = vmatprep.subr.mxu0 0.0
    %429 = vmatpush2.xpose.msra.mxu0 0.0
    %430 = vmatprep.subr.mxu0 0.0
    %431 = vmatpush2.xpose.msra.mxu0 0.0
    %432 = vmatprep.subr.mxu0 0.0
    %433 = vmatpush2.xpose.msra.mxu0 0.0
    %434 = vmatprep.subr.mxu0 0.0
    %435 = vmatpush2.xpose.msra.mxu0 0.0
    %436 = vmatprep.subr.mxu0 0.0
    %437 = vmatpush2.xpose.msra.mxu0 0.0
    %438 = vmatprep.subr.mxu0 0.0
    %439 = vmatpush2.xpose.msra.mxu0 0.0
    %440 = vmatprep.subr.mxu0 0.0
    %441 = vmatpush2.xpose.msra.mxu0 0.0
    %442 = vmatprep.subr.mxu0 0.0
    %443 = vmatpush2.xpose.msra.mxu0 0.0
    %444 = vmatprep.subr.mxu0 0.0
    %445 = vmatpush2.xpose.msra.mxu0 0.0
    %446 = vmatprep.subr.mxu0 0.0
    %447 = vmatpush2.xpose.msra.mxu0 0.0
    %448 = vmatprep.subr.mxu0 0.0
    %449 = vmatpush2.xpose.msra.mxu0 0.0
    %450 = vmatprep.subr.mxu0 0.0
    %451 = vmatpush2.xpose.msra.mxu0 0.0
    %452 = vmatprep.subr.mxu0 0.0
    %453 = vmatpush2.xpose.msra.mxu0 0.0
    %454 = vmatprep.mubr.f32.mxu0 0.0
    %455 = vmatmul.mubr.f32.gmra.mxu0 %v386
    %v456 = vpop.f32.mrf.mxu0
    %v457 = vadd.f32 0.0, %v456
    %v458 = vpop.f32.mrf.mxu0
    %459 = vdwg.mxu0
    %461 = vrot.lane.b32.xlu0 %v286, 96
    %v462 = vpop.permute.xlu0 %461
    %v464 = vsel %vm189, %v381, 0
    %v466 = vsel %vm189, %v462, 0
    %468 = vmatprep.subr.mxu0 0.0
    %469 = vmatpush1.xpose.msra.mxu0 0.0
    %470 = vmatprep.subr.mxu0 0.0
    %471 = vmatpush1.xpose.msra.mxu0 0.0
    %472 = vmatprep.subr.mxu0 0.0
    %473 = vmatpush1.xpose.msra.mxu0 0.0
    %474 = vmatprep.subr.mxu0 0.0
    %475 = vmatpush1.xpose.msra.mxu0 0.0
    %476 = vmatprep.subr.mxu0 0.0
    %477 = vmatpush1.xpose.msra.mxu0 0.0
    %478 = vmatprep.subr.mxu0 0.0
    %479 = vmatpush1.xpose.msra.mxu0 0.0
    %480 = vmatprep.subr.mxu0 0.0
    %481 = vmatpush1.xpose.msra.mxu0 0.0
    %482 = vmatprep.subr.mxu0 0.0
    %483 = vmatpush1.xpose.msra.mxu0 0.0
    %484 = vmatprep.subr.mxu0 0.0
    %485 = vmatpush1.xpose.msra.mxu0 0.0
    %486 = vmatprep.subr.mxu0 0.0
    %487 = vmatpush1.xpose.msra.mxu0 0.0
    %488 = vmatprep.subr.mxu0 0.0
    %489 = vmatpush1.xpose.msra.mxu0 0.0
    %490 = vmatprep.subr.mxu0 0.0
    %491 = vmatpush1.xpose.msra.mxu0 0.0
    %492 = vmatprep.subr.mxu0 0.0
    %493 = vmatpush1.xpose.msra.mxu0 0.0
    %494 = vmatprep.subr.mxu0 0.0
    %495 = vmatpush1.xpose.msra.mxu0 0.0
    %496 = vmatprep.subr.mxu0 0.0
    %497 = vmatpush1.xpose.msra.mxu0 0.0
    %498 = vmatprep.subr.mxu0 0.0
    %499 = vmatpush1.xpose.msra.mxu0 %v466
    %500 = vmatprep.subr.mxu0 0.0
    %501 = vmatpush2.xpose.msra.mxu0 0.0
    %502 = vmatprep.subr.mxu0 0.0
    %503 = vmatpush2.xpose.msra.mxu0 0.0
    %504 = vmatprep.subr.mxu0 0.0
    %505 = vmatpush2.xpose.msra.mxu0 0.0
    %506 = vmatprep.subr.mxu0 0.0
    %507 = vmatpush2.xpose.msra.mxu0 0.0
    %508 = vmatprep.subr.mxu0 0.0
    %509 = vmatpush2.xpose.msra.mxu0 0.0
    %510 = vmatprep.subr.mxu0 0.0
    %511 = vmatpush2.xpose.msra.mxu0 0.0
    %512 = vmatprep.subr.mxu0 0.0
    %513 = vmatpush2.xpose.msra.mxu0 0.0
    %514 = vmatprep.subr.mxu0 0.0
    %515 = vmatpush2.xpose.msra.mxu0 0.0
    %516 = vmatprep.subr.mxu0 0.0
    %517 = vmatpush2.xpose.msra.mxu0 0.0
    %518 = vmatprep.subr.mxu0 0.0
    %519 = vmatpush2.xpose.msra.mxu0 0.0
    %520 = vmatprep.subr.mxu0 0.0
    %521 = vmatpush2.xpose.msra.mxu0 0.0
    %522 = vmatprep.subr.mxu0 0.0
    %523 = vmatpush2.xpose.msra.mxu0 0.0
    %524 = vmatprep.subr.mxu0 0.0
    %525 = vmatpush2.xpose.msra.mxu0 0.0
    %526 = vmatprep.subr.mxu0 0.0
    %527 = vmatpush2.xpose.msra.mxu0 0.0
    %528 = vmatprep.subr.mxu0 0.0
    %529 = vmatpush2.xpose.msra.mxu0 0.0
    %530 = vmatprep.subr.mxu0 0.0
    %531 = vmatpush2.xpose.msra.mxu0 0.0
    %532 = vmatprep.mubr.f32.mxu0 0.0
    %533 = vmatmul.mubr.f32.gmra.mxu0 %v464
    %v534 = vpop.f32.mrf.mxu0
    %v535 = vadd.f32 0.0, %v534
    %v536 = vpop.f32.mrf.mxu0
    %537 = vdwg.mxu0
    %v538 = vmul.f32 %v457, 0.35355338
    %v539 = vmul.f32 %v535, 0.35355338
    %vm540 = vcmask 64512
    %v541 = vsel %vm540, %v538, -inf
    %542 = vmax.xlane.f32.xlu0 %v541
    %v543 = vpop.xlane.xlu0 %542
    %v544 = vsel %vm540, %v539, -inf
    %545 = vmax.xlane.f32.xlu0 %v544
    %v546 = vpop.xlane.xlu0 %545
    %v547 = vsub.f32 %v538, %v543
    %v548 = vsub.f32 %v539, %v546
    %v549 = vmul.f32 %v547, 1.442695
    %v550 = vpow.pop %v549
    %v551 = vmul.f32 %v548, 1.442695
    %v552 = vpow.pop %v551
    %v553 = vsel %vm540, %v550, 0.0
    %554 = vadd.xlane.f32.xlu0 %v553
    %v555 = vpop.xlane.xlu0 %554
    %v556 = vsel %vm540, %v552, 0.0
    %557 = vadd.xlane.f32.xlu0 %v556
    %v558 = vpop.xlane.xlu0 %557
    %v559 = vrcp.pop %v555
    %v560 = vmul.f32 %v550, %v559
    %v561 = vrcp.pop %v558
    %v562 = vmul.f32 %v552, %v561
    %v563 = vmul.f32 %v368, %v167
    %v564 = vmul.f32 %v373, %v167
    %v565 = vmul.f32 %v275, %v172
    %v566 = vmul.f32 %v276, %v172
    %v568 = vsel %vm189, %v565, 0
    %570 = vmatprep.subr.mxu0 0.0
    %571 = vmatpush1.xpose.msra.mxu0 0.0
    %572 = vmatprep.subr.mxu0 0.0
    %573 = vmatpush1.xpose.msra.mxu0 0.0
    %574 = vmatprep.subr.mxu0 0.0
    %575 = vmatpush1.xpose.msra.mxu0 0.0
    %576 = vmatprep.subr.mxu0 0.0
    %577 = vmatpush1.xpose.msra.mxu0 0.0
    %578 = vmatprep.subr.mxu0 0.0
    %579 = vmatpush1.xpose.msra.mxu0 0.0
    %580 = vmatprep.subr.mxu0 0.0
    %581 = vmatpush1.xpose.msra.mxu0 0.0
    %582 = vmatprep.subr.mxu0 0.0
    %583 = vmatpush1.xpose.msra.mxu0 0.0
    %584 = vmatprep.subr.mxu0 0.0
    %585 = vmatpush1.xpose.msra.mxu0 0.0
    %586 = vmatprep.subr.mxu0 0.0
    %587 = vmatpush1.xpose.msra.mxu0 0.0
    %588 = vmatprep.subr.mxu0 0.0
    %589 = vmatpush1.xpose.msra.mxu0 0.0
    %590 = vmatprep.subr.mxu0 0.0
    %591 = vmatpush1.xpose.msra.mxu0 0.0
    %592 = vmatprep.subr.mxu0 0.0
    %593 = vmatpush1.xpose.msra.mxu0 0.0
    %594 = vmatprep.subr.mxu0 0.0
    %595 = vmatpush1.xpose.msra.mxu0 0.0
    %596 = vmatprep.subr.mxu0 0.0
    %597 = vmatpush1.xpose.msra.mxu0 0.0
    %598 = vmatprep.subr.mxu0 0.0
    %599 = vmatpush1.xpose.msra.mxu0 0.0
    %600 = vmatprep.subr.mxu0 0.0
    %601 = vmatpush1.xpose.msra.mxu0 %v388
    %602 = vmatprep.subr.mxu0 0.0
    %603 = vmatpush2.xpose.msra.mxu0 0.0
    %604 = vmatprep.subr.mxu0 0.0
    %605 = vmatpush2.xpose.msra.mxu0 0.0
    %606 = vmatprep.subr.mxu0 0.0
    %607 = vmatpush2.xpose.msra.mxu0 0.0
    %608 = vmatprep.subr.mxu0 0.0
    %609 = vmatpush2.xpose.msra.mxu0 0.0
    %610 = vmatprep.subr.mxu0 0.0
    %611 = vmatpush2.xpose.msra.mxu0 0.0
    %612 = vmatprep.subr.mxu0 0.0
    %613 = vmatpush2.xpose.msra.mxu0 0.0
    %614 = vmatprep.subr.mxu0 0.0
    %615 = vmatpush2.xpose.msra.mxu0 0.0
    %616 = vmatprep.subr.mxu0 0.0
    %617 = vmatpush2.xpose.msra.mxu0 0.0
    %618 = vmatprep.subr.mxu0 0.0
    %619 = vmatpush2.xpose.msra.mxu0 0.0
    %620 = vmatprep.subr.mxu0 0.0
    %621 = vmatpush2.xpose.msra.mxu0 0.0
    %622 = vmatprep.subr.mxu0 0.0
    %623 = vmatpush2.xpose.msra.mxu0 0.0
    %624 = vmatprep.subr.mxu0 0.0
    %625 = vmatpush2.xpose.msra.mxu0 0.0
    %626 = vmatprep.subr.mxu0 0.0
    %627 = vmatpush2.xpose.msra.mxu0 0.0
    %628 = vmatprep.subr.mxu0 0.0
    %629 = vmatpush2.xpose.msra.mxu0 0.0
    %630 = vmatprep.subr.mxu0 0.0
    %631 = vmatpush2.xpose.msra.mxu0 0.0
    %632 = vmatprep.subr.mxu0 0.0
    %633 = vmatpush2.xpose.msra.mxu0 0.0
    %634 = vmatprep.mubr.f32.mxu0 0.0
    %635 = vmatmul.mubr.f32.gmra.mxu0 %v568
    %v636 = vpop.f32.mrf.mxu0
    %v637 = vadd.f32 0.0, %v636
    %v638 = vpop.f32.mrf.mxu0
    %639 = vdwg.mxu0
    %v641 = vsel %vm189, %v566, 0
    %643 = vmatprep.subr.mxu0 0.0
    %644 = vmatpush1.xpose.msra.mxu0 0.0
    %645 = vmatprep.subr.mxu0 0.0
    %646 = vmatpush1.xpose.msra.mxu0 0.0
    %647 = vmatprep.subr.mxu0 0.0
    %648 = vmatpush1.xpose.msra.mxu0 0.0
    %649 = vmatprep.subr.mxu0 0.0
    %650 = vmatpush1.xpose.msra.mxu0 0.0
    %651 = vmatprep.subr.mxu0 0.0
    %652 = vmatpush1.xpose.msra.mxu0 0.0
    %653 = vmatprep.subr.mxu0 0.0
    %654 = vmatpush1.xpose.msra.mxu0 0.0
    %655 = vmatprep.subr.mxu0 0.0
    %656 = vmatpush1.xpose.msra.mxu0 0.0
    %657 = vmatprep.subr.mxu0 0.0
    %658 = vmatpush1.xpose.msra.mxu0 0.0
    %659 = vmatprep.subr.mxu0 0.0
    %660 = vmatpush1.xpose.msra.mxu0 0.0
    %661 = vmatprep.subr.mxu0 0.0
    %662 = vmatpush1.xpose.msra.mxu0 0.0
    %663 = vmatprep.subr.mxu0 0.0
    %664 = vmatpush1.xpose.msra.mxu0 0.0
    %665 = vmatprep.subr.mxu0 0.0
    %666 = vmatpush1.xpose.msra.mxu0 0.0
    %667 = vmatprep.subr.mxu0 0.0
    %668 = vmatpush1.xpose.msra.mxu0 0.0
    %669 = vmatprep.subr.mxu0 0.0
    %670 = vmatpush1.xpose.msra.mxu0 0.0
    %671 = vmatprep.subr.mxu0 0.0
    %672 = vmatpush1.xpose.msra.mxu0 0.0
    %673 = vmatprep.subr.mxu0 0.0
    %674 = vmatpush1.xpose.msra.mxu0 %v466
    %675 = vmatprep.subr.mxu0 0.0
    %676 = vmatpush2.xpose.msra.mxu0 0.0
    %677 = vmatprep.subr.mxu0 0.0
    %678 = vmatpush2.xpose.msra.mxu0 0.0
    %679 = vmatprep.subr.mxu0 0.0
    %680 = vmatpush2.xpose.msra.mxu0 0.0
    %681 = vmatprep.subr.mxu0 0.0
    %682 = vmatpush2.xpose.msra.mxu0 0.0
    %683 = vmatprep.subr.mxu0 0.0
    %684 = vmatpush2.xpose.msra.mxu0 0.0
    %685 = vmatprep.subr.mxu0 0.0
    %686 = vmatpush2.xpose.msra.mxu0 0.0
    %687 = vmatprep.subr.mxu0 0.0
    %688 = vmatpush2.xpose.msra.mxu0 0.0
    %689 = vmatprep.subr.mxu0 0.0
    %690 = vmatpush2.xpose.msra.mxu0 0.0
    %691 = vmatprep.subr.mxu0 0.0
    %692 = vmatpush2.xpose.msra.mxu0 0.0
    %693 = vmatprep.subr.mxu0 0.0
    %694 = vmatpush2.xpose.msra.mxu0 0.0
    %695 = vmatprep.subr.mxu0 0.0
    %696 = vmatpush2.xpose.msra.mxu0 0.0
    %697 = vmatprep.subr.mxu0 0.0
    %698 = vmatpush2.xpose.msra.mxu0 0.0
    %699 = vmatprep.subr.mxu0 0.0
    %700 = vmatpush2.xpose.msra.mxu0 0.0
    %701 = vmatprep.subr.mxu0 0.0
    %702 = vmatpush2.xpose.msra.mxu0 0.0
    %703 = vmatprep.subr.mxu0 0.0
    %704 = vmatpush2.xpose.msra.mxu0 0.0
    %705 = vmatprep.subr.mxu0 0.0
    %706 = vmatpush2.xpose.msra.mxu0 0.0
    %707 = vmatprep.mubr.f32.mxu0 0.0
    %708 = vmatmul.mubr.f32.gmra.mxu0 %v641
    %v709 = vpop.f32.mrf.mxu0
    %v710 = vadd.f32 0.0, %v709
    %v711 = vpop.f32.mrf.mxu0
    %712 = vdwg.mxu0
    %v713 = vmul.f32 %v637, 0.35355338
    %v714 = vmul.f32 %v710, 0.35355338
    %v715 = vsel %vm540, %v713, -inf
    %716 = vmax.xlane.f32.xlu0 %v715
    %v717 = vpop.xlane.xlu0 %716
    %v718 = vsel %vm540, %v714, -inf
    %719 = vmax.xlane.f32.xlu0 %v718
    %v720 = vpop.xlane.xlu0 %719
    %v721 = vsub.f32 %v713, %v717
    %v722 = vsub.f32 %v714, %v720
    %v723 = vmul.f32 %v721, 1.442695
    %v724 = vpow.pop %v723
    %v725 = vmul.f32 %v722, 1.442695
    %v726 = vpow.pop %v725
    %v727 = vsel %vm540, %v724, 0.0
    %728 = vadd.xlane.f32.xlu0 %v727
    %v729 = vpop.xlane.xlu0 %728
    %v730 = vsel %vm540, %v726, 0.0
    %731 = vadd.xlane.f32.xlu0 %v730
    %v732 = vpop.xlane.xlu0 %731
    %v733 = vrcp.pop %v729
    %v734 = vmul.f32 %v724, %v733
    %v735 = vrcp.pop %v732
    %v736 = vmul.f32 %v726, %v735
    %v737 = vmul.f32 %v368, %v172
    %v738 = vmul.f32 %v373, %v172
    %v740 = vsel %vm540, %v734, 0
    %742 = vmatprep.subr.mxu0 0.0
    %743 = vmatpush1.msra.mxu0 0.0
    %744 = vmatprep.subr.mxu0 0.0
    %745 = vmatpush1.msra.mxu0 0.0
    %746 = vmatprep.subr.mxu0 0.0
    %747 = vmatpush1.msra.mxu0 0.0
    %748 = vmatprep.subr.mxu0 0.0
    %749 = vmatpush1.msra.mxu0 0.0
    %750 = vmatprep.subr.mxu0 0.0
    %751 = vmatpush1.msra.mxu0 0.0
    %752 = vmatprep.subr.mxu0 0.0
    %753 = vmatpush1.msra.mxu0 0.0
    %754 = vmatprep.subr.mxu0 0.0
    %755 = vmatpush1.msra.mxu0 0.0
    %756 = vmatprep.subr.mxu0 0.0
    %757 = vmatpush1.msra.mxu0 0.0
    %758 = vmatprep.subr.mxu0 0.0
    %759 = vmatpush1.msra.mxu0 0.0
    %760 = vmatprep.subr.mxu0 0.0
    %761 = vmatpush1.msra.mxu0 0.0
    %762 = vmatprep.subr.mxu0 0.0
    %763 = vmatpush1.msra.mxu0 0.0
    %764 = vmatprep.subr.mxu0 0.0
    %765 = vmatpush1.msra.mxu0 0.0
    %766 = vmatprep.subr.mxu0 0.0
    %767 = vmatpush1.msra.mxu0 0.0
    %768 = vmatprep.subr.mxu0 0.0
    %769 = vmatpush1.msra.mxu0 0.0
    %770 = vmatprep.subr.mxu0 0.0
    %771 = vmatpush1.msra.mxu0 0.0
    %772 = vmatprep.subr.mxu0 0.0
    %773 = vmatpush1.msra.mxu0 %v737
    %774 = vmatprep.subr.mxu0 0.0
    %775 = vmatpush2.msra.mxu0 0.0
    %776 = vmatprep.subr.mxu0 0.0
    %777 = vmatpush2.msra.mxu0 0.0
    %778 = vmatprep.subr.mxu0 0.0
    %779 = vmatpush2.msra.mxu0 0.0
    %780 = vmatprep.subr.mxu0 0.0
    %781 = vmatpush2.msra.mxu0 0.0
    %782 = vmatprep.subr.mxu0 0.0
    %783 = vmatpush2.msra.mxu0 0.0
    %784 = vmatprep.subr.mxu0 0.0
    %785 = vmatpush2.msra.mxu0 0.0
    %786 = vmatprep.subr.mxu0 0.0
    %787 = vmatpush2.msra.mxu0 0.0
    %788 = vmatprep.subr.mxu0 0.0
    %789 = vmatpush2.msra.mxu0 0.0
    %790 = vmatprep.subr.mxu0 0.0
    %791 = vmatpush2.msra.mxu0 0.0
    %792 = vmatprep.subr.mxu0 0.0
    %793 = vmatpush2.msra.mxu0 0.0
    %794 = vmatprep.subr.mxu0 0.0
    %795 = vmatpush2.msra.mxu0 0.0
    %796 = vmatprep.subr.mxu0 0.0
    %797 = vmatpush2.msra.mxu0 0.0
    %798 = vmatprep.subr.mxu0 0.0
    %799 = vmatpush2.msra.mxu0 0.0
    %800 = vmatprep.subr.mxu0 0.0
    %801 = vmatpush2.msra.mxu0 0.0
    %802 = vmatprep.subr.mxu0 0.0
    %803 = vmatpush2.msra.mxu0 0.0
    %804 = vmatprep.subr.mxu0 0.0
    %805 = vmatpush2.msra.mxu0 0.0
    %806 = vmatprep.mubr.f32.mxu0 0.0
    %807 = vmatmul.mubr.f32.gmra.mxu0 %v740
    %v808 = vpop.f32.mrf.mxu0
    %v809 = vadd.f32 0.0, %v808
    %v810 = vpop.f32.mrf.mxu0
    %811 = vdwg.mxu0
    %v813 = vsel %vm540, %v736, 0
    %815 = vmatprep.subr.mxu0 0.0
    %816 = vmatpush1.msra.mxu0 0.0
    %817 = vmatprep.subr.mxu0 0.0
    %818 = vmatpush1.msra.mxu0 0.0
    %819 = vmatprep.subr.mxu0 0.0
    %820 = vmatpush1.msra.mxu0 0.0
    %821 = vmatprep.subr.mxu0 0.0
    %822 = vmatpush1.msra.mxu0 0.0
    %823 = vmatprep.subr.mxu0 0.0
    %824 = vmatpush1.msra.mxu0 0.0
    %825 = vmatprep.subr.mxu0 0.0
    %826 = vmatpush1.msra.mxu0 0.0
    %827 = vmatprep.subr.mxu0 0.0
    %828 = vmatpush1.msra.mxu0 0.0
    %829 = vmatprep.subr.mxu0 0.0
    %830 = vmatpush1.msra.mxu0 0.0
    %831 = vmatprep.subr.mxu0 0.0
    %832 = vmatpush1.msra.mxu0 0.0
    %833 = vmatprep.subr.mxu0 0.0
    %834 = vmatpush1.msra.mxu0 0.0
    %835 = vmatprep.subr.mxu0 0.0
    %836 = vmatpush1.msra.mxu0 0.0
    %837 = vmatprep.subr.mxu0 0.0
    %838 = vmatpush1.msra.mxu0 0.0
    %839 = vmatprep.subr.mxu0 0.0
    %840 = vmatpush1.msra.mxu0 0.0
    %841 = vmatprep.subr.mxu0 0.0
    %842 = vmatpush1.msra.mxu0 0.0
    %843 = vmatprep.subr.mxu0 0.0
    %844 = vmatpush1.msra.mxu0 0.0
    %845 = vmatprep.subr.mxu0 0.0
    %846 = vmatpush1.msra.mxu0 %v738
    %847 = vmatprep.subr.mxu0 0.0
    %848 = vmatpush2.msra.mxu0 0.0
    %849 = vmatprep.subr.mxu0 0.0
    %850 = vmatpush2.msra.mxu0 0.0
    %851 = vmatprep.subr.mxu0 0.0
    %852 = vmatpush2.msra.mxu0 0.0
    %853 = vmatprep.subr.mxu0 0.0
    %854 = vmatpush2.msra.mxu0 0.0
    %855 = vmatprep.subr.mxu0 0.0
    %856 = vmatpush2.msra.mxu0 0.0
    %857 = vmatprep.subr.mxu0 0.0
    %858 = vmatpush2.msra.mxu0 0.0
    %859 = vmatprep.subr.mxu0 0.0
    %860 = vmatpush2.msra.mxu0 0.0
    %861 = vmatprep.subr.mxu0 0.0
    %862 = vmatpush2.msra.mxu0 0.0
    %863 = vmatprep.subr.mxu0 0.0
    %864 = vmatpush2.msra.mxu0 0.0
    %865 = vmatprep.subr.mxu0 0.0
    %866 = vmatpush2.msra.mxu0 0.0
    %867 = vmatprep.subr.mxu0 0.0
    %868 = vmatpush2.msra.mxu0 0.0
    %869 = vmatprep.subr.mxu0 0.0
    %870 = vmatpush2.msra.mxu0 0.0
    %871 = vmatprep.subr.mxu0 0.0
    %872 = vmatpush2.msra.mxu0 0.0
    %873 = vmatprep.subr.mxu0 0.0
    %874 = vmatpush2.msra.mxu0 0.0
    %875 = vmatprep.subr.mxu0 0.0
    %876 = vmatpush2.msra.mxu0 0.0
    %877 = vmatprep.subr.mxu0 0.0
    %878 = vmatpush2.msra.mxu0 0.0
    %879 = vmatprep.mubr.f32.mxu0 0.0
    %880 = vmatmul.mubr.f32.gmra.mxu0 %v813
    %v881 = vpop.f32.mrf.mxu0
    %v882 = vadd.f32 0.0, %v881
    %v883 = vpop.f32.mrf.mxu0
    %884 = vdwg.mxu0
    %v886 = vsel %vm540, %v560, 0
    %888 = vmatprep.subr.mxu0 0.0
    %889 = vmatpush1.msra.mxu0 0.0
    %890 = vmatprep.subr.mxu0 0.0
    %891 = vmatpush1.msra.mxu0 0.0
    %892 = vmatprep.subr.mxu0 0.0
    %893 = vmatpush1.msra.mxu0 0.0
    %894 = vmatprep.subr.mxu0 0.0
    %895 = vmatpush1.msra.mxu0 0.0
    %896 = vmatprep.subr.mxu0 0.0
    %897 = vmatpush1.msra.mxu0 0.0
    %898 = vmatprep.subr.mxu0 0.0
    %899 = vmatpush1.msra.mxu0 0.0
    %900 = vmatprep.subr.mxu0 0.0
    %901 = vmatpush1.msra.mxu0 0.0
    %902 = vmatprep.subr.mxu0 0.0
    %903 = vmatpush1.msra.mxu0 0.0
    %904 = vmatprep.subr.mxu0 0.0
    %905 = vmatpush1.msra.mxu0 0.0
    %906 = vmatprep.subr.mxu0 0.0
    %907 = vmatpush1.msra.mxu0 0.0
    %908 = vmatprep.subr.mxu0 0.0
    %909 = vmatpush1.msra.mxu0 0.0
    %910 = vmatprep.subr.mxu0 0.0
    %911 = vmatpush1.msra.mxu0 0.0
    %912 = vmatprep.subr.mxu0 0.0
    %913 = vmatpush1.msra.mxu0 0.0
    %914 = vmatprep.subr.mxu0 0.0
    %915 = vmatpush1.msra.mxu0 0.0
    %916 = vmatprep.subr.mxu0 0.0
    %917 = vmatpush1.msra.mxu0 0.0
    %918 = vmatprep.subr.mxu0 0.0
    %919 = vmatpush1.msra.mxu0 %v563
    %920 = vmatprep.subr.mxu0 0.0
    %921 = vmatpush2.msra.mxu0 0.0
    %922 = vmatprep.subr.mxu0 0.0
    %923 = vmatpush2.msra.mxu0 0.0
    %924 = vmatprep.subr.mxu0 0.0
    %925 = vmatpush2.msra.mxu0 0.0
    %926 = vmatprep.subr.mxu0 0.0
    %927 = vmatpush2.msra.mxu0 0.0
    %928 = vmatprep.subr.mxu0 0.0
    %929 = vmatpush2.msra.mxu0 0.0
    %930 = vmatprep.subr.mxu0 0.0
    %931 = vmatpush2.msra.mxu0 0.0
    %932 = vmatprep.subr.mxu0 0.0
    %933 = vmatpush2.msra.mxu0 0.0
    %934 = vmatprep.subr.mxu0 0.0
    %935 = vmatpush2.msra.mxu0 0.0
    %936 = vmatprep.subr.mxu0 0.0
    %937 = vmatpush2.msra.mxu0 0.0
    %938 = vmatprep.subr.mxu0 0.0
    %939 = vmatpush2.msra.mxu0 0.0
    %940 = vmatprep.subr.mxu0 0.0
    %941 = vmatpush2.msra.mxu0 0.0
    %942 = vmatprep.subr.mxu0 0.0
    %943 = vmatpush2.msra.mxu0 0.0
    %944 = vmatprep.subr.mxu0 0.0
    %945 = vmatpush2.msra.mxu0 0.0
    %946 = vmatprep.subr.mxu0 0.0
    %947 = vmatpush2.msra.mxu0 0.0
    %948 = vmatprep.subr.mxu0 0.0
    %949 = vmatpush2.msra.mxu0 0.0
    %950 = vmatprep.subr.mxu0 0.0
    %951 = vmatpush2.msra.mxu0 0.0
    %952 = vmatprep.mubr.f32.mxu0 0.0
    %953 = vmatmul.mubr.f32.gmra.mxu0 %v886
    %v954 = vpop.f32.mrf.mxu0
    %v955 = vadd.f32 %v809, %v954
    %v956 = vpop.f32.mrf.mxu0
    %957 = vdwg.mxu0
    %v959 = vsel %vm540, %v562, 0
    %961 = vmatprep.subr.mxu0 0.0
    %962 = vmatpush1.msra.mxu0 0.0
    %963 = vmatprep.subr.mxu0 0.0
    %964 = vmatpush1.msra.mxu0 0.0
    %965 = vmatprep.subr.mxu0 0.0
    %966 = vmatpush1.msra.mxu0 0.0
    %967 = vmatprep.subr.mxu0 0.0
    %968 = vmatpush1.msra.mxu0 0.0
    %969 = vmatprep.subr.mxu0 0.0
    %970 = vmatpush1.msra.mxu0 0.0
    %971 = vmatprep.subr.mxu0 0.0
    %972 = vmatpush1.msra.mxu0 0.0
    %973 = vmatprep.subr.mxu0 0.0
    %974 = vmatpush1.msra.mxu0 0.0
    %975 = vmatprep.subr.mxu0 0.0
    %976 = vmatpush1.msra.mxu0 0.0
    %977 = vmatprep.subr.mxu0 0.0
    %978 = vmatpush1.msra.mxu0 0.0
    %979 = vmatprep.subr.mxu0 0.0
    %980 = vmatpush1.msra.mxu0 0.0
    %981 = vmatprep.subr.mxu0 0.0
    %982 = vmatpush1.msra.mxu0 0.0
    %983 = vmatprep.subr.mxu0 0.0
    %984 = vmatpush1.msra.mxu0 0.0
    %985 = vmatprep.subr.mxu0 0.0
    %986 = vmatpush1.msra.mxu0 0.0
    %987 = vmatprep.subr.mxu0 0.0
    %988 = vmatpush1.msra.mxu0 0.0
    %989 = vmatprep.subr.mxu0 0.0
    %990 = vmatpush1.msra.mxu0 0.0
    %991 = vmatprep.subr.mxu0 0.0
    %992 = vmatpush1.msra.mxu0 %v564
    %993 = vmatprep.subr.mxu0 0.0
    %994 = vmatpush2.msra.mxu0 0.0
    %995 = vmatprep.subr.mxu0 0.0
    %996 = vmatpush2.msra.mxu0 0.0
    %997 = vmatprep.subr.mxu0 0.0
    %998 = vmatpush2.msra.mxu0 0.0
    %999 = vmatprep.subr.mxu0 0.0
    %1000 = vmatpush2.msra.mxu0 0.0
    %1001 = vmatprep.subr.mxu0 0.0
    %1002 = vmatpush2.msra.mxu0 0.0
    %1003 = vmatprep.subr.mxu0 0.0
    %1004 = vmatpush2.msra.mxu0 0.0
    %1005 = vmatprep.subr.mxu0 0.0
    %1006 = vmatpush2.msra.mxu0 0.0
    %1007 = vmatprep.subr.mxu0 0.0
    %1008 = vmatpush2.msra.mxu0 0.0
    %1009 = vmatprep.subr.mxu0 0.0
    %1010 = vmatpush2.msra.mxu0 0.0
    %1011 = vmatprep.subr.mxu0 0.0
    %1012 = vmatpush2.msra.mxu0 0.0
    %1013 = vmatprep.subr.mxu0 0.0
    %1014 = vmatpush2.msra.mxu0 0.0
    %1015 = vmatprep.subr.mxu0 0.0
    %1016 = vmatpush2.msra.mxu0 0.0
    %1017 = vmatprep.subr.mxu0 0.0
    %1018 = vmatpush2.msra.mxu0 0.0
    %1019 = vmatprep.subr.mxu0 0.0
    %1020 = vmatpush2.msra.mxu0 0.0
    %1021 = vmatprep.subr.mxu0 0.0
    %1022 = vmatpush2.msra.mxu0 0.0
    %1023 = vmatprep.subr.mxu0 0.0
    %1024 = vmatpush2.msra.mxu0 0.0
    %1025 = vmatprep.mubr.f32.mxu0 0.0
    %1026 = vmatmul.mubr.f32.gmra.mxu0 %v959
    %v1027 = vpop.f32.mrf.mxu0
    %v1028 = vadd.f32 %v882, %v1027
    %v1029 = vpop.f32.mrf.mxu0
    %1030 = vdwg.mxu0
    %v1031 = vmul.f32 %v275, %v177
    %v1032 = vmul.f32 %v276, %v177
    %v1034 = vsel %vm189, %v1031, 0
    %1036 = vmatprep.subr.mxu0 0.0
    %1037 = vmatpush1.xpose.msra.mxu0 0.0
    %1038 = vmatprep.subr.mxu0 0.0
    %1039 = vmatpush1.xpose.msra.mxu0 0.0
    %1040 = vmatprep.subr.mxu0 0.0
    %1041 = vmatpush1.xpose.msra.mxu0 0.0
    %1042 = vmatprep.subr.mxu0 0.0
    %1043 = vmatpush1.xpose.msra.mxu0 0.0
    %1044 = vmatprep.subr.mxu0 0.0
    %1045 = vmatpush1.xpose.msra.mxu0 0.0
    %1046 = vmatprep.subr.mxu0 0.0
    %1047 = vmatpush1.xpose.msra.mxu0 0.0
    %1048 = vmatprep.subr.mxu0 0.0
    %1049 = vmatpush1.xpose.msra.mxu0 0.0
    %1050 = vmatprep.subr.mxu0 0.0
    %1051 = vmatpush1.xpose.msra.mxu0 0.0
    %1052 = vmatprep.subr.mxu0 0.0
    %1053 = vmatpush1.xpose.msra.mxu0 0.0
    %1054 = vmatprep.subr.mxu0 0.0
    %1055 = vmatpush1.xpose.msra.mxu0 0.0
    %1056 = vmatprep.subr.mxu0 0.0
    %1057 = vmatpush1.xpose.msra.mxu0 0.0
    %1058 = vmatprep.subr.mxu0 0.0
    %1059 = vmatpush1.xpose.msra.mxu0 0.0
    %1060 = vmatprep.subr.mxu0 0.0
    %1061 = vmatpush1.xpose.msra.mxu0 0.0
    %1062 = vmatprep.subr.mxu0 0.0
    %1063 = vmatpush1.xpose.msra.mxu0 0.0
    %1064 = vmatprep.subr.mxu0 0.0
    %1065 = vmatpush1.xpose.msra.mxu0 0.0
    %1066 = vmatprep.subr.mxu0 0.0
    %1067 = vmatpush1.xpose.msra.mxu0 %v388
    %1068 = vmatprep.subr.mxu0 0.0
    %1069 = vmatpush2.xpose.msra.mxu0 0.0
    %1070 = vmatprep.subr.mxu0 0.0
    %1071 = vmatpush2.xpose.msra.mxu0 0.0
    %1072 = vmatprep.subr.mxu0 0.0
    %1073 = vmatpush2.xpose.msra.mxu0 0.0
    %1074 = vmatprep.subr.mxu0 0.0
    %1075 = vmatpush2.xpose.msra.mxu0 0.0
    %1076 = vmatprep.subr.mxu0 0.0
    %1077 = vmatpush2.xpose.msra.mxu0 0.0
    %1078 = vmatprep.subr.mxu0 0.0
    %1079 = vmatpush2.xpose.msra.mxu0 0.0
    %1080 = vmatprep.subr.mxu0 0.0
    %1081 = vmatpush2.xpose.msra.mxu0 0.0
    %1082 = vmatprep.subr.mxu0 0.0
    %1083 = vmatpush2.xpose.msra.mxu0 0.0
    %1084 = vmatprep.subr.mxu0 0.0
    %1085 = vmatpush2.xpose.msra.mxu0 0.0
    %1086 = vmatprep.subr.mxu0 0.0
    %1087 = vmatpush2.xpose.msra.mxu0 0.0
    %1088 = vmatprep.subr.mxu0 0.0
    %1089 = vmatpush2.xpose.msra.mxu0 0.0
    %1090 = vmatprep.subr.mxu0 0.0
    %1091 = vmatpush2.xpose.msra.mxu0 0.0
    %1092 = vmatprep.subr.mxu0 0.0
    %1093 = vmatpush2.xpose.msra.mxu0 0.0
    %1094 = vmatprep.subr.mxu0 0.0
    %1095 = vmatpush2.xpose.msra.mxu0 0.0
    %1096 = vmatprep.subr.mxu0 0.0
    %1097 = vmatpush2.xpose.msra.mxu0 0.0
    %1098 = vmatprep.subr.mxu0 0.0
    %1099 = vmatpush2.xpose.msra.mxu0 0.0
    %1100 = vmatprep.mubr.f32.mxu0 0.0
    %1101 = vmatmul.mubr.f32.gmra.mxu0 %v1034
    %v1102 = vpop.f32.mrf.mxu0
    %v1103 = vadd.f32 0.0, %v1102
    %v1104 = vpop.f32.mrf.mxu0
    %1105 = vdwg.mxu0
    %v1107 = vsel %vm189, %v1032, 0
    %1109 = vmatprep.subr.mxu0 0.0
    %1110 = vmatpush1.xpose.msra.mxu0 0.0
    %1111 = vmatprep.subr.mxu0 0.0
    %1112 = vmatpush1.xpose.msra.mxu0 0.0
    %1113 = vmatprep.subr.mxu0 0.0
    %1114 = vmatpush1.xpose.msra.mxu0 0.0
    %1115 = vmatprep.subr.mxu0 0.0
    %1116 = vmatpush1.xpose.msra.mxu0 0.0
    %1117 = vmatprep.subr.mxu0 0.0
    %1118 = vmatpush1.xpose.msra.mxu0 0.0
    %1119 = vmatprep.subr.mxu0 0.0
    %1120 = vmatpush1.xpose.msra.mxu0 0.0
    %1121 = vmatprep.subr.mxu0 0.0
    %1122 = vmatpush1.xpose.msra.mxu0 0.0
    %1123 = vmatprep.subr.mxu0 0.0
    %1124 = vmatpush1.xpose.msra.mxu0 0.0
    %1125 = vmatprep.subr.mxu0 0.0
    %1126 = vmatpush1.xpose.msra.mxu0 0.0
    %1127 = vmatprep.subr.mxu0 0.0
    %1128 = vmatpush1.xpose.msra.mxu0 0.0
    %1129 = vmatprep.subr.mxu0 0.0
    %1130 = vmatpush1.xpose.msra.mxu0 0.0
    %1131 = vmatprep.subr.mxu0 0.0
    %1132 = vmatpush1.xpose.msra.mxu0 0.0
    %1133 = vmatprep.subr.mxu0 0.0
    %1134 = vmatpush1.xpose.msra.mxu0 0.0
    %1135 = vmatprep.subr.mxu0 0.0
    %1136 = vmatpush1.xpose.msra.mxu0 0.0
    %1137 = vmatprep.subr.mxu0 0.0
    %1138 = vmatpush1.xpose.msra.mxu0 0.0
    %1139 = vmatprep.subr.mxu0 0.0
    %1140 = vmatpush1.xpose.msra.mxu0 %v466
    %1141 = vmatprep.subr.mxu0 0.0
    %1142 = vmatpush2.xpose.msra.mxu0 0.0
    %1143 = vmatprep.subr.mxu0 0.0
    %1144 = vmatpush2.xpose.msra.mxu0 0.0
    %1145 = vmatprep.subr.mxu0 0.0
    %1146 = vmatpush2.xpose.msra.mxu0 0.0
    %1147 = vmatprep.subr.mxu0 0.0
    %1148 = vmatpush2.xpose.msra.mxu0 0.0
    %1149 = vmatprep.subr.mxu0 0.0
    %1150 = vmatpush2.xpose.msra.mxu0 0.0
    %1151 = vmatprep.subr.mxu0 0.0
    %1152 = vmatpush2.xpose.msra.mxu0 0.0
    %1153 = vmatprep.subr.mxu0 0.0
    %1154 = vmatpush2.xpose.msra.mxu0 0.0
    %1155 = vmatprep.subr.mxu0 0.0
    %1156 = vmatpush2.xpose.msra.mxu0 0.0
    %1157 = vmatprep.subr.mxu0 0.0
    %1158 = vmatpush2.xpose.msra.mxu0 0.0
    %1159 = vmatprep.subr.mxu0 0.0
    %1160 = vmatpush2.xpose.msra.mxu0 0.0
    %1161 = vmatprep.subr.mxu0 0.0
    %1162 = vmatpush2.xpose.msra.mxu0 0.0
    %1163 = vmatprep.subr.mxu0 0.0
    %1164 = vmatpush2.xpose.msra.mxu0 0.0
    %1165 = vmatprep.subr.mxu0 0.0
    %1166 = vmatpush2.xpose.msra.mxu0 0.0
    %1167 = vmatprep.subr.mxu0 0.0
    %1168 = vmatpush2.xpose.msra.mxu0 0.0
    %1169 = vmatprep.subr.mxu0 0.0
    %1170 = vmatpush2.xpose.msra.mxu0 0.0
    %1171 = vmatprep.subr.mxu0 0.0
    %1172 = vmatpush2.xpose.msra.mxu0 0.0
    %1173 = vmatprep.mubr.f32.mxu0 0.0
    %1174 = vmatmul.mubr.f32.gmra.mxu0 %v1107
    %v1175 = vpop.f32.mrf.mxu0
    %v1176 = vadd.f32 0.0, %v1175
    %v1177 = vpop.f32.mrf.mxu0
    %1178 = vdwg.mxu0
    %v1179 = vmul.f32 %v1103, 0.35355338
    %v1180 = vmul.f32 %v1176, 0.35355338
    %v1181 = vsel %vm540, %v1179, -inf
    %1182 = vmax.xlane.f32.xlu0 %v1181
    %v1183 = vpop.xlane.xlu0 %1182
    %v1184 = vsel %vm540, %v1180, -inf
    %1185 = vmax.xlane.f32.xlu0 %v1184
    %v1186 = vpop.xlane.xlu0 %1185
    %v1187 = vsub.f32 %v1179, %v1183
    %v1188 = vsub.f32 %v1180, %v1186
    %v1189 = vmul.f32 %v1187, 1.442695
    %v1190 = vpow.pop %v1189
    %v1191 = vmul.f32 %v1188, 1.442695
    %v1192 = vpow.pop %v1191
    %v1193 = vsel %vm540, %v1190, 0.0
    %1194 = vadd.xlane.f32.xlu0 %v1193
    %v1195 = vpop.xlane.xlu0 %1194
    %v1196 = vsel %vm540, %v1192, 0.0
    %1197 = vadd.xlane.f32.xlu0 %v1196
    %v1198 = vpop.xlane.xlu0 %1197
    %v1199 = vrcp.pop %v1195
    %v1200 = vmul.f32 %v1190, %v1199
    %v1201 = vrcp.pop %v1198
    %v1202 = vmul.f32 %v1192, %v1201
    %v1203 = vmul.f32 %v368, %v177
    %v1204 = vmul.f32 %v373, %v177
    %v1206 = vsel %vm540, %v1200, 0
    %1208 = vmatprep.subr.mxu0 0.0
    %1209 = vmatpush1.msra.mxu0 0.0
    %1210 = vmatprep.subr.mxu0 0.0
    %1211 = vmatpush1.msra.mxu0 0.0
    %1212 = vmatprep.subr.mxu0 0.0
    %1213 = vmatpush1.msra.mxu0 0.0
    %1214 = vmatprep.subr.mxu0 0.0
    %1215 = vmatpush1.msra.mxu0 0.0
    %1216 = vmatprep.subr.mxu0 0.0
    %1217 = vmatpush1.msra.mxu0 0.0
    %1218 = vmatprep.subr.mxu0 0.0
    %1219 = vmatpush1.msra.mxu0 0.0
    %1220 = vmatprep.subr.mxu0 0.0
    %1221 = vmatpush1.msra.mxu0 0.0
    %1222 = vmatprep.subr.mxu0 0.0
    %1223 = vmatpush1.msra.mxu0 0.0
    %1224 = vmatprep.subr.mxu0 0.0
    %1225 = vmatpush1.msra.mxu0 0.0
    %1226 = vmatprep.subr.mxu0 0.0
    %1227 = vmatpush1.msra.mxu0 0.0
    %1228 = vmatprep.subr.mxu0 0.0
    %1229 = vmatpush1.msra.mxu0 0.0
    %1230 = vmatprep.subr.mxu0 0.0
    %1231 = vmatpush1.msra.mxu0 0.0
    %1232 = vmatprep.subr.mxu0 0.0
    %1233 = vmatpush1.msra.mxu0 0.0
    %1234 = vmatprep.subr.mxu0 0.0
    %1235 = vmatpush1.msra.mxu0 0.0
    %1236 = vmatprep.subr.mxu0 0.0
    %1237 = vmatpush1.msra.mxu0 0.0
    %1238 = vmatprep.subr.mxu0 0.0
    %1239 = vmatpush1.msra.mxu0 %v1203
    %1240 = vmatprep.subr.mxu0 0.0
    %1241 = vmatpush2.msra.mxu0 0.0
    %1242 = vmatprep.subr.mxu0 0.0
    %1243 = vmatpush2.msra.mxu0 0.0
    %1244 = vmatprep.subr.mxu0 0.0
    %1245 = vmatpush2.msra.mxu0 0.0
    %1246 = vmatprep.subr.mxu0 0.0
    %1247 = vmatpush2.msra.mxu0 0.0
    %1248 = vmatprep.subr.mxu0 0.0
    %1249 = vmatpush2.msra.mxu0 0.0
    %1250 = vmatprep.subr.mxu0 0.0
    %1251 = vmatpush2.msra.mxu0 0.0
    %1252 = vmatprep.subr.mxu0 0.0
    %1253 = vmatpush2.msra.mxu0 0.0
    %1254 = vmatprep.subr.mxu0 0.0
    %1255 = vmatpush2.msra.mxu0 0.0
    %1256 = vmatprep.subr.mxu0 0.0
    %1257 = vmatpush2.msra.mxu0 0.0
    %1258 = vmatprep.subr.mxu0 0.0
    %1259 = vmatpush2.msra.mxu0 0.0
    %1260 = vmatprep.subr.mxu0 0.0
    %1261 = vmatpush2.msra.mxu0 0.0
    %1262 = vmatprep.subr.mxu0 0.0
    %1263 = vmatpush2.msra.mxu0 0.0
    %1264 = vmatprep.subr.mxu0 0.0
    %1265 = vmatpush2.msra.mxu0 0.0
    %1266 = vmatprep.subr.mxu0 0.0
    %1267 = vmatpush2.msra.mxu0 0.0
    %1268 = vmatprep.subr.mxu0 0.0
    %1269 = vmatpush2.msra.mxu0 0.0
    %1270 = vmatprep.subr.mxu0 0.0
    %1271 = vmatpush2.msra.mxu0 0.0
    %1272 = vmatprep.mubr.f32.mxu0 0.0
    %1273 = vmatmul.mubr.f32.gmra.mxu0 %v1206
    %v1274 = vpop.f32.mrf.mxu0
    %v1275 = vadd.f32 0.0, %v1274
    %v1276 = vpop.f32.mrf.mxu0
    %1277 = vdwg.mxu0
    %v1279 = vsel %vm540, %v1202, 0
    %1281 = vmatprep.subr.mxu0 0.0
    %1282 = vmatpush1.msra.mxu0 0.0
    %1283 = vmatprep.subr.mxu0 0.0
    %1284 = vmatpush1.msra.mxu0 0.0
    %1285 = vmatprep.subr.mxu0 0.0
    %1286 = vmatpush1.msra.mxu0 0.0
    %1287 = vmatprep.subr.mxu0 0.0
    %1288 = vmatpush1.msra.mxu0 0.0
    %1289 = vmatprep.subr.mxu0 0.0
    %1290 = vmatpush1.msra.mxu0 0.0
    %1291 = vmatprep.subr.mxu0 0.0
    %1292 = vmatpush1.msra.mxu0 0.0
    %1293 = vmatprep.subr.mxu0 0.0
    %1294 = vmatpush1.msra.mxu0 0.0
    %1295 = vmatprep.subr.mxu0 0.0
    %1296 = vmatpush1.msra.mxu0 0.0
    %1297 = vmatprep.subr.mxu0 0.0
    %1298 = vmatpush1.msra.mxu0 0.0
    %1299 = vmatprep.subr.mxu0 0.0
    %1300 = vmatpush1.msra.mxu0 0.0
    %1301 = vmatprep.subr.mxu0 0.0
    %1302 = vmatpush1.msra.mxu0 0.0
    %1303 = vmatprep.subr.mxu0 0.0
    %1304 = vmatpush1.msra.mxu0 0.0
    %1305 = vmatprep.subr.mxu0 0.0
    %1306 = vmatpush1.msra.mxu0 0.0
    %1307 = vmatprep.subr.mxu0 0.0
    %1308 = vmatpush1.msra.mxu0 0.0
    %1309 = vmatprep.subr.mxu0 0.0
    %1310 = vmatpush1.msra.mxu0 0.0
    %1311 = vmatprep.subr.mxu0 0.0
    %1312 = vmatpush1.msra.mxu0 %v1204
    %1313 = vmatprep.subr.mxu0 0.0
    %1314 = vmatpush2.msra.mxu0 0.0
    %1315 = vmatprep.subr.mxu0 0.0
    %1316 = vmatpush2.msra.mxu0 0.0
    %1317 = vmatprep.subr.mxu0 0.0
    %1318 = vmatpush2.msra.mxu0 0.0
    %1319 = vmatprep.subr.mxu0 0.0
    %1320 = vmatpush2.msra.mxu0 0.0
    %1321 = vmatprep.subr.mxu0 0.0
    %1322 = vmatpush2.msra.mxu0 0.0
    %1323 = vmatprep.subr.mxu0 0.0
    %1324 = vmatpush2.msra.mxu0 0.0
    %1325 = vmatprep.subr.mxu0 0.0
    %1326 = vmatpush2.msra.mxu0 0.0
    %1327 = vmatprep.subr.mxu0 0.0
    %1328 = vmatpush2.msra.mxu0 0.0
    %1329 = vmatprep.subr.mxu0 0.0
    %1330 = vmatpush2.msra.mxu0 0.0
    %1331 = vmatprep.subr.mxu0 0.0
    %1332 = vmatpush2.msra.mxu0 0.0
    %1333 = vmatprep.subr.mxu0 0.0
    %1334 = vmatpush2.msra.mxu0 0.0
    %1335 = vmatprep.subr.mxu0 0.0
    %1336 = vmatpush2.msra.mxu0 0.0
    %1337 = vmatprep.subr.mxu0 0.0
    %1338 = vmatpush2.msra.mxu0 0.0
    %1339 = vmatprep.subr.mxu0 0.0
    %1340 = vmatpush2.msra.mxu0 0.0
    %1341 = vmatprep.subr.mxu0 0.0
    %1342 = vmatpush2.msra.mxu0 0.0
    %1343 = vmatprep.subr.mxu0 0.0
    %1344 = vmatpush2.msra.mxu0 0.0
    %1345 = vmatprep.mubr.f32.mxu0 0.0
    %1346 = vmatmul.mubr.f32.gmra.mxu0 %v1279
    %v1347 = vpop.f32.mrf.mxu0
    %v1348 = vadd.f32 0.0, %v1347
    %v1349 = vpop.f32.mrf.mxu0
    %1350 = vdwg.mxu0
    %v1351 = vadd.f32 %v955, %v1275
    %v1352 = vadd.f32 %v1028, %v1348
    %v1353 = vmul.f32 %v275, %v182
    %v1354 = vmul.f32 %v276, %v182
    %v1356 = vsel %vm189, %v1353, 0
    %1358 = vmatprep.subr.mxu0 0.0
    %1359 = vmatpush1.xpose.msra.mxu0 0.0
    %1360 = vmatprep.subr.mxu0 0.0
    %1361 = vmatpush1.xpose.msra.mxu0 0.0
    %1362 = vmatprep.subr.mxu0 0.0
    %1363 = vmatpush1.xpose.msra.mxu0 0.0
    %1364 = vmatprep.subr.mxu0 0.0
    %1365 = vmatpush1.xpose.msra.mxu0 0.0
    %1366 = vmatprep.subr.mxu0 0.0
    %1367 = vmatpush1.xpose.msra.mxu0 0.0
    %1368 = vmatprep.subr.mxu0 0.0
    %1369 = vmatpush1.xpose.msra.mxu0 0.0
    %1370 = vmatprep.subr.mxu0 0.0
    %1371 = vmatpush1.xpose.msra.mxu0 0.0
    %1372 = vmatprep.subr.mxu0 0.0
    %1373 = vmatpush1.xpose.msra.mxu0 0.0
    %1374 = vmatprep.subr.mxu0 0.0
    %1375 = vmatpush1.xpose.msra.mxu0 0.0
    %1376 = vmatprep.subr.mxu0 0.0
    %1377 = vmatpush1.xpose.msra.mxu0 0.0
    %1378 = vmatprep.subr.mxu0 0.0
    %1379 = vmatpush1.xpose.msra.mxu0 0.0
    %1380 = vmatprep.subr.mxu0 0.0
    %1381 = vmatpush1.xpose.msra.mxu0 0.0
    %1382 = vmatprep.subr.mxu0 0.0
    %1383 = vmatpush1.xpose.msra.mxu0 0.0
    %1384 = vmatprep.subr.mxu0 0.0
    %1385 = vmatpush1.xpose.msra.mxu0 0.0
    %1386 = vmatprep.subr.mxu0 0.0
    %1387 = vmatpush1.xpose.msra.mxu0 0.0
    %1388 = vmatprep.subr.mxu0 0.0
    %1389 = vmatpush1.xpose.msra.mxu0 %v388
    %1390 = vmatprep.subr.mxu0 0.0
    %1391 = vmatpush2.xpose.msra.mxu0 0.0
    %1392 = vmatprep.subr.mxu0 0.0
    %1393 = vmatpush2.xpose.msra.mxu0 0.0
    %1394 = vmatprep.subr.mxu0 0.0
    %1395 = vmatpush2.xpose.msra.mxu0 0.0
    %1396 = vmatprep.subr.mxu0 0.0
    %1397 = vmatpush2.xpose.msra.mxu0 0.0
    %1398 = vmatprep.subr.mxu0 0.0
    %1399 = vmatpush2.xpose.msra.mxu0 0.0
    %1400 = vmatprep.subr.mxu0 0.0
    %1401 = vmatpush2.xpose.msra.mxu0 0.0
    %1402 = vmatprep.subr.mxu0 0.0
    %1403 = vmatpush2.xpose.msra.mxu0 0.0
    %1404 = vmatprep.subr.mxu0 0.0
    %1405 = vmatpush2.xpose.msra.mxu0 0.0
    %1406 = vmatprep.subr.mxu0 0.0
    %1407 = vmatpush2.xpose.msra.mxu0 0.0
    %1408 = vmatprep.subr.mxu0 0.0
    %1409 = vmatpush2.xpose.msra.mxu0 0.0
    %1410 = vmatprep.subr.mxu0 0.0
    %1411 = vmatpush2.xpose.msra.mxu0 0.0
    %1412 = vmatprep.subr.mxu0 0.0
    %1413 = vmatpush2.xpose.msra.mxu0 0.0
    %1414 = vmatprep.subr.mxu0 0.0
    %1415 = vmatpush2.xpose.msra.mxu0 0.0
    %1416 = vmatprep.subr.mxu0 0.0
    %1417 = vmatpush2.xpose.msra.mxu0 0.0
    %1418 = vmatprep.subr.mxu0 0.0
    %1419 = vmatpush2.xpose.msra.mxu0 0.0
    %1420 = vmatprep.subr.mxu0 0.0
    %1421 = vmatpush2.xpose.msra.mxu0 0.0
    %1422 = vmatprep.mubr.f32.mxu0 0.0
    %1423 = vmatmul.mubr.f32.gmra.mxu0 %v1356
    %v1424 = vpop.f32.mrf.mxu0
    %v1425 = vadd.f32 0.0, %v1424
    %v1426 = vpop.f32.mrf.mxu0
    %1427 = vdwg.mxu0
    %v1429 = vsel %vm189, %v1354, 0
    %1431 = vmatprep.subr.mxu0 0.0
    %1432 = vmatpush1.xpose.msra.mxu0 0.0
    %1433 = vmatprep.subr.mxu0 0.0
    %1434 = vmatpush1.xpose.msra.mxu0 0.0
    %1435 = vmatprep.subr.mxu0 0.0
    %1436 = vmatpush1.xpose.msra.mxu0 0.0
    %1437 = vmatprep.subr.mxu0 0.0
    %1438 = vmatpush1.xpose.msra.mxu0 0.0
    %1439 = vmatprep.subr.mxu0 0.0
    %1440 = vmatpush1.xpose.msra.mxu0 0.0
    %1441 = vmatprep.subr.mxu0 0.0
    %1442 = vmatpush1.xpose.msra.mxu0 0.0
    %1443 = vmatprep.subr.mxu0 0.0
    %1444 = vmatpush1.xpose.msra.mxu0 0.0
    %1445 = vmatprep.subr.mxu0 0.0
    %1446 = vmatpush1.xpose.msra.mxu0 0.0
    %1447 = vmatprep.subr.mxu0 0.0
    %1448 = vmatpush1.xpose.msra.mxu0 0.0
    %1449 = vmatprep.subr.mxu0 0.0
    %1450 = vmatpush1.xpose.msra.mxu0 0.0
    %1451 = vmatprep.subr.mxu0 0.0
    %1452 = vmatpush1.xpose.msra.mxu0 0.0
    %1453 = vmatprep.subr.mxu0 0.0
    %1454 = vmatpush1.xpose.msra.mxu0 0.0
    %1455 = vmatprep.subr.mxu0 0.0
    %1456 = vmatpush1.xpose.msra.mxu0 0.0
    %1457 = vmatprep.subr.mxu0 0.0
    %1458 = vmatpush1.xpose.msra.mxu0 0.0
    %1459 = vmatprep.subr.mxu0 0.0
    %1460 = vmatpush1.xpose.msra.mxu0 0.0
    %1461 = vmatprep.subr.mxu0 0.0
    %1462 = vmatpush1.xpose.msra.mxu0 %v466
    %1463 = vmatprep.subr.mxu0 0.0
    %1464 = vmatpush2.xpose.msra.mxu0 0.0
    %1465 = vmatprep.subr.mxu0 0.0
    %1466 = vmatpush2.xpose.msra.mxu0 0.0
    %1467 = vmatprep.subr.mxu0 0.0
    %1468 = vmatpush2.xpose.msra.mxu0 0.0
    %1469 = vmatprep.subr.mxu0 0.0
    %1470 = vmatpush2.xpose.msra.mxu0 0.0
    %1471 = vmatprep.subr.mxu0 0.0
    %1472 = vmatpush2.xpose.msra.mxu0 0.0
    %1473 = vmatprep.subr.mxu0 0.0
    %1474 = vmatpush2.xpose.msra.mxu0 0.0
    %1475 = vmatprep.subr.mxu0 0.0
    %1476 = vmatpush2.xpose.msra.mxu0 0.0
    %1477 = vmatprep.subr.mxu0 0.0
    %1478 = vmatpush2.xpose.msra.mxu0 0.0
    %1479 = vmatprep.subr.mxu0 0.0
    %1480 = vmatpush2.xpose.msra.mxu0 0.0
    %1481 = vmatprep.subr.mxu0 0.0
    %1482 = vmatpush2.xpose.msra.mxu0 0.0
    %1483 = vmatprep.subr.mxu0 0.0
    %1484 = vmatpush2.xpose.msra.mxu0 0.0
    %1485 = vmatprep.subr.mxu0 0.0
    %1486 = vmatpush2.xpose.msra.mxu0 0.0
    %1487 = vmatprep.subr.mxu0 0.0
    %1488 = vmatpush2.xpose.msra.mxu0 0.0
    %1489 = vmatprep.subr.mxu0 0.0
    %1490 = vmatpush2.xpose.msra.mxu0 0.0
    %1491 = vmatprep.subr.mxu0 0.0
    %1492 = vmatpush2.xpose.msra.mxu0 0.0
    %1493 = vmatprep.subr.mxu0 0.0
    %1494 = vmatpush2.xpose.msra.mxu0 0.0
    %1495 = vmatprep.mubr.f32.mxu0 0.0
    %1496 = vmatmul.mubr.f32.gmra.mxu0 %v1429
    %v1497 = vpop.f32.mrf.mxu0
    %v1498 = vadd.f32 0.0, %v1497
    %v1499 = vpop.f32.mrf.mxu0
    %1500 = vdwg.mxu0
    %v1501 = vmul.f32 %v1425, 0.35355338
    %v1502 = vmul.f32 %v1498, 0.35355338
    %v1503 = vsel %vm540, %v1501, -inf
    %1504 = vmax.xlane.f32.xlu0 %v1503
    %v1505 = vpop.xlane.xlu0 %1504
    %v1506 = vsel %vm540, %v1502, -inf
    %1507 = vmax.xlane.f32.xlu0 %v1506
    %v1508 = vpop.xlane.xlu0 %1507
    %v1509 = vsub.f32 %v1501, %v1505
    %v1510 = vsub.f32 %v1502, %v1508
    %v1511 = vmul.f32 %v1509, 1.442695
    %v1512 = vpow.pop %v1511
    %v1513 = vmul.f32 %v1510, 1.442695
    %v1514 = vpow.pop %v1513
    %v1515 = vsel %vm540, %v1512, 0.0
    %1516 = vadd.xlane.f32.xlu0 %v1515
    %v1517 = vpop.xlane.xlu0 %1516
    %v1518 = vsel %vm540, %v1514, 0.0
    %1519 = vadd.xlane.f32.xlu0 %v1518
    %v1520 = vpop.xlane.xlu0 %1519
    %v1521 = vrcp.pop %v1517
    %v1522 = vmul.f32 %v1512, %v1521
    %v1523 = vrcp.pop %v1520
    %v1524 = vmul.f32 %v1514, %v1523
    %v1525 = vmul.f32 %v368, %v182
    %v1526 = vmul.f32 %v373, %v182
    %v1528 = vsel %vm540, %v1522, 0
    %1530 = vmatprep.subr.mxu0 0.0
    %1531 = vmatpush1.msra.mxu0 0.0
    %1532 = vmatprep.subr.mxu0 0.0
    %1533 = vmatpush1.msra.mxu0 0.0
    %1534 = vmatprep.subr.mxu0 0.0
    %1535 = vmatpush1.msra.mxu0 0.0
    %1536 = vmatprep.subr.mxu0 0.0
    %1537 = vmatpush1.msra.mxu0 0.0
    %1538 = vmatprep.subr.mxu0 0.0
    %1539 = vmatpush1.msra.mxu0 0.0
    %1540 = vmatprep.subr.mxu0 0.0
    %1541 = vmatpush1.msra.mxu0 0.0
    %1542 = vmatprep.subr.mxu0 0.0
    %1543 = vmatpush1.msra.mxu0 0.0
    %1544 = vmatprep.subr.mxu0 0.0
    %1545 = vmatpush1.msra.mxu0 0.0
    %1546 = vmatprep.subr.mxu0 0.0
    %1547 = vmatpush1.msra.mxu0 0.0
    %1548 = vmatprep.subr.mxu0 0.0
    %1549 = vmatpush1.msra.mxu0 0.0
    %1550 = vmatprep.subr.mxu0 0.0
    %1551 = vmatpush1.msra.mxu0 0.0
    %1552 = vmatprep.subr.mxu0 0.0
    %1553 = vmatpush1.msra.mxu0 0.0
    %1554 = vmatprep.subr.mxu0 0.0
    %1555 = vmatpush1.msra.mxu0 0.0
    %1556 = vmatprep.subr.mxu0 0.0
    %1557 = vmatpush1.msra.mxu0 0.0
    %1558 = vmatprep.subr.mxu0 0.0
    %1559 = vmatpush1.msra.mxu0 0.0
    %1560 = vmatprep.subr.mxu0 0.0
    %1561 = vmatpush1.msra.mxu0 %v1525
    %1562 = vmatprep.subr.mxu0 0.0
    %1563 = vmatpush2.msra.mxu0 0.0
    %1564 = vmatprep.subr.mxu0 0.0
    %1565 = vmatpush2.msra.mxu0 0.0
    %1566 = vmatprep.subr.mxu0 0.0
    %1567 = vmatpush2.msra.mxu0 0.0
    %1568 = vmatprep.subr.mxu0 0.0
    %1569 = vmatpush2.msra.mxu0 0.0
    %1570 = vmatprep.subr.mxu0 0.0
    %1571 = vmatpush2.msra.mxu0 0.0
    %1572 = vmatprep.subr.mxu0 0.0
    %1573 = vmatpush2.msra.mxu0 0.0
    %1574 = vmatprep.subr.mxu0 0.0
    %1575 = vmatpush2.msra.mxu0 0.0
    %1576 = vmatprep.subr.mxu0 0.0
    %1577 = vmatpush2.msra.mxu0 0.0
    %1578 = vmatprep.subr.mxu0 0.0
    %1579 = vmatpush2.msra.mxu0 0.0
    %1580 = vmatprep.subr.mxu0 0.0
    %1581 = vmatpush2.msra.mxu0 0.0
    %1582 = vmatprep.subr.mxu0 0.0
    %1583 = vmatpush2.msra.mxu0 0.0
    %1584 = vmatprep.subr.mxu0 0.0
    %1585 = vmatpush2.msra.mxu0 0.0
    %1586 = vmatprep.subr.mxu0 0.0
    %1587 = vmatpush2.msra.mxu0 0.0
    %1588 = vmatprep.subr.mxu0 0.0
    %1589 = vmatpush2.msra.mxu0 0.0
    %1590 = vmatprep.subr.mxu0 0.0
    %1591 = vmatpush2.msra.mxu0 0.0
    %1592 = vmatprep.subr.mxu0 0.0
    %1593 = vmatpush2.msra.mxu0 0.0
    %1594 = vmatprep.mubr.f32.mxu0 0.0
    %1595 = vmatmul.mubr.f32.gmra.mxu0 %v1528
    %v1596 = vpop.f32.mrf.mxu0
    %v1597 = vadd.f32 0.0, %v1596
    %v1598 = vpop.f32.mrf.mxu0
    %1599 = vdwg.mxu0
    %v1601 = vsel %vm540, %v1524, 0
    %1603 = vmatprep.subr.mxu0 0.0
    %1604 = vmatpush1.msra.mxu0 0.0
    %1605 = vmatprep.subr.mxu0 0.0
    %1606 = vmatpush1.msra.mxu0 0.0
    %1607 = vmatprep.subr.mxu0 0.0
    %1608 = vmatpush1.msra.mxu0 0.0
    %1609 = vmatprep.subr.mxu0 0.0
    %1610 = vmatpush1.msra.mxu0 0.0
    %1611 = vmatprep.subr.mxu0 0.0
    %1612 = vmatpush1.msra.mxu0 0.0
    %1613 = vmatprep.subr.mxu0 0.0
    %1614 = vmatpush1.msra.mxu0 0.0
    %1615 = vmatprep.subr.mxu0 0.0
    %1616 = vmatpush1.msra.mxu0 0.0
    %1617 = vmatprep.subr.mxu0 0.0
    %1618 = vmatpush1.msra.mxu0 0.0
    %1619 = vmatprep.subr.mxu0 0.0
    %1620 = vmatpush1.msra.mxu0 0.0
    %1621 = vmatprep.subr.mxu0 0.0
    %1622 = vmatpush1.msra.mxu0 0.0
    %1623 = vmatprep.subr.mxu0 0.0
    %1624 = vmatpush1.msra.mxu0 0.0
    %1625 = vmatprep.subr.mxu0 0.0
    %1626 = vmatpush1.msra.mxu0 0.0
    %1627 = vmatprep.subr.mxu0 0.0
    %1628 = vmatpush1.msra.mxu0 0.0
    %1629 = vmatprep.subr.mxu0 0.0
    %1630 = vmatpush1.msra.mxu0 0.0
    %1631 = vmatprep.subr.mxu0 0.0
    %1632 = vmatpush1.msra.mxu0 0.0
    %1633 = vmatprep.subr.mxu0 0.0
    %1634 = vmatpush1.msra.mxu0 %v1526
    %1635 = vmatprep.subr.mxu0 0.0
    %1636 = vmatpush2.msra.mxu0 0.0
    %1637 = vmatprep.subr.mxu0 0.0
    %1638 = vmatpush2.msra.mxu0 0.0
    %1639 = vmatprep.subr.mxu0 0.0
    %1640 = vmatpush2.msra.mxu0 0.0
    %1641 = vmatprep.subr.mxu0 0.0
    %1642 = vmatpush2.msra.mxu0 0.0
    %1643 = vmatprep.subr.mxu0 0.0
    %1644 = vmatpush2.msra.mxu0 0.0
    %1645 = vmatprep.subr.mxu0 0.0
    %1646 = vmatpush2.msra.mxu0 0.0
    %1647 = vmatprep.subr.mxu0 0.0
    %1648 = vmatpush2.msra.mxu0 0.0
    %1649 = vmatprep.subr.mxu0 0.0
    %1650 = vmatpush2.msra.mxu0 0.0
    %1651 = vmatprep.subr.mxu0 0.0
    %1652 = vmatpush2.msra.mxu0 0.0
    %1653 = vmatprep.subr.mxu0 0.0
    %1654 = vmatpush2.msra.mxu0 0.0
    %1655 = vmatprep.subr.mxu0 0.0
    %1656 = vmatpush2.msra.mxu0 0.0
    %1657 = vmatprep.subr.mxu0 0.0
    %1658 = vmatpush2.msra.mxu0 0.0
    %1659 = vmatprep.subr.mxu0 0.0
    %1660 = vmatpush2.msra.mxu0 0.0
    %1661 = vmatprep.subr.mxu0 0.0
    %1662 = vmatpush2.msra.mxu0 0.0
    %1663 = vmatprep.subr.mxu0 0.0
    %1664 = vmatpush2.msra.mxu0 0.0
    %1665 = vmatprep.subr.mxu0 0.0
    %1666 = vmatpush2.msra.mxu0 0.0
    %1667 = vmatprep.mubr.f32.mxu0 0.0
    %1668 = vmatmul.mubr.f32.gmra.mxu0 %v1601
    %v1669 = vpop.f32.mrf.mxu0
    %v1670 = vadd.f32 0.0, %v1669
    %v1671 = vpop.f32.mrf.mxu0
    %1672 = vdwg.mxu0
    %v1673 = vadd.f32 %v1351, %v1597
    %v1674 = vadd.f32 %v1352, %v1670
    %v1675 = vlaneseq
    %v1676 = vshrl.u32 %v1675, 7
    %v1677 = vsub.s32 3, %v1676
    %v1678 = vrot.slane %v159, %v1677
    %v1680 = vsel %vm189, %v1673, 0
    %v1683 = vsel %vm189, %v1674, 0
    %1685 = vmatprep.subr.mxu0 0.0
    %1686 = vmatpush1.msra.mxu0 0.0
    %1687 = vmatprep.subr.mxu0 0.0
    %1688 = vmatpush1.msra.mxu0 0.0
    %1689 = vmatprep.subr.mxu0 0.0
    %1690 = vmatpush1.msra.mxu0 0.0
    %1691 = vmatprep.subr.mxu0 0.0
    %1692 = vmatpush1.msra.mxu0 0.0
    %1693 = vmatprep.subr.mxu0 0.0
    %1694 = vmatpush1.msra.mxu0 0.0
    %1695 = vmatprep.subr.mxu0 0.0
    %1696 = vmatpush1.msra.mxu0 0.0
    %1697 = vmatprep.subr.mxu0 0.0
    %1698 = vmatpush1.msra.mxu0 0.0
    %1699 = vmatprep.subr.mxu0 0.0
    %1700 = vmatpush1.msra.mxu0 0.0
    %1701 = vmatprep.subr.mxu0 0.0
    %1702 = vmatpush1.msra.mxu0 0.0
    %1703 = vmatprep.subr.mxu0 0.0
    %1704 = vmatpush1.msra.mxu0 0.0
    %1705 = vmatprep.subr.mxu0 0.0
    %1706 = vmatpush1.msra.mxu0 0.0
    %1707 = vmatprep.subr.mxu0 0.0
    %1708 = vmatpush1.msra.mxu0 0.0
    %1709 = vmatprep.subr.mxu0 0.0
    %1710 = vmatpush1.msra.mxu0 %v379
    %1711 = vmatprep.subr.mxu0 0.0
    %1712 = vmatpush1.msra.mxu0 %v378
    %1713 = vmatprep.subr.mxu0 0.0
    %1714 = vmatpush1.msra.mxu0 %v377
    %1715 = vmatprep.subr.mxu0 0.0
    %1716 = vmatpush1.msra.mxu0 %v376
    %1717 = vmatprep.subr.mxu0 0.0
    %1718 = vmatpush2.msra.mxu0 0.0
    %1719 = vmatprep.subr.mxu0 0.0
    %1720 = vmatpush2.msra.mxu0 0.0
    %1721 = vmatprep.subr.mxu0 0.0
    %1722 = vmatpush2.msra.mxu0 0.0
    %1723 = vmatprep.subr.mxu0 0.0
    %1724 = vmatpush2.msra.mxu0 0.0
    %1725 = vmatprep.subr.mxu0 0.0
    %1726 = vmatpush2.msra.mxu0 0.0
    %1727 = vmatprep.subr.mxu0 0.0
    %1728 = vmatpush2.msra.mxu0 0.0
    %1729 = vmatprep.subr.mxu0 0.0
    %1730 = vmatpush2.msra.mxu0 0.0
    %1731 = vmatprep.subr.mxu0 0.0
    %1732 = vmatpush2.msra.mxu0 0.0
    %1733 = vmatprep.subr.mxu0 0.0
    %1734 = vmatpush2.msra.mxu0 0.0
    %1735 = vmatprep.subr.mxu0 0.0
    %1736 = vmatpush2.msra.mxu0 0.0
    %1737 = vmatprep.subr.mxu0 0.0
    %1738 = vmatpush2.msra.mxu0 0.0
    %1739 = vmatprep.subr.mxu0 0.0
    %1740 = vmatpush2.msra.mxu0 0.0
    %1741 = vmatprep.subr.mxu0 0.0
    %1742 = vmatpush2.msra.mxu0 0.0
    %1743 = vmatprep.subr.mxu0 0.0
    %1744 = vmatpush2.msra.mxu0 0.0
    %1745 = vmatprep.subr.mxu0 0.0
    %1746 = vmatpush2.msra.mxu0 0.0
    %1747 = vmatprep.subr.mxu0 0.0
    %1748 = vmatpush2.msra.mxu0 0.0
    %1749 = vmatprep.mubr.f32.mxu0 0.0
    %1750 = vmatmul.mubr.f32.gmra.mxu0 %v1680
    %v1751 = vpop.f32.mrf.mxu0
    %v1752 = vadd.f32 %v1678, %v1751
    %v1753 = vpop.f32.mrf.mxu0
    %1754 = vmatprep.mubr.f32.mxu0 0.0
    %1755 = vmatmul.mubr.f32.gmra.mxu0 %v1683
    %v1756 = vpop.f32.mrf.mxu0
    %v1757 = vadd.f32 %v1678, %v1756
    %v1758 = vpop.f32.mrf.mxu0
    %1759 = vdwg.mxu0
    %v1760 = vadd.f32 %v145, %v1752
    %v1761 = vadd.f32 %v146, %v1757
    %v1762 = vsel %vm189, %v1760, 0.0
    %1763 = vadd.xlane.f32.xlu0 %v1762
    %v1764 = vpop.xlane.xlu0 %1763
    %v1765 = vsel %vm189, %v1761, 0.0
    %1766 = vadd.xlane.f32.xlu0 %v1765
    %v1767 = vpop.xlane.xlu0 %1766
    %v1768 = vrcp.pop 32.0
    %v1769 = vmul.f32 %v1764, %v1768
    %v1770 = vmul.f32 %v1767, %v1768
    %v1771 = vmul.f32 %v1760, %v1760
    %v1772 = vmul.f32 %v1761, %v1761
    %v1773 = vsel %vm189, %v1771, 0.0
    %1774 = vadd.xlane.f32.xlu0 %v1773
    %v1775 = vpop.xlane.xlu0 %1774
    %v1776 = vsel %vm189, %v1772, 0.0
    %1777 = vadd.xlane.f32.xlu0 %v1776
    %v1778 = vpop.xlane.xlu0 %1777
    %v1779 = vmul.f32 %v1775, %v1768
    %v1780 = vmul.f32 %v1778, %v1768
    %v1781 = vmul.f32 %v1769, %v1769
    %v1782 = vmul.f32 %v1770, %v1770
    %v1783 = vsub.f32 %v1779, %v1781
    %v1784 = vsub.f32 %v1780, %v1782
    %v1785 = vsub.f32 %v1760, %v1769
    %v1786 = vsub.f32 %v1761, %v1770
    %v1787 = vadd.f32 %v1783, 1e-05
    %v1788 = vadd.f32 %v1784, 1e-05
    %v1789 = vrsqrt.pop %v1787
    %v1790 = vrsqrt.pop %v1788
    %v1791 = vmul.f32 %v1785, %v1789
    %v1792 = vmul.f32 %v1786, %v1790
    %v1793 = vlaneseq
    %v1794 = vshrl.u32 %v1793, 7
    %v1795 = vsub.s32 0, %v1794
    %v1796 = vrot.slane %v157, %v1795
    %v1797 = vmul.f32 %v1791, %v1796
    %v1798 = vmul.f32 %v1792, %v1796
    %v1799 = vlaneseq
    %v1800 = vshrl.u32 %v1799, 7
    %v1801 = vsub.s32 0, %v1800
    %v1802 = vrot.slane %v158, %v1801
    %v1803 = vadd.f32 %v1797, %v1802
    %v1804 = vadd.f32 %v1798, %v1802
    %v1805 = vadd.f32 %v1803, %v147
    %v1806 = vadd.f32 %v1804, %v148
    %v1807 = vld [vmem:[%s8] sm:$0xff]
    %v1808 = vld [vmem:[%s8 + $0x8] sm:$0xff]
    %v1809 = vld [vmem:[%s8 + $0x10] sm:$0xff]
    %v1810 = vld [vmem:[%s8 + $0x18] sm:$0xff]
    %v1811 = vlaneseq
    %v1812 = vshrl.u32 %v1811, 7
    %v1813 = vsub.s32 0, %v1812
    %v1814 = vrot.slane %v160, %v1813
    %v1816 = vsel %vm189, %v1805, 0
    %v1819 = vsel %vm189, %v1806, 0
    %1821 = vmatprep.subr.mxu0 0.0
    %1822 = vmatpush1.msra.mxu0 0.0
    %1823 = vmatprep.subr.mxu0 0.0
    %1824 = vmatpush1.msra.mxu0 0.0
    %1825 = vmatprep.subr.mxu0 0.0
    %1826 = vmatpush1.msra.mxu0 0.0
    %1827 = vmatprep.subr.mxu0 0.0
    %1828 = vmatpush1.msra.mxu0 0.0
    %1829 = vmatprep.subr.mxu0 0.0
    %1830 = vmatpush1.msra.mxu0 0.0
    %1831 = vmatprep.subr.mxu0 0.0
    %1832 = vmatpush1.msra.mxu0 0.0
    %1833 = vmatprep.subr.mxu0 0.0
    %1834 = vmatpush1.msra.mxu0 0.0
    %1835 = vmatprep.subr.mxu0 0.0
    %1836 = vmatpush1.msra.mxu0 0.0
    %1837 = vmatprep.subr.mxu0 0.0
    %1838 = vmatpush1.msra.mxu0 0.0
    %1839 = vmatprep.subr.mxu0 0.0
    %1840 = vmatpush1.msra.mxu0 0.0
    %1841 = vmatprep.subr.mxu0 0.0
    %1842 = vmatpush1.msra.mxu0 0.0
    %1843 = vmatprep.subr.mxu0 0.0
    %1844 = vmatpush1.msra.mxu0 0.0
    %1845 = vmatprep.subr.mxu0 0.0
    %1846 = vmatpush1.msra.mxu0 %v1810
    %1847 = vmatprep.subr.mxu0 0.0
    %1848 = vmatpush1.msra.mxu0 %v1809
    %1849 = vmatprep.subr.mxu0 0.0
    %1850 = vmatpush1.msra.mxu0 %v1808
    %1851 = vmatprep.subr.mxu0 0.0
    %1852 = vmatpush1.msra.mxu0 %v1807
    %1853 = vmatprep.subr.mxu0 0.0
    %1854 = vmatpush2.msra.mxu0 0.0
    %1855 = vmatprep.subr.mxu0 0.0
    %1856 = vmatpush2.msra.mxu0 0.0
    %1857 = vmatprep.subr.mxu0 0.0
    %1858 = vmatpush2.msra.mxu0 0.0
    %1859 = vmatprep.subr.mxu0 0.0
    %1860 = vmatpush2.msra.mxu0 0.0
    %1861 = vmatprep.subr.mxu0 0.0
    %1862 = vmatpush2.msra.mxu0 0.0
    %1863 = vmatprep.subr.mxu0 0.0
    %1864 = vmatpush2.msra.mxu0 0.0
    %1865 = vmatprep.subr.mxu0 0.0
    %1866 = vmatpush2.msra.mxu0 0.0
    %1867 = vmatprep.subr.mxu0 0.0
    %1868 = vmatpush2.msra.mxu0 0.0
    %1869 = vmatprep.subr.mxu0 0.0
    %1870 = vmatpush2.msra.mxu0 0.0
    %1871 = vmatprep.subr.mxu0 0.0
    %1872 = vmatpush2.msra.mxu0 0.0
    %1873 = vmatprep.subr.mxu0 0.0
    %1874 = vmatpush2.msra.mxu0 0.0
    %1875 = vmatprep.subr.mxu0 0.0
    %1876 = vmatpush2.msra.mxu0 0.0
    %1877 = vmatprep.subr.mxu0 0.0
    %1878 = vmatpush2.msra.mxu0 0.0
    %1879 = vmatprep.subr.mxu0 0.0
    %1880 = vmatpush2.msra.mxu0 0.0
    %1881 = vmatprep.subr.mxu0 0.0
    %1882 = vmatpush2.msra.mxu0 0.0
    %1883 = vmatprep.subr.mxu0 0.0
    %1884 = vmatpush2.msra.mxu0 0.0
    %1885 = vmatprep.mubr.f32.mxu0 0.0
    %1886 = vmatmul.mubr.f32.gmra.mxu0 %v1816
    %v1887 = vpop.f32.mrf.mxu0
    %v1888 = vadd.f32 %v1814, %v1887
    %v1889 = vpop.f32.mrf.mxu0
    %1890 = vmatprep.mubr.f32.mxu0 0.0
    %1891 = vmatmul.mubr.f32.gmra.mxu0 %v1819
    %v1892 = vpop.f32.mrf.mxu0
    %v1893 = vadd.f32 %v1814, %v1892
    %v1894 = vpop.f32.mrf.mxu0
    %1895 = vdwg.mxu0
    %v1896 = vadd.f32 %v149, %v153
    %v1897 = vadd.f32 %v150, %v154
    %v1898 = vadd.f32 %v151, %v155
    %v1899 = vadd.f32 %v152, %v156
    %v1900 = vld [vmem:[%s9] sm:$0xff]
    %v1901 = vld [vmem:[%s9 + $0x8] sm:$0xff]
    %v1902 = vld [vmem:[%s9 + $0x10] sm:$0xff]
    %v1903 = vld [vmem:[%s9 + $0x18] sm:$0xff]
    %v1904 = vlaneseq
    %v1905 = vshrl.u32 %v1904, 7
    %v1906 = vsub.s32 1, %v1905
    %v1907 = vrot.slane %v160, %v1906
    %v1909 = vsel %vm189, %v1896, 0
    %v1912 = vsel %vm189, %v1897, 0
    %v1915 = vsel %vm189, %v1898, 0
    %v1918 = vsel %vm189, %v1899, 0
    %1920 = vmatprep.subr.mxu0 0.0
    %1921 = vmatpush1.msra.mxu0 0.0
    %1922 = vmatprep.subr.mxu0 0.0
    %1923 = vmatpush1.msra.mxu0 0.0
    %1924 = vmatprep.subr.mxu0 0.0
    %1925 = vmatpush1.msra.mxu0 0.0
    %1926 = vmatprep.subr.mxu0 0.0
    %1927 = vmatpush1.msra.mxu0 0.0
    %1928 = vmatprep.subr.mxu0 0.0
    %1929 = vmatpush1.msra.mxu0 0.0
    %1930 = vmatprep.subr.mxu0 0.0
    %1931 = vmatpush1.msra.mxu0 0.0
    %1932 = vmatprep.subr.mxu0 0.0
    %1933 = vmatpush1.msra.mxu0 0.0
    %1934 = vmatprep.subr.mxu0 0.0
    %1935 = vmatpush1.msra.mxu0 0.0
    %1936 = vmatprep.subr.mxu0 0.0
    %1937 = vmatpush1.msra.mxu0 0.0
    %1938 = vmatprep.subr.mxu0 0.0
    %1939 = vmatpush1.msra.mxu0 0.0
    %1940 = vmatprep.subr.mxu0 0.0
    %1941 = vmatpush1.msra.mxu0 0.0
    %1942 = vmatprep.subr.mxu0 0.0
    %1943 = vmatpush1.msra.mxu0 0.0
    %1944 = vmatprep.subr.mxu0 0.0
    %1945 = vmatpush1.msra.mxu0 %v1903
    %1946 = vmatprep.subr.mxu0 0.0
    %1947 = vmatpush1.msra.mxu0 %v1902
    %1948 = vmatprep.subr.mxu0 0.0
    %1949 = vmatpush1.msra.mxu0 %v1901
    %1950 = vmatprep.subr.mxu0 0.0
    %1951 = vmatpush1.msra.mxu0 %v1900
    %1952 = vmatprep.subr.mxu0 0.0
    %1953 = vmatpush2.msra.mxu0 0.0
    %1954 = vmatprep.subr.mxu0 0.0
    %1955 = vmatpush2.msra.mxu0 0.0
    %1956 = vmatprep.subr.mxu0 0.0
    %1957 = vmatpush2.msra.mxu0 0.0
    %1958 = vmatprep.subr.mxu0 0.0
    %1959 = vmatpush2.msra.mxu0 0.0
    %1960 = vmatprep.subr.mxu0 0.0
    %1961 = vmatpush2.msra.mxu0 0.0
    %1962 = vmatprep.subr.mxu0 0.0
    %1963 = vmatpush2.msra.mxu0 0.0
    %1964 = vmatprep.subr.mxu0 0.0
    %1965 = vmatpush2.msra.mxu0 0.0
    %1966 = vmatprep.subr.mxu0 0.0
    %1967 = vmatpush2.msra.mxu0 0.0
    %1968 = vmatprep.subr.mxu0 0.0
    %1969 = vmatpush2.msra.mxu0 0.0
    %1970 = vmatprep.subr.mxu0 0.0
    %1971 = vmatpush2.msra.mxu0 0.0
    %1972 = vmatprep.subr.mxu0 0.0
    %1973 = vmatpush2.msra.mxu0 0.0
    %1974 = vmatprep.subr.mxu0 0.0
    %1975 = vmatpush2.msra.mxu0 0.0
    %1976 = vmatprep.subr.mxu0 0.0
    %1977 = vmatpush2.msra.mxu0 0.0
    %1978 = vmatprep.subr.mxu0 0.0
    %1979 = vmatpush2.msra.mxu0 0.0
    %1980 = vmatprep.subr.mxu0 0.0
    %1981 = vmatpush2.msra.mxu0 0.0
    %1982 = vmatprep.subr.mxu0 0.0
    %1983 = vmatpush2.msra.mxu0 0.0
    %1984 = vmatprep.mubr.f32.mxu0 0.0
    %1985 = vmatmul.mubr.f32.gmra.mxu0 %v1909
    %v1986 = vpop.f32.mrf.mxu0
    %v1987 = vadd.f32 %v1907, %v1986
    %v1988 = vpop.f32.mrf.mxu0
    %1989 = vmatprep.mubr.f32.mxu0 0.0
    %1990 = vmatmul.mubr.f32.gmra.mxu0 %v1912
    %v1991 = vpop.f32.mrf.mxu0
    %v1992 = vadd.f32 %v1907, %v1991
    %v1993 = vpop.f32.mrf.mxu0
    %1994 = vmatprep.mubr.f32.mxu0 0.0
    %1995 = vmatmul.mubr.f32.gmra.mxu0 %v1915
    %v1996 = vpop.f32.mrf.mxu0
    %v1997 = vadd.f32 %v1907, %v1996
    %v1998 = vpop.f32.mrf.mxu0
    %1999 = vmatprep.mubr.f32.mxu0 0.0
    %2000 = vmatmul.mubr.f32.gmra.mxu0 %v1918
    %v2001 = vpop.f32.mrf.mxu0
    %v2002 = vadd.f32 %v1907, %v2001
    %v2003 = vpop.f32.mrf.mxu0
    %2004 = vdwg.mxu0
    %v2005 = vld [vmem:[%s10] sm:$0xff]
    %v2006 = vld [vmem:[%s10 + $0x8] sm:$0xff]
    %v2007 = vld [vmem:[%s10 + $0x10] sm:$0xff]
    %v2008 = vld [vmem:[%s10 + $0x18] sm:$0xff]
    %v2009 = vlaneseq
    %v2010 = vshrl.u32 %v2009, 7
    %v2011 = vsub.s32 2, %v2010
    %v2012 = vrot.slane %v160, %v2011
    %v2014 = vsel %vm189, %v149, 0
    %v2017 = vsel %vm189, %v150, 0
    %v2020 = vsel %vm189, %v151, 0
    %v2023 = vsel %vm189, %v152, 0
    %2025 = vmatprep.subr.mxu0 0.0
    %2026 = vmatpush1.msra.mxu0 0.0
    %2027 = vmatprep.subr.mxu0 0.0
    %2028 = vmatpush1.msra.mxu0 0.0
    %2029 = vmatprep.subr.mxu0 0.0
    %2030 = vmatpush1.msra.mxu0 0.0
    %2031 = vmatprep.subr.mxu0 0.0
    %2032 = vmatpush1.msra.mxu0 0.0
    %2033 = vmatprep.subr.mxu0 0.0
    %2034 = vmatpush1.msra.mxu0 0.0
    %2035 = vmatprep.subr.mxu0 0.0
    %2036 = vmatpush1.msra.mxu0 0.0
    %2037 = vmatprep.subr.mxu0 0.0
    %2038 = vmatpush1.msra.mxu0 0.0
    %2039 = vmatprep.subr.mxu0 0.0
    %2040 = vmatpush1.msra.mxu0 0.0
    %2041 = vmatprep.subr.mxu0 0.0
    %2042 = vmatpush1.msra.mxu0 0.0
    %2043 = vmatprep.subr.mxu0 0.0
    %2044 = vmatpush1.msra.mxu0 0.0
    %2045 = vmatprep.subr.mxu0 0.0
    %2046 = vmatpush1.msra.mxu0 0.0
    %2047 = vmatprep.subr.mxu0 0.0
    %2048 = vmatpush1.msra.mxu0 0.0
    %2049 = vmatprep.subr.mxu0 0.0
    %2050 = vmatpush1.msra.mxu0 %v2008
    %2051 = vmatprep.subr.mxu0 0.0
    %2052 = vmatpush1.msra.mxu0 %v2007
    %2053 = vmatprep.subr.mxu0 0.0
    %2054 = vmatpush1.msra.mxu0 %v2006
    %2055 = vmatprep.subr.mxu0 0.0
    %2056 = vmatpush1.msra.mxu0 %v2005
    %2057 = vmatprep.subr.mxu0 0.0
    %2058 = vmatpush2.msra.mxu0 0.0
    %2059 = vmatprep.subr.mxu0 0.0
    %2060 = vmatpush2.msra.mxu0 0.0
    %2061 = vmatprep.subr.mxu0 0.0
    %2062 = vmatpush2.msra.mxu0 0.0
    %2063 = vmatprep.subr.mxu0 0.0
    %2064 = vmatpush2.msra.mxu0 0.0
    %2065 = vmatprep.subr.mxu0 0.0
    %2066 = vmatpush2.msra.mxu0 0.0
    %2067 = vmatprep.subr.mxu0 0.0
    %2068 = vmatpush2.msra.mxu0 0.0
    %2069 = vmatprep.subr.mxu0 0.0
    %2070 = vmatpush2.msra.mxu0 0.0
    %2071 = vmatprep.subr.mxu0 0.0
    %2072 = vmatpush2.msra.mxu0 0.0
    %2073 = vmatprep.subr.mxu0 0.0
    %2074 = vmatpush2.msra.mxu0 0.0
    %2075 = vmatprep.subr.mxu0 0.0
    %2076 = vmatpush2.msra.mxu0 0.0
    %2077 = vmatprep.subr.mxu0 0.0
    %2078 = vmatpush2.msra.mxu0 0.0
    %2079 = vmatprep.subr.mxu0 0.0
    %2080 = vmatpush2.msra.mxu0 0.0
    %2081 = vmatprep.subr.mxu0 0.0
    %2082 = vmatpush2.msra.mxu0 0.0
    %2083 = vmatprep.subr.mxu0 0.0
    %2084 = vmatpush2.msra.mxu0 0.0
    %2085 = vmatprep.subr.mxu0 0.0
    %2086 = vmatpush2.msra.mxu0 0.0
    %2087 = vmatprep.subr.mxu0 0.0
    %2088 = vmatpush2.msra.mxu0 0.0
    %2089 = vmatprep.mubr.f32.mxu0 0.0
    %2090 = vmatmul.mubr.f32.gmra.mxu0 %v2014
    %v2091 = vpop.f32.mrf.mxu0
    %v2092 = vadd.f32 %v2012, %v2091
    %v2093 = vpop.f32.mrf.mxu0
    %2094 = vmatprep.mubr.f32.mxu0 0.0
    %2095 = vmatmul.mubr.f32.gmra.mxu0 %v2017
    %v2096 = vpop.f32.mrf.mxu0
    %v2097 = vadd.f32 %v2012, %v2096
    %v2098 = vpop.f32.mrf.mxu0
    %2099 = vmatprep.mubr.f32.mxu0 0.0
    %2100 = vmatmul.mubr.f32.gmra.mxu0 %v2020
    %v2101 = vpop.f32.mrf.mxu0
    %v2102 = vadd.f32 %v2012, %v2101
    %v2103 = vpop.f32.mrf.mxu0
    %2104 = vmatprep.mubr.f32.mxu0 0.0
    %2105 = vmatmul.mubr.f32.gmra.mxu0 %v2023
    %v2106 = vpop.f32.mrf.mxu0
    %v2107 = vadd.f32 %v2012, %v2106
    %v2108 = vpop.f32.mrf.mxu0
    %2109 = vdwg.mxu0
    %v2110 = vld [vmem:[#allocation4] sm:$0xff]
    %v2111 = vld [vmem:[#allocation4 + $0x8] sm:$0xff]
    %v2112 = vld [vmem:[#allocation4 + $0x10] sm:$0xff]
    %v2113 = vld [vmem:[#allocation4 + $0x18] sm:$0xff]
    %v2114 = vmul.f32 %v1888, %v167
    %v2115 = vmul.f32 %v1893, %v167
    %v2117 = vsel %vm189, %v2114, 0
    %v2120 = vsel %vm189, %v1987, 0
    %v2123 = vsel %vm189, %v1992, 0
    %2125 = vmatprep.subr.mxu0 0.0
    %2126 = vmatpush1.xpose.msra.mxu0 0.0
    %2127 = vmatprep.subr.mxu0 0.0
    %2128 = vmatpush1.xpose.msra.mxu0 0.0
    %2129 = vmatprep.subr.mxu0 0.0
    %2130 = vmatpush1.xpose.msra.mxu0 0.0
    %2131 = vmatprep.subr.mxu0 0.0
    %2132 = vmatpush1.xpose.msra.mxu0 0.0
    %2133 = vmatprep.subr.mxu0 0.0
    %2134 = vmatpush1.xpose.msra.mxu0 0.0
    %2135 = vmatprep.subr.mxu0 0.0
    %2136 = vmatpush1.xpose.msra.mxu0 0.0
    %2137 = vmatprep.subr.mxu0 0.0
    %2138 = vmatpush1.xpose.msra.mxu0 0.0
    %2139 = vmatprep.subr.mxu0 0.0
    %2140 = vmatpush1.xpose.msra.mxu0 0.0
    %2141 = vmatprep.subr.mxu0 0.0
    %2142 = vmatpush1.xpose.msra.mxu0 0.0
    %2143 = vmatprep.subr.mxu0 0.0
    %2144 = vmatpush1.xpose.msra.mxu0 0.0
    %2145 = vmatprep.subr.mxu0 0.0
    %2146 = vmatpush1.xpose.msra.mxu0 0.0
    %2147 = vmatprep.subr.mxu0 0.0
    %2148 = vmatpush1.xpose.msra.mxu0 0.0
    %2149 = vmatprep.subr.mxu0 0.0
    %2150 = vmatpush1.xpose.msra.mxu0 0.0
    %2151 = vmatprep.subr.mxu0 0.0
    %2152 = vmatpush1.xpose.msra.mxu0 0.0
    %2153 = vmatprep.subr.mxu0 0.0
    %2154 = vmatpush1.xpose.msra.mxu0 %v2123
    %2155 = vmatprep.subr.mxu0 0.0
    %2156 = vmatpush1.xpose.msra.mxu0 %v2120
    %2157 = vmatprep.subr.mxu0 0.0
    %2158 = vmatpush2.xpose.msra.mxu0 0.0
    %2159 = vmatprep.subr.mxu0 0.0
    %2160 = vmatpush2.xpose.msra.mxu0 0.0
    %2161 = vmatprep.subr.mxu0 0.0
    %2162 = vmatpush2.xpose.msra.mxu0 0.0
    %2163 = vmatprep.subr.mxu0 0.0
    %2164 = vmatpush2.xpose.msra.mxu0 0.0
    %2165 = vmatprep.subr.mxu0 0.0
    %2166 = vmatpush2.xpose.msra.mxu0 0.0
    %2167 = vmatprep.subr.mxu0 0.0
    %2168 = vmatpush2.xpose.msra.mxu0 0.0
    %2169 = vmatprep.subr.mxu0 0.0
    %2170 = vmatpush2.xpose.msra.mxu0 0.0
    %2171 = vmatprep.subr.mxu0 0.0
    %2172 = vmatpush2.xpose.msra.mxu0 0.0
    %2173 = vmatprep.subr.mxu0 0.0
    %2174 = vmatpush2.xpose.msra.mxu0 0.0
    %2175 = vmatprep.subr.mxu0 0.0
    %2176 = vmatpush2.xpose.msra.mxu0 0.0
    %2177 = vmatprep.subr.mxu0 0.0
    %2178 = vmatpush2.xpose.msra.mxu0 0.0
    %2179 = vmatprep.subr.mxu0 0.0
    %2180 = vmatpush2.xpose.msra.mxu0 0.0
    %2181 = vmatprep.subr.mxu0 0.0
    %2182 = vmatpush2.xpose.msra.mxu0 0.0
    %2183 = vmatprep.subr.mxu0 0.0
    %2184 = vmatpush2.xpose.msra.mxu0 0.0
    %2185 = vmatprep.subr.mxu0 0.0
    %2186 = vmatpush2.xpose.msra.mxu0 0.0
    %2187 = vmatprep.subr.mxu0 0.0
    %2188 = vmatpush2.xpose.msra.mxu0 0.0
    %2189 = vmatprep.mubr.f32.mxu0 0.0
    %2190 = vmatmul.mubr.f32.gmra.mxu0 %v2117
    %v2191 = vpop.f32.mrf.mxu0
    %v2192 = vadd.f32 0.0, %v2191
    %v2193 = vpop.f32.mrf.mxu0
    %2194 = vdwg.mxu0
    %v2196 = vsel %vm189, %v2115, 0
    %v2199 = vsel %vm189, %v1997, 0
    %v2202 = vsel %vm189, %v2002, 0
    %2204 = vmatprep.subr.mxu0 0.0
    %2205 = vmatpush1.xpose.msra.mxu0 0.0
    %2206 = vmatprep.subr.mxu0 0.0
    %2207 = vmatpush1.xpose.msra.mxu0 0.0
    %2208 = vmatprep.subr.mxu0 0.0
    %2209 = vmatpush1.xpose.msra.mxu0 0.0
    %2210 = vmatprep.subr.mxu0 0.0
    %2211 = vmatpush1.xpose.msra.mxu0 0.0
    %2212 = vmatprep.subr.mxu0 0.0
    %2213 = vmatpush1.xpose.msra.mxu0 0.0
    %2214 = vmatprep.subr.mxu0 0.0
    %2215 = vmatpush1.xpose.msra.mxu0 0.0
    %2216 = vmatprep.subr.mxu0 0.0
    %2217 = vmatpush1.xpose.msra.mxu0 0.0
    %2218 = vmatprep.subr.mxu0 0.0
    %2219 = vmatpush1.xpose.msra.mxu0 0.0
    %2220 = vmatprep.subr.mxu0 0.0
    %2221 = vmatpush1.xpose.msra.mxu0 0.0
    %2222 = vmatprep.subr.mxu0 0.0
    %2223 = vmatpush1.xpose.msra.mxu0 0.0
    %2224 = vmatprep.subr.mxu0 0.0
    %2225 = vmatpush1.xpose.msra.mxu0 0.0
    %2226 = vmatprep.subr.mxu0 0.0
    %2227 = vmatpush1.xpose.msra.mxu0 0.0
    %2228 = vmatprep.subr.mxu0 0.0
    %2229 = vmatpush1.xpose.msra.mxu0 0.0
    %2230 = vmatprep.subr.mxu0 0.0
    %2231 = vmatpush1.xpose.msra.mxu0 0.0
    %2232 = vmatprep.subr.mxu0 0.0
    %2233 = vmatpush1.xpose.msra.mxu0 %v2202
    %2234 = vmatprep.subr.mxu0 0.0
    %2235 = vmatpush1.xpose.msra.mxu0 %v2199
    %2236 = vmatprep.subr.mxu0 0.0
    %2237 = vmatpush2.xpose.msra.mxu0 0.0
    %2238 = vmatprep.subr.mxu0 0.0
    %2239 = vmatpush2.xpose.msra.mxu0 0.0
    %2240 = vmatprep.subr.mxu0 0.0
    %2241 = vmatpush2.xpose.msra.mxu0 0.0
    %2242 = vmatprep.subr.mxu0 0.0
    %2243 = vmatpush2.xpose.msra.mxu0 0.0
    %2244 = vmatprep.subr.mxu0 0.0
    %2245 = vmatpush2.xpose.msra.mxu0 0.0
    %2246 = vmatprep.subr.mxu0 0.0
    %2247 = vmatpush2.xpose.msra.mxu0 0.0
    %2248 = vmatprep.subr.mxu0 0.0
    %2249 = vmatpush2.xpose.msra.mxu0 0.0
    %2250 = vmatprep.subr.mxu0 0.0
    %2251 = vmatpush2.xpose.msra.mxu0 0.0
    %2252 = vmatprep.subr.mxu0 0.0
    %2253 = vmatpush2.xpose.msra.mxu0 0.0
    %2254 = vmatprep.subr.mxu0 0.0
    %2255 = vmatpush2.xpose.msra.mxu0 0.0
    %2256 = vmatprep.subr.mxu0 0.0
    %2257 = vmatpush2.xpose.msra.mxu0 0.0
    %2258 = vmatprep.subr.mxu0 0.0
    %2259 = vmatpush2.xpose.msra.mxu0 0.0
    %2260 = vmatprep.subr.mxu0 0.0
    %2261 = vmatpush2.xpose.msra.mxu0 0.0
    %2262 = vmatprep.subr.mxu0 0.0
    %2263 = vmatpush2.xpose.msra.mxu0 0.0
    %2264 = vmatprep.subr.mxu0 0.0
    %2265 = vmatpush2.xpose.msra.mxu0 0.0
    %2266 = vmatprep.subr.mxu0 0.0
    %2267 = vmatpush2.xpose.msra.mxu0 0.0
    %2268 = vmatprep.mubr.f32.mxu0 0.0
    %2269 = vmatmul.mubr.f32.gmra.mxu0 %v2196
    %v2270 = vpop.f32.mrf.mxu0
    %v2271 = vadd.f32 0.0, %v2270
    %v2272 = vpop.f32.mrf.mxu0
    %2273 = vdwg.mxu0
    %v2274 = vmul.f32 %v2192, 0.35355338
    %v2275 = vmul.f32 %v2271, 0.35355338
    %vm2276 = vcmask 130048
    %v2277 = vsel %vm2276, %v2274, -inf
    %2278 = vmax.xlane.f32.xlu0 %v2277
    %v2279 = vpop.xlane.xlu0 %2278
    %v2280 = vsel %vm2276, %v2275, -inf
    %2281 = vmax.xlane.f32.xlu0 %v2280
    %v2282 = vpop.xlane.xlu0 %2281
    %v2283 = vsub.f32 %v2274, %v2279
    %v2284 = vsub.f32 %v2275, %v2282
    %v2285 = vmul.f32 %v2283, 1.442695
    %v2286 = vpow.pop %v2285
    %v2287 = vmul.f32 %v2284, 1.442695
    %v2288 = vpow.pop %v2287
    %v2289 = vsel %vm2276, %v2286, 0.0
    %2290 = vadd.xlane.f32.xlu0 %v2289
    %v2291 = vpop.xlane.xlu0 %2290
    %v2292 = vsel %vm2276, %v2288, 0.0
    %2293 = vadd.xlane.f32.xlu0 %v2292
    %v2294 = vpop.xlane.xlu0 %2293
    %v2295 = vrcp.pop %v2291
    %v2296 = vmul.f32 %v2286, %v2295
    %v2297 = vrcp.pop %v2294
    %v2298 = vmul.f32 %v2288, %v2297
    %v2299 = vmul.f32 %v2092, %v167
    %v2300 = vmul.f32 %v2097, %v167
    %v2301 = vmul.f32 %v2102, %v167
    %v2302 = vmul.f32 %v2107, %v167
    %v2303 = vmul.f32 %v1888, %v172
    %v2304 = vmul.f32 %v1893, %v172
    %v2306 = vsel %vm189, %v2303, 0
    %2308 = vmatprep.subr.mxu0 0.0
    %2309 = vmatpush1.xpose.msra.mxu0 0.0
    %2310 = vmatprep.subr.mxu0 0.0
    %2311 = vmatpush1.xpose.msra.mxu0 0.0
    %2312 = vmatprep.subr.mxu0 0.0
    %2313 = vmatpush1.xpose.msra.mxu0 0.0
    %2314 = vmatprep.subr.mxu0 0.0
    %2315 = vmatpush1.xpose.msra.mxu0 0.0
    %2316 = vmatprep.subr.mxu0 0.0
    %2317 = vmatpush1.xpose.msra.mxu0 0.0
    %2318 = vmatprep.subr.mxu0 0.0
    %2319 = vmatpush1.xpose.msra.mxu0 0.0
    %2320 = vmatprep.subr.mxu0 0.0
    %2321 = vmatpush1.xpose.msra.mxu0 0.0
    %2322 = vmatprep.subr.mxu0 0.0
    %2323 = vmatpush1.xpose.msra.mxu0 0.0
    %2324 = vmatprep.subr.mxu0 0.0
    %2325 = vmatpush1.xpose.msra.mxu0 0.0
    %2326 = vmatprep.subr.mxu0 0.0
    %2327 = vmatpush1.xpose.msra.mxu0 0.0
    %2328 = vmatprep.subr.mxu0 0.0
    %2329 = vmatpush1.xpose.msra.mxu0 0.0
    %2330 = vmatprep.subr.mxu0 0.0
    %2331 = vmatpush1.xpose.msra.mxu0 0.0
    %2332 = vmatprep.subr.mxu0 0.0
    %2333 = vmatpush1.xpose.msra.mxu0 0.0
    %2334 = vmatprep.subr.mxu0 0.0
    %2335 = vmatpush1.xpose.msra.mxu0 0.0
    %2336 = vmatprep.subr.mxu0 0.0
    %2337 = vmatpush1.xpose.msra.mxu0 %v2123
    %2338 = vmatprep.subr.mxu0 0.0
    %2339 = vmatpush1.xpose.msra.mxu0 %v2120
    %2340 = vmatprep.subr.mxu0 0.0
    %2341 = vmatpush2.xpose.msra.mxu0 0.0
    %2342 = vmatprep.subr.mxu0 0.0
    %2343 = vmatpush2.xpose.msra.mxu0 0.0
    %2344 = vmatprep.subr.mxu0 0.0
    %2345 = vmatpush2.xpose.msra.mxu0 0.0
    %2346 = vmatprep.subr.mxu0 0.0
    %2347 = vmatpush2.xpose.msra.mxu0 0.0
    %2348 = vmatprep.subr.mxu0 0.0
    %2349 = vmatpush2.xpose.msra.mxu0 0.0
    %2350 = vmatprep.subr.mxu0 0.0
    %2351 = vmatpush2.xpose.msra.mxu0 0.0
    %2352 = vmatprep.subr.mxu0 0.0
    %2353 = vmatpush2.xpose.msra.mxu0 0.0
    %2354 = vmatprep.subr.mxu0 0.0
    %2355 = vmatpush2.xpose.msra.mxu0 0.0
    %2356 = vmatprep.subr.mxu0 0.0
    %2357 = vmatpush2.xpose.msra.mxu0 0.0
    %2358 = vmatprep.subr.mxu0 0.0
    %2359 = vmatpush2.xpose.msra.mxu0 0.0
    %2360 = vmatprep.subr.mxu0 0.0
    %2361 = vmatpush2.xpose.msra.mxu0 0.0
    %2362 = vmatprep.subr.mxu0 0.0
    %2363 = vmatpush2.xpose.msra.mxu0 0.0
    %2364 = vmatprep.subr.mxu0 0.0
    %2365 = vmatpush2.xpose.msra.mxu0 0.0
    %2366 = vmatprep.subr.mxu0 0.0
    %2367 = vmatpush2.xpose.msra.mxu0 0.0
    %2368 = vmatprep.subr.mxu0 0.0
    %2369 = vmatpush2.xpose.msra.mxu0 0.0
    %2370 = vmatprep.subr.mxu0 0.0
    %2371 = vmatpush2.xpose.msra.mxu0 0.0
    %2372 = vmatprep.mubr.f32.mxu0 0.0
    %2373 = vmatmul.mubr.f32.gmra.mxu0 %v2306
    %v2374 = vpop.f32.mrf.mxu0
    %v2375 = vadd.f32 0.0, %v2374
    %v2376 = vpop.f32.mrf.mxu0
    %2377 = vdwg.mxu0
    %v2379 = vsel %vm189, %v2304, 0
    %2381 = vmatprep.subr.mxu0 0.0
    %2382 = vmatpush1.xpose.msra.mxu0 0.0
    %2383 = vmatprep.subr.mxu0 0.0
    %2384 = vmatpush1.xpose.msra.mxu0 0.0
    %2385 = vmatprep.subr.mxu0 0.0
    %2386 = vmatpush1.xpose.msra.mxu0 0.0
    %2387 = vmatprep.subr.mxu0 0.0
    %2388 = vmatpush1.xpose.msra.mxu0 0.0
    %2389 = vmatprep.subr.mxu0 0.0
    %2390 = vmatpush1.xpose.msra.mxu0 0.0
    %2391 = vmatprep.subr.mxu0 0.0
    %2392 = vmatpush1.xpose.msra.mxu0 0.0
    %2393 = vmatprep.subr.mxu0 0.0
    %2394 = vmatpush1.xpose.msra.mxu0 0.0
    %2395 = vmatprep.subr.mxu0 0.0
    %2396 = vmatpush1.xpose.msra.mxu0 0.0
    %2397 = vmatprep.subr.mxu0 0.0
    %2398 = vmatpush1.xpose.msra.mxu0 0.0
    %2399 = vmatprep.subr.mxu0 0.0
    %2400 = vmatpush1.xpose.msra.mxu0 0.0
    %2401 = vmatprep.subr.mxu0 0.0
    %2402 = vmatpush1.xpose.msra.mxu0 0.0
    %2403 = vmatprep.subr.mxu0 0.0
    %2404 = vmatpush1.xpose.msra.mxu0 0.0
    %2405 = vmatprep.subr.mxu0 0.0
    %2406 = vmatpush1.xpose.msra.mxu0 0.0
    %2407 = vmatprep.subr.mxu0 0.0
    %2408 = vmatpush1.xpose.msra.mxu0 0.0
    %2409 = vmatprep.subr.mxu0 0.0
    %2410 = vmatpush1.xpose.msra.mxu0 %v2202
    %2411 = vmatprep.subr.mxu0 0.0
    %2412 = vmatpush1.xpose.msra.mxu0 %v2199
    %2413 = vmatprep.subr.mxu0 0.0
    %2414 = vmatpush2.xpose.msra.mxu0 0.0
    %2415 = vmatprep.subr.mxu0 0.0
    %2416 = vmatpush2.xpose.msra.mxu0 0.0
    %2417 = vmatprep.subr.mxu0 0.0
    %2418 = vmatpush2.xpose.msra.mxu0 0.0
    %2419 = vmatprep.subr.mxu0 0.0
    %2420 = vmatpush2.xpose.msra.mxu0 0.0
    %2421 = vmatprep.subr.mxu0 0.0
    %2422 = vmatpush2.xpose.msra.mxu0 0.0
    %2423 = vmatprep.subr.mxu0 0.0
    %2424 = vmatpush2.xpose.msra.mxu0 0.0
    %2425 = vmatprep.subr.mxu0 0.0
    %2426 = vmatpush2.xpose.msra.mxu0 0.0
    %2427 = vmatprep.subr.mxu0 0.0
    %2428 = vmatpush2.xpose.msra.mxu0 0.0
    %2429 = vmatprep.subr.mxu0 0.0
    %2430 = vmatpush2.xpose.msra.mxu0 0.0
    %2431 = vmatprep.subr.mxu0 0.0
    %2432 = vmatpush2.xpose.msra.mxu0 0.0
    %2433 = vmatprep.subr.mxu0 0.0
    %2434 = vmatpush2.xpose.msra.mxu0 0.0
    %2435 = vmatprep.subr.mxu0 0.0
    %2436 = vmatpush2.xpose.msra.mxu0 0.0
    %2437 = vmatprep.subr.mxu0 0.0
    %2438 = vmatpush2.xpose.msra.mxu0 0.0
    %2439 = vmatprep.subr.mxu0 0.0
    %2440 = vmatpush2.xpose.msra.mxu0 0.0
    %2441 = vmatprep.subr.mxu0 0.0
    %2442 = vmatpush2.xpose.msra.mxu0 0.0
    %2443 = vmatprep.subr.mxu0 0.0
    %2444 = vmatpush2.xpose.msra.mxu0 0.0
    %2445 = vmatprep.mubr.f32.mxu0 0.0
    %2446 = vmatmul.mubr.f32.gmra.mxu0 %v2379
    %v2447 = vpop.f32.mrf.mxu0
    %v2448 = vadd.f32 0.0, %v2447
    %v2449 = vpop.f32.mrf.mxu0
    %2450 = vdwg.mxu0
    %v2451 = vmul.f32 %v2375, 0.35355338
    %v2452 = vmul.f32 %v2448, 0.35355338
    %v2453 = vsel %vm2276, %v2451, -inf
    %2454 = vmax.xlane.f32.xlu0 %v2453
    %v2455 = vpop.xlane.xlu0 %2454
    %v2456 = vsel %vm2276, %v2452, -inf
    %2457 = vmax.xlane.f32.xlu0 %v2456
    %v2458 = vpop.xlane.xlu0 %2457
    %v2459 = vsub.f32 %v2451, %v2455
    %v2460 = vsub.f32 %v2452, %v2458
    %v2461 = vmul.f32 %v2459, 1.442695
    %v2462 = vpow.pop %v2461
    %v2463 = vmul.f32 %v2460, 1.442695
    %v2464 = vpow.pop %v2463
    %v2465 = vsel %vm2276, %v2462, 0.0
    %2466 = vadd.xlane.f32.xlu0 %v2465
    %v2467 = vpop.xlane.xlu0 %2466
    %v2468 = vsel %vm2276, %v2464, 0.0
    %2469 = vadd.xlane.f32.xlu0 %v2468
    %v2470 = vpop.xlane.xlu0 %2469
    %v2471 = vrcp.pop %v2467
    %v2472 = vmul.f32 %v2462, %v2471
    %v2473 = vrcp.pop %v2470
    %v2474 = vmul.f32 %v2464, %v2473
    %v2475 = vmul.f32 %v2092, %v172
    %v2476 = vmul.f32 %v2097, %v172
    %v2477 = vmul.f32 %v2102, %v172
    %v2478 = vmul.f32 %v2107, %v172
    %v2480 = vsel %vm2276, %v2472, 0
    %2482 = vmatprep.subr.mxu0 0.0
    %2483 = vmatpush1.msra.mxu0 0.0
    %2484 = vmatprep.subr.mxu0 0.0
    %2485 = vmatpush1.msra.mxu0 0.0
    %2486 = vmatprep.subr.mxu0 0.0
    %2487 = vmatpush1.msra.mxu0 0.0
    %2488 = vmatprep.subr.mxu0 0.0
    %2489 = vmatpush1.msra.mxu0 0.0
    %2490 = vmatprep.subr.mxu0 0.0
    %2491 = vmatpush1.msra.mxu0 0.0
    %2492 = vmatprep.subr.mxu0 0.0
    %2493 = vmatpush1.msra.mxu0 0.0
    %2494 = vmatprep.subr.mxu0 0.0
    %2495 = vmatpush1.msra.mxu0 0.0
    %2496 = vmatprep.subr.mxu0 0.0
    %2497 = vmatpush1.msra.mxu0 0.0
    %2498 = vmatprep.subr.mxu0 0.0
    %2499 = vmatpush1.msra.mxu0 0.0
    %2500 = vmatprep.subr.mxu0 0.0
    %2501 = vmatpush1.msra.mxu0 0.0
    %2502 = vmatprep.subr.mxu0 0.0
    %2503 = vmatpush1.msra.mxu0 0.0
    %2504 = vmatprep.subr.mxu0 0.0
    %2505 = vmatpush1.msra.mxu0 0.0
    %2506 = vmatprep.subr.mxu0 0.0
    %2507 = vmatpush1.msra.mxu0 0.0
    %2508 = vmatprep.subr.mxu0 0.0
    %2509 = vmatpush1.msra.mxu0 0.0
    %2510 = vmatprep.subr.mxu0 0.0
    %2511 = vmatpush1.msra.mxu0 %v2476
    %2512 = vmatprep.subr.mxu0 0.0
    %2513 = vmatpush1.msra.mxu0 %v2475
    %2514 = vmatprep.subr.mxu0 0.0
    %2515 = vmatpush2.msra.mxu0 0.0
    %2516 = vmatprep.subr.mxu0 0.0
    %2517 = vmatpush2.msra.mxu0 0.0
    %2518 = vmatprep.subr.mxu0 0.0
    %2519 = vmatpush2.msra.mxu0 0.0
    %2520 = vmatprep.subr.mxu0 0.0
    %2521 = vmatpush2.msra.mxu0 0.0
    %2522 = vmatprep.subr.mxu0 0.0
    %2523 = vmatpush2.msra.mxu0 0.0
    %2524 = vmatprep.subr.mxu0 0.0
    %2525 = vmatpush2.msra.mxu0 0.0
    %2526 = vmatprep.subr.mxu0 0.0
    %2527 = vmatpush2.msra.mxu0 0.0
    %2528 = vmatprep.subr.mxu0 0.0
    %2529 = vmatpush2.msra.mxu0 0.0
    %2530 = vmatprep.subr.mxu0 0.0
    %2531 = vmatpush2.msra.mxu0 0.0
    %2532 = vmatprep.subr.mxu0 0.0
    %2533 = vmatpush2.msra.mxu0 0.0
    %2534 = vmatprep.subr.mxu0 0.0
    %2535 = vmatpush2.msra.mxu0 0.0
    %2536 = vmatprep.subr.mxu0 0.0
    %2537 = vmatpush2.msra.mxu0 0.0
    %2538 = vmatprep.subr.mxu0 0.0
    %2539 = vmatpush2.msra.mxu0 0.0
    %2540 = vmatprep.subr.mxu0 0.0
    %2541 = vmatpush2.msra.mxu0 0.0
    %2542 = vmatprep.subr.mxu0 0.0
    %2543 = vmatpush2.msra.mxu0 0.0
    %2544 = vmatprep.subr.mxu0 0.0
    %2545 = vmatpush2.msra.mxu0 0.0
    %2546 = vmatprep.mubr.f32.mxu0 0.0
    %2547 = vmatmul.mubr.f32.gmra.mxu0 %v2480
    %v2548 = vpop.f32.mrf.mxu0
    %v2549 = vadd.f32 0.0, %v2548
    %v2550 = vpop.f32.mrf.mxu0
    %2551 = vdwg.mxu0
    %v2553 = vsel %vm2276, %v2474, 0
    %2555 = vmatprep.subr.mxu0 0.0
    %2556 = vmatpush1.msra.mxu0 0.0
    %2557 = vmatprep.subr.mxu0 0.0
    %2558 = vmatpush1.msra.mxu0 0.0
    %2559 = vmatprep.subr.mxu0 0.0
    %2560 = vmatpush1.msra.mxu0 0.0
    %2561 = vmatprep.subr.mxu0 0.0
    %2562 = vmatpush1.msra.mxu0 0.0
    %2563 = vmatprep.subr.mxu0 0.0
    %2564 = vmatpush1.msra.mxu0 0.0
    %2565 = vmatprep.subr.mxu0 0.0
    %2566 = vmatpush1.msra.mxu0 0.0
    %2567 = vmatprep.subr.mxu0 0.0
    %2568 = vmatpush1.msra.mxu0 0.0
    %2569 = vmatprep.subr.mxu0 0.0
    %2570 = vmatpush1.msra.mxu0 0.0
    %2571 = vmatprep.subr.mxu0 0.0
    %2572 = vmatpush1.msra.mxu0 0.0
    %2573 = vmatprep.subr.mxu0 0.0
    %2574 = vmatpush1.msra.mxu0 0.0
    %2575 = vmatprep.subr.mxu0 0.0
    %2576 = vmatpush1.msra.mxu0 0.0
    %2577 = vmatprep.subr.mxu0 0.0
    %2578 = vmatpush1.msra.mxu0 0.0
    %2579 = vmatprep.subr.mxu0 0.0
    %2580 = vmatpush1.msra.mxu0 0.0
    %2581 = vmatprep.subr.mxu0 0.0
    %2582 = vmatpush1.msra.mxu0 0.0
    %2583 = vmatprep.subr.mxu0 0.0
    %2584 = vmatpush1.msra.mxu0 %v2478
    %2585 = vmatprep.subr.mxu0 0.0
    %2586 = vmatpush1.msra.mxu0 %v2477
    %2587 = vmatprep.subr.mxu0 0.0
    %2588 = vmatpush2.msra.mxu0 0.0
    %2589 = vmatprep.subr.mxu0 0.0
    %2590 = vmatpush2.msra.mxu0 0.0
    %2591 = vmatprep.subr.mxu0 0.0
    %2592 = vmatpush2.msra.mxu0 0.0
    %2593 = vmatprep.subr.mxu0 0.0
    %2594 = vmatpush2.msra.mxu0 0.0
    %2595 = vmatprep.subr.mxu0 0.0
    %2596 = vmatpush2.msra.mxu0 0.0
    %2597 = vmatprep.subr.mxu0 0.0
    %2598 = vmatpush2.msra.mxu0 0.0
    %2599 = vmatprep.subr.mxu0 0.0
    %2600 = vmatpush2.msra.mxu0 0.0
    %2601 = vmatprep.subr.mxu0 0.0
    %2602 = vmatpush2.msra.mxu0 0.0
    %2603 = vmatprep.subr.mxu0 0.0
    %2604 = vmatpush2.msra.mxu0 0.0
    %2605 = vmatprep.subr.mxu0 0.0
    %2606 = vmatpush2.msra.mxu0 0.0
    %2607 = vmatprep.subr.mxu0 0.0
    %2608 = vmatpush2.msra.mxu0 0.0
    %2609 = vmatprep.subr.mxu0 0.0
    %2610 = vmatpush2.msra.mxu0 0.0
    %2611 = vmatprep.subr.mxu0 0.0
    %2612 = vmatpush2.msra.mxu0 0.0
    %2613 = vmatprep.subr.mxu0 0.0
    %2614 = vmatpush2.msra.mxu0 0.0
    %2615 = vmatprep.subr.mxu0 0.0
    %2616 = vmatpush2.msra.mxu0 0.0
    %2617 = vmatprep.subr.mxu0 0.0
    %2618 = vmatpush2.msra.mxu0 0.0
    %2619 = vmatprep.mubr.f32.mxu0 0.0
    %2620 = vmatmul.mubr.f32.gmra.mxu0 %v2553
    %v2621 = vpop.f32.mrf.mxu0
    %v2622 = vadd.f32 0.0, %v2621
    %v2623 = vpop.f32.mrf.mxu0
    %2624 = vdwg.mxu0
    %v2626 = vsel %vm2276, %v2296, 0
    %2628 = vmatprep.subr.mxu0 0.0
    %2629 = vmatpush1.msra.mxu0 0.0
    %2630 = vmatprep.subr.mxu0 0.0
    %2631 = vmatpush1.msra.mxu0 0.0
    %2632 = vmatprep.subr.mxu0 0.0
    %2633 = vmatpush1.msra.mxu0 0.0
    %2634 = vmatprep.subr.mxu0 0.0
    %2635 = vmatpush1.msra.mxu0 0.0
    %2636 = vmatprep.subr.mxu0 0.0
    %2637 = vmatpush1.msra.mxu0 0.0
    %2638 = vmatprep.subr.mxu0 0.0
    %2639 = vmatpush1.msra.mxu0 0.0
    %2640 = vmatprep.subr.mxu0 0.0
    %2641 = vmatpush1.msra.mxu0 0.0
    %2642 = vmatprep.subr.mxu0 0.0
    %2643 = vmatpush1.msra.mxu0 0.0
    %2644 = vmatprep.subr.mxu0 0.0
    %2645 = vmatpush1.msra.mxu0 0.0
    %2646 = vmatprep.subr.mxu0 0.0
    %2647 = vmatpush1.msra.mxu0 0.0
    %2648 = vmatprep.subr.mxu0 0.0
    %2649 = vmatpush1.msra.mxu0 0.0
    %2650 = vmatprep.subr.mxu0 0.0
    %2651 = vmatpush1.msra.mxu0 0.0
    %2652 = vmatprep.subr.mxu0 0.0
    %2653 = vmatpush1.msra.mxu0 0.0
    %2654 = vmatprep.subr.mxu0 0.0
    %2655 = vmatpush1.msra.mxu0 0.0
    %2656 = vmatprep.subr.mxu0 0.0
    %2657 = vmatpush1.msra.mxu0 %v2300
    %2658 = vmatprep.subr.mxu0 0.0
    %2659 = vmatpush1.msra.mxu0 %v2299
    %2660 = vmatprep.subr.mxu0 0.0
    %2661 = vmatpush2.msra.mxu0 0.0
    %2662 = vmatprep.subr.mxu0 0.0
    %2663 = vmatpush2.msra.mxu0 0.0
    %2664 = vmatprep.subr.mxu0 0.0
    %2665 = vmatpush2.msra.mxu0 0.0
    %2666 = vmatprep.subr.mxu0 0.0
    %2667 = vmatpush2.msra.mxu0 0.0
    %2668 = vmatprep.subr.mxu0 0.0
    %2669 = vmatpush2.msra.mxu0 0.0
    %2670 = vmatprep.subr.mxu0 0.0
    %2671 = vmatpush2.msra.mxu0 0.0
    %2672 = vmatprep.subr.mxu0 0.0
    %2673 = vmatpush2.msra.mxu0 0.0
    %2674 = vmatprep.subr.mxu0 0.0
    %2675 = vmatpush2.msra.mxu0 0.0
    %2676 = vmatprep.subr.mxu0 0.0
    %2677 = vmatpush2.msra.mxu0 0.0
    %2678 = vmatprep.subr.mxu0 0.0
    %2679 = vmatpush2.msra.mxu0 0.0
    %2680 = vmatprep.subr.mxu0 0.0
    %2681 = vmatpush2.msra.mxu0 0.0
    %2682 = vmatprep.subr.mxu0 0.0
    %2683 = vmatpush2.msra.mxu0 0.0
    %2684 = vmatprep.subr.mxu0 0.0
    %2685 = vmatpush2.msra.mxu0 0.0
    %2686 = vmatprep.subr.mxu0 0.0
    %2687 = vmatpush2.msra.mxu0 0.0
    %2688 = vmatprep.subr.mxu0 0.0
    %2689 = vmatpush2.msra.mxu0 0.0
    %2690 = vmatprep.subr.mxu0 0.0
    %2691 = vmatpush2.msra.mxu0 0.0
    %2692 = vmatprep.mubr.f32.mxu0 0.0
    %2693 = vmatmul.mubr.f32.gmra.mxu0 %v2626
    %v2694 = vpop.f32.mrf.mxu0
    %v2695 = vadd.f32 %v2549, %v2694
    %v2696 = vpop.f32.mrf.mxu0
    %2697 = vdwg.mxu0
    %v2699 = vsel %vm2276, %v2298, 0
    %2701 = vmatprep.subr.mxu0 0.0
    %2702 = vmatpush1.msra.mxu0 0.0
    %2703 = vmatprep.subr.mxu0 0.0
    %2704 = vmatpush1.msra.mxu0 0.0
    %2705 = vmatprep.subr.mxu0 0.0
    %2706 = vmatpush1.msra.mxu0 0.0
    %2707 = vmatprep.subr.mxu0 0.0
    %2708 = vmatpush1.msra.mxu0 0.0
    %2709 = vmatprep.subr.mxu0 0.0
    %2710 = vmatpush1.msra.mxu0 0.0
    %2711 = vmatprep.subr.mxu0 0.0
    %2712 = vmatpush1.msra.mxu0 0.0
    %2713 = vmatprep.subr.mxu0 0.0
    %2714 = vmatpush1.msra.mxu0 0.0
    %2715 = vmatprep.subr.mxu0 0.0
    %2716 = vmatpush1.msra.mxu0 0.0
    %2717 = vmatprep.subr.mxu0 0.0
    %2718 = vmatpush1.msra.mxu0 0.0
    %2719 = vmatprep.subr.mxu0 0.0
    %2720 = vmatpush1.msra.mxu0 0.0
    %2721 = vmatprep.subr.mxu0 0.0
    %2722 = vmatpush1.msra.mxu0 0.0
    %2723 = vmatprep.subr.mxu0 0.0
    %2724 = vmatpush1.msra.mxu0 0.0
    %2725 = vmatprep.subr.mxu0 0.0
    %2726 = vmatpush1.msra.mxu0 0.0
    %2727 = vmatprep.subr.mxu0 0.0
    %2728 = vmatpush1.msra.mxu0 0.0
    %2729 = vmatprep.subr.mxu0 0.0
    %2730 = vmatpush1.msra.mxu0 %v2302
    %2731 = vmatprep.subr.mxu0 0.0
    %2732 = vmatpush1.msra.mxu0 %v2301
    %2733 = vmatprep.subr.mxu0 0.0
    %2734 = vmatpush2.msra.mxu0 0.0
    %2735 = vmatprep.subr.mxu0 0.0
    %2736 = vmatpush2.msra.mxu0 0.0
    %2737 = vmatprep.subr.mxu0 0.0
    %2738 = vmatpush2.msra.mxu0 0.0
    %2739 = vmatprep.subr.mxu0 0.0
    %2740 = vmatpush2.msra.mxu0 0.0
    %2741 = vmatprep.subr.mxu0 0.0
    %2742 = vmatpush2.msra.mxu0 0.0
    %2743 = vmatprep.subr.mxu0 0.0
    %2744 = vmatpush2.msra.mxu0 0.0
    %2745 = vmatprep.subr.mxu0 0.0
    %2746 = vmatpush2.msra.mxu0 0.0
    %2747 = vmatprep.subr.mxu0 0.0
    %2748 = vmatpush2.msra.mxu0 0.0
    %2749 = vmatprep.subr.mxu0 0.0
    %2750 = vmatpush2.msra.mxu0 0.0
    %2751 = vmatprep.subr.mxu0 0.0
    %2752 = vmatpush2.msra.mxu0 0.0
    %2753 = vmatprep.subr.mxu0 0.0
    %2754 = vmatpush2.msra.mxu0 0.0
    %2755 = vmatprep.subr.mxu0 0.0
    %2756 = vmatpush2.msra.mxu0 0.0
    %2757 = vmatprep.subr.mxu0 0.0
    %2758 = vmatpush2.msra.mxu0 0.0
    %2759 = vmatprep.subr.mxu0 0.0
    %2760 = vmatpush2.msra.mxu0 0.0
    %2761 = vmatprep.subr.mxu0 0.0
    %2762 = vmatpush2.msra.mxu0 0.0
    %2763 = vmatprep.subr.mxu0 0.0
    %2764 = vmatpush2.msra.mxu0 0.0
    %2765 = vmatprep.mubr.f32.mxu0 0.0
    %2766 = vmatmul.mubr.f32.gmra.mxu0 %v2699
    %v2767 = vpop.f32.mrf.mxu0
    %v2768 = vadd.f32 %v2622, %v2767
    %v2769 = vpop.f32.mrf.mxu0
    %2770 = vdwg.mxu0
    %v2771 = vmul.f32 %v1888, %v177
    %v2772 = vmul.f32 %v1893, %v177
    %v2774 = vsel %vm189, %v2771, 0
    %2776 = vmatprep.subr.mxu0 0.0
    %2777 = vmatpush1.xpose.msra.mxu0 0.0
    %2778 = vmatprep.subr.mxu0 0.0
    %2779 = vmatpush1.xpose.msra.mxu0 0.0
    %2780 = vmatprep.subr.mxu0 0.0
    %2781 = vmatpush1.xpose.msra.mxu0 0.0
    %2782 = vmatprep.subr.mxu0 0.0
    %2783 = vmatpush1.xpose.msra.mxu0 0.0
    %2784 = vmatprep.subr.mxu0 0.0
    %2785 = vmatpush1.xpose.msra.mxu0 0.0
    %2786 = vmatprep.subr.mxu0 0.0
    %2787 = vmatpush1.xpose.msra.mxu0 0.0
    %2788 = vmatprep.subr.mxu0 0.0
    %2789 = vmatpush1.xpose.msra.mxu0 0.0
    %2790 = vmatprep.subr.mxu0 0.0
    %2791 = vmatpush1.xpose.msra.mxu0 0.0
    %2792 = vmatprep.subr.mxu0 0.0
    %2793 = vmatpush1.xpose.msra.mxu0 0.0
    %2794 = vmatprep.subr.mxu0 0.0
    %2795 = vmatpush1.xpose.msra.mxu0 0.0
    %2796 = vmatprep.subr.mxu0 0.0
    %2797 = vmatpush1.xpose.msra.mxu0 0.0
    %2798 = vmatprep.subr.mxu0 0.0
    %2799 = vmatpush1.xpose.msra.mxu0 0.0
    %2800 = vmatprep.subr.mxu0 0.0
    %2801 = vmatpush1.xpose.msra.mxu0 0.0
    %2802 = vmatprep.subr.mxu0 0.0
    %2803 = vmatpush1.xpose.msra.mxu0 0.0
    %2804 = vmatprep.subr.mxu0 0.0
    %2805 = vmatpush1.xpose.msra.mxu0 %v2123
    %2806 = vmatprep.subr.mxu0 0.0
    %2807 = vmatpush1.xpose.msra.mxu0 %v2120
    %2808 = vmatprep.subr.mxu0 0.0
    %2809 = vmatpush2.xpose.msra.mxu0 0.0
    %2810 = vmatprep.subr.mxu0 0.0
    %2811 = vmatpush2.xpose.msra.mxu0 0.0
    %2812 = vmatprep.subr.mxu0 0.0
    %2813 = vmatpush2.xpose.msra.mxu0 0.0
    %2814 = vmatprep.subr.mxu0 0.0
    %2815 = vmatpush2.xpose.msra.mxu0 0.0
    %2816 = vmatprep.subr.mxu0 0.0
    %2817 = vmatpush2.xpose.msra.mxu0 0.0
    %2818 = vmatprep.subr.mxu0 0.0
    %2819 = vmatpush2.xpose.msra.mxu0 0.0
    %2820 = vmatprep.subr.mxu0 0.0
    %2821 = vmatpush2.xpose.msra.mxu0 0.0
    %2822 = vmatprep.subr.mxu0 0.0
    %2823 = vmatpush2.xpose.msra.mxu0 0.0
    %2824 = vmatprep.subr.mxu0 0.0
    %2825 = vmatpush2.xpose.msra.mxu0 0.0
    %2826 = vmatprep.subr.mxu0 0.0
    %2827 = vmatpush2.xpose.msra.mxu0 0.0
    %2828 = vmatprep.subr.mxu0 0.0
    %2829 = vmatpush2.xpose.msra.mxu0 0.0
    %2830 = vmatprep.subr.mxu0 0.0
    %2831 = vmatpush2.xpose.msra.mxu0 0.0
    %2832 = vmatprep.subr.mxu0 0.0
    %2833 = vmatpush2.xpose.msra.mxu0 0.0
    %2834 = vmatprep.subr.mxu0 0.0
    %2835 = vmatpush2.xpose.msra.mxu0 0.0
    %2836 = vmatprep.subr.mxu0 0.0
    %2837 = vmatpush2.xpose.msra.mxu0 0.0
    %2838 = vmatprep.subr.mxu0 0.0
    %2839 = vmatpush2.xpose.msra.mxu0 0.0
    %2840 = vmatprep.mubr.f32.mxu0 0.0
    %2841 = vmatmul.mubr.f32.gmra.mxu0 %v2774
    %v2842 = vpop.f32.mrf.mxu0
    %v2843 = vadd.f32 0.0, %v2842
    %v2844 = vpop.f32.mrf.mxu0
    %2845 = vdwg.mxu0
    %v2847 = vsel %vm189, %v2772, 0
    %2849 = vmatprep.subr.mxu0 0.0
    %2850 = vmatpush1.xpose.msra.mxu0 0.0
    %2851 = vmatprep.subr.mxu0 0.0
    %2852 = vmatpush1.xpose.msra.mxu0 0.0
    %2853 = vmatprep.subr.mxu0 0.0
    %2854 = vmatpush1.xpose.msra.mxu0 0.0
    %2855 = vmatprep.subr.mxu0 0.0
    %2856 = vmatpush1.xpose.msra.mxu0 0.0
    %2857 = vmatprep.subr.mxu0 0.0
    %2858 = vmatpush1.xpose.msra.mxu0 0.0
    %2859 = vmatprep.subr.mxu0 0.0
    %2860 = vmatpush1.xpose.msra.mxu0 0.0
    %2861 = vmatprep.subr.mxu0 0.0
    %2862 = vmatpush1.xpose.msra.mxu0 0.0
    %2863 = vmatprep.subr.mxu0 0.0
    %2864 = vmatpush1.xpose.msra.mxu0 0.0
    %2865 = vmatprep.subr.mxu0 0.0
    %2866 = vmatpush1.xpose.msra.mxu0 0.0
    %2867 = vmatprep.subr.mxu0 0.0
    %2868 = vmatpush1.xpose.msra.mxu0 0.0
    %2869 = vmatprep.subr.mxu0 0.0
    %2870 = vmatpush1.xpose.msra.mxu0 0.0
    %2871 = vmatprep.subr.mxu0 0.0
    %2872 = vmatpush1.xpose.msra.mxu0 0.0
    %2873 = vmatprep.subr.mxu0 0.0
    %2874 = vmatpush1.xpose.msra.mxu0 0.0
    %2875 = vmatprep.subr.mxu0 0.0
    %2876 = vmatpush1.xpose.msra.mxu0 0.0
    %2877 = vmatprep.subr.mxu0 0.0
    %2878 = vmatpush1.xpose.msra.mxu0 %v2202
    %2879 = vmatprep.subr.mxu0 0.0
    %2880 = vmatpush1.xpose.msra.mxu0 %v2199
    %2881 = vmatprep.subr.mxu0 0.0
    %2882 = vmatpush2.xpose.msra.mxu0 0.0
    %2883 = vmatprep.subr.mxu0 0.0
    %2884 = vmatpush2.xpose.msra.mxu0 0.0
    %2885 = vmatprep.subr.mxu0 0.0
    %2886 = vmatpush2.xpose.msra.mxu0 0.0
    %2887 = vmatprep.subr.mxu0 0.0
    %2888 = vmatpush2.xpose.msra.mxu0 0.0
    %2889 = vmatprep.subr.mxu0 0.0
    %2890 = vmatpush2.xpose.msra.mxu0 0.0
    %2891 = vmatprep.subr.mxu0 0.0
    %2892 = vmatpush2.xpose.msra.mxu0 0.0
    %2893 = vmatprep.subr.mxu0 0.0
    %2894 = vmatpush2.xpose.msra.mxu0 0.0
    %2895 = vmatprep.subr.mxu0 0.0
    %2896 = vmatpush2.xpose.msra.mxu0 0.0
    %2897 = vmatprep.subr.mxu0 0.0
    %2898 = vmatpush2.xpose.msra.mxu0 0.0
    %2899 = vmatprep.subr.mxu0 0.0
    %2900 = vmatpush2.xpose.msra.mxu0 0.0
    %2901 = vmatprep.subr.mxu0 0.0
    %2902 = vmatpush2.xpose.msra.mxu0 0.0
    %2903 = vmatprep.subr.mxu0 0.0
    %2904 = vmatpush2.xpose.msra.mxu0 0.0
    %2905 = vmatprep.subr.mxu0 0.0
    %2906 = vmatpush2.xpose.msra.mxu0 0.0
    %2907 = vmatprep.subr.mxu0 0.0
    %2908 = vmatpush2.xpose.msra.mxu0 0.0
    %2909 = vmatprep.subr.mxu0 0.0
    %2910 = vmatpush2.xpose.msra.mxu0 0.0
    %2911 = vmatprep.subr.mxu0 0.0
    %2912 = vmatpush2.xpose.msra.mxu0 0.0
    %2913 = vmatprep.mubr.f32.mxu0 0.0
    %2914 = vmatmul.mubr.f32.gmra.mxu0 %v2847
    %v2915 = vpop.f32.mrf.mxu0
    %v2916 = vadd.f32 0.0, %v2915
    %v2917 = vpop.f32.mrf.mxu0
    %2918 = vdwg.mxu0
    %v2919 = vmul.f32 %v2843, 0.35355338
    %v2920 = vmul.f32 %v2916, 0.35355338
    %v2921 = vsel %vm2276, %v2919, -inf
    %2922 = vmax.xlane.f32.xlu0 %v2921
    %v2923 = vpop.xlane.xlu0 %2922
    %v2924 = vsel %vm2276, %v2920, -inf
    %2925 = vmax.xlane.f32.xlu0 %v2924
    %v2926 = vpop.xlane.xlu0 %2925
    %v2927 = vsub.f32 %v2919, %v2923
    %v2928 = vsub.f32 %v2920, %v2926
    %v2929 = vmul.f32 %v2927, 1.442695
    %v2930 = vpow.pop %v2929
    %v2931 = vmul.f32 %v2928, 1.442695
    %v2932 = vpow.pop %v2931
    %v2933 = vsel %vm2276, %v2930, 0.0
    %2934 = vadd.xlane.f32.xlu0 %v2933
    %v2935 = vpop.xlane.xlu0 %2934
    %v2936 = vsel %vm2276, %v2932, 0.0
    %2937 = vadd.xlane.f32.xlu0 %v2936
    %v2938 = vpop.xlane.xlu0 %2937
    %v2939 = vrcp.pop %v2935
    %v2940 = vmul.f32 %v2930, %v2939
    %v2941 = vrcp.pop %v2938
    %v2942 = vmul.f32 %v2932, %v2941
    %v2943 = vmul.f32 %v2092, %v177
    %v2944 = vmul.f32 %v2097, %v177
    %v2945 = vmul.f32 %v2102, %v177
    %v2946 = vmul.f32 %v2107, %v177
    %v2948 = vsel %vm2276, %v2940, 0
    %2950 = vmatprep.subr.mxu0 0.0
    %2951 = vmatpush1.msra.mxu0 0.0
    %2952 = vmatprep.subr.mxu0 0.0
    %2953 = vmatpush1.msra.mxu0 0.0
    %2954 = vmatprep.subr.mxu0 0.0
    %2955 = vmatpush1.msra.mxu0 0.0
    %2956 = vmatprep.subr.mxu0 0.0
    %2957 = vmatpush1.msra.mxu0 0.0
    %2958 = vmatprep.subr.mxu0 0.0
    %2959 = vmatpush1.msra.mxu0 0.0
    %2960 = vmatprep.subr.mxu0 0.0
    %2961 = vmatpush1.msra.mxu0 0.0
    %2962 = vmatprep.subr.mxu0 0.0
    %2963 = vmatpush1.msra.mxu0 0.0
    %2964 = vmatprep.subr.mxu0 0.0
    %2965 = vmatpush1.msra.mxu0 0.0
    %2966 = vmatprep.subr.mxu0 0.0
    %2967 = vmatpush1.msra.mxu0 0.0
    %2968 = vmatprep.subr.mxu0 0.0
    %2969 = vmatpush1.msra.mxu0 0.0
    %2970 = vmatprep.subr.mxu0 0.0
    %2971 = vmatpush1.msra.mxu0 0.0
    %2972 = vmatprep.subr.mxu0 0.0
    %2973 = vmatpush1.msra.mxu0 0.0
    %2974 = vmatprep.subr.mxu0 0.0
    %2975 = vmatpush1.msra.mxu0 0.0
    %2976 = vmatprep.subr.mxu0 0.0
    %2977 = vmatpush1.msra.mxu0 0.0
    %2978 = vmatprep.subr.mxu0 0.0
    %2979 = vmatpush1.msra.mxu0 %v2944
    %2980 = vmatprep.subr.mxu0 0.0
    %2981 = vmatpush1.msra.mxu0 %v2943
    %2982 = vmatprep.subr.mxu0 0.0
    %2983 = vmatpush2.msra.mxu0 0.0
    %2984 = vmatprep.subr.mxu0 0.0
    %2985 = vmatpush2.msra.mxu0 0.0
    %2986 = vmatprep.subr.mxu0 0.0
    %2987 = vmatpush2.msra.mxu0 0.0
    %2988 = vmatprep.subr.mxu0 0.0
    %2989 = vmatpush2.msra.mxu0 0.0
    %2990 = vmatprep.subr.mxu0 0.0
    %2991 = vmatpush2.msra.mxu0 0.0
    %2992 = vmatprep.subr.mxu0 0.0
    %2993 = vmatpush2.msra.mxu0 0.0
    %2994 = vmatprep.subr.mxu0 0.0
    %2995 = vmatpush2.msra.mxu0 0.0
    %2996 = vmatprep.subr.mxu0 0.0
    %2997 = vmatpush2.msra.mxu0 0.0
    %2998 = vmatprep.subr.mxu0 0.0
    %2999 = vmatpush2.msra.mxu0 0.0
    %3000 = vmatprep.subr.mxu0 0.0
    %3001 = vmatpush2.msra.mxu0 0.0
    %3002 = vmatprep.subr.mxu0 0.0
    %3003 = vmatpush2.msra.mxu0 0.0
    %3004 = vmatprep.subr.mxu0 0.0
    %3005 = vmatpush2.msra.mxu0 0.0
    %3006 = vmatprep.subr.mxu0 0.0
    %3007 = vmatpush2.msra.mxu0 0.0
    %3008 = vmatprep.subr.mxu0 0.0
    %3009 = vmatpush2.msra.mxu0 0.0
    %3010 = vmatprep.subr.mxu0 0.0
    %3011 = vmatpush2.msra.mxu0 0.0
    %3012 = vmatprep.subr.mxu0 0.0
    %3013 = vmatpush2.msra.mxu0 0.0
    %3014 = vmatprep.mubr.f32.mxu0 0.0
    %3015 = vmatmul.mubr.f32.gmra.mxu0 %v2948
    %v3016 = vpop.f32.mrf.mxu0
    %v3017 = vadd.f32 0.0, %v3016
    %v3018 = vpop.f32.mrf.mxu0
    %3019 = vdwg.mxu0
    %v3021 = vsel %vm2276, %v2942, 0
    %3023 = vmatprep.subr.mxu0 0.0
    %3024 = vmatpush1.msra.mxu0 0.0
    %3025 = vmatprep.subr.mxu0 0.0
    %3026 = vmatpush1.msra.mxu0 0.0
    %3027 = vmatprep.subr.mxu0 0.0
    %3028 = vmatpush1.msra.mxu0 0.0
    %3029 = vmatprep.subr.mxu0 0.0
    %3030 = vmatpush1.msra.mxu0 0.0
    %3031 = vmatprep.subr.mxu0 0.0
    %3032 = vmatpush1.msra.mxu0 0.0
    %3033 = vmatprep.subr.mxu0 0.0
    %3034 = vmatpush1.msra.mxu0 0.0
    %3035 = vmatprep.subr.mxu0 0.0
    %3036 = vmatpush1.msra.mxu0 0.0
    %3037 = vmatprep.subr.mxu0 0.0
    %3038 = vmatpush1.msra.mxu0 0.0
    %3039 = vmatprep.subr.mxu0 0.0
    %3040 = vmatpush1.msra.mxu0 0.0
    %3041 = vmatprep.subr.mxu0 0.0
    %3042 = vmatpush1.msra.mxu0 0.0
    %3043 = vmatprep.subr.mxu0 0.0
    %3044 = vmatpush1.msra.mxu0 0.0
    %3045 = vmatprep.subr.mxu0 0.0
    %3046 = vmatpush1.msra.mxu0 0.0
    %3047 = vmatprep.subr.mxu0 0.0
    %3048 = vmatpush1.msra.mxu0 0.0
    %3049 = vmatprep.subr.mxu0 0.0
    %3050 = vmatpush1.msra.mxu0 0.0
    %3051 = vmatprep.subr.mxu0 0.0
    %3052 = vmatpush1.msra.mxu0 %v2946
    %3053 = vmatprep.subr.mxu0 0.0
    %3054 = vmatpush1.msra.mxu0 %v2945
    %3055 = vmatprep.subr.mxu0 0.0
    %3056 = vmatpush2.msra.mxu0 0.0
    %3057 = vmatprep.subr.mxu0 0.0
    %3058 = vmatpush2.msra.mxu0 0.0
    %3059 = vmatprep.subr.mxu0 0.0
    %3060 = vmatpush2.msra.mxu0 0.0
    %3061 = vmatprep.subr.mxu0 0.0
    %3062 = vmatpush2.msra.mxu0 0.0
    %3063 = vmatprep.subr.mxu0 0.0
    %3064 = vmatpush2.msra.mxu0 0.0
    %3065 = vmatprep.subr.mxu0 0.0
    %3066 = vmatpush2.msra.mxu0 0.0
    %3067 = vmatprep.subr.mxu0 0.0
    %3068 = vmatpush2.msra.mxu0 0.0
    %3069 = vmatprep.subr.mxu0 0.0
    %3070 = vmatpush2.msra.mxu0 0.0
    %3071 = vmatprep.subr.mxu0 0.0
    %3072 = vmatpush2.msra.mxu0 0.0
    %3073 = vmatprep.subr.mxu0 0.0
    %3074 = vmatpush2.msra.mxu0 0.0
    %3075 = vmatprep.subr.mxu0 0.0
    %3076 = vmatpush2.msra.mxu0 0.0
    %3077 = vmatprep.subr.mxu0 0.0
    %3078 = vmatpush2.msra.mxu0 0.0
    %3079 = vmatprep.subr.mxu0 0.0
    %3080 = vmatpush2.msra.mxu0 0.0
    %3081 = vmatprep.subr.mxu0 0.0
    %3082 = vmatpush2.msra.mxu0 0.0
    %3083 = vmatprep.subr.mxu0 0.0
    %3084 = vmatpush2.msra.mxu0 0.0
    %3085 = vmatprep.subr.mxu0 0.0
    %3086 = vmatpush2.msra.mxu0 0.0
    %3087 = vmatprep.mubr.f32.mxu0 0.0
    %3088 = vmatmul.mubr.f32.gmra.mxu0 %v3021
    %v3089 = vpop.f32.mrf.mxu0
    %v3090 = vadd.f32 0.0, %v3089
    %v3091 = vpop.f32.mrf.mxu0
    %3092 = vdwg.mxu0
    %v3093 = vadd.f32 %v2695, %v3017
    %v3094 = vadd.f32 %v2768, %v3090
    %v3095 = vmul.f32 %v1888, %v182
    %v3096 = vmul.f32 %v1893, %v182
    %v3098 = vsel %vm189, %v3095, 0
    %3100 = vmatprep.subr.mxu0 0.0
    %3101 = vmatpush1.xpose.msra.mxu0 0.0
    %3102 = vmatprep.subr.mxu0 0.0
    %3103 = vmatpush1.xpose.msra.mxu0 0.0
    %3104 = vmatprep.subr.mxu0 0.0
    %3105 = vmatpush1.xpose.msra.mxu0 0.0
    %3106 = vmatprep.subr.mxu0 0.0
    %3107 = vmatpush1.xpose.msra.mxu0 0.0
    %3108 = vmatprep.subr.mxu0 0.0
    %3109 = vmatpush1.xpose.msra.mxu0 0.0
    %3110 = vmatprep.subr.mxu0 0.0
    %3111 = vmatpush1.xpose.msra.mxu0 0.0
    %3112 = vmatprep.subr.mxu0 0.0
    %3113 = vmatpush1.xpose.msra.mxu0 0.0
    %3114 = vmatprep.subr.mxu0 0.0
    %3115 = vmatpush1.xpose.msra.mxu0 0.0
    %3116 = vmatprep.subr.mxu0 0.0
    %3117 = vmatpush1.xpose.msra.mxu0 0.0
    %3118 = vmatprep.subr.mxu0 0.0
    %3119 = vmatpush1.xpose.msra.mxu0 0.0
    %3120 = vmatprep.subr.mxu0 0.0
    %3121 = vmatpush1.xpose.msra.mxu0 0.0
    %3122 = vmatprep.subr.mxu0 0.0
    %3123 = vmatpush1.xpose.msra.mxu0 0.0
    %3124 = vmatprep.subr.mxu0 0.0
    %3125 = vmatpush1.xpose.msra.mxu0 0.0
    %3126 = vmatprep.subr.mxu0 0.0
    %3127 = vmatpush1.xpose.msra.mxu0 0.0
    %3128 = vmatprep.subr.mxu0 0.0
    %3129 = vmatpush1.xpose.msra.mxu0 %v2123
    %3130 = vmatprep.subr.mxu0 0.0
    %3131 = vmatpush1.xpose.msra.mxu0 %v2120
    %3132 = vmatprep.subr.mxu0 0.0
    %3133 = vmatpush2.xpose.msra.mxu0 0.0
    %3134 = vmatprep.subr.mxu0 0.0
    %3135 = vmatpush2.xpose.msra.mxu0 0.0
    %3136 = vmatprep.subr.mxu0 0.0
    %3137 = vmatpush2.xpose.msra.mxu0 0.0
    %3138 = vmatprep.subr.mxu0 0.0
    %3139 = vmatpush2.xpose.msra.mxu0 0.0
    %3140 = vmatprep.subr.mxu0 0.0
    %3141 = vmatpush2.xpose.msra.mxu0 0.0
    %3142 = vmatprep.subr.mxu0 0.0
    %3143 = vmatpush2.xpose.msra.mxu0 0.0
    %3144 = vmatprep.subr.mxu0 0.0
    %3145 = vmatpush2.xpose.msra.mxu0 0.0
    %3146 = vmatprep.subr.mxu0 0.0
    %3147 = vmatpush2.xpose.msra.mxu0 0.0
    %3148 = vmatprep.subr.mxu0 0.0
    %3149 = vmatpush2.xpose.msra.mxu0 0.0
    %3150 = vmatprep.subr.mxu0 0.0
    %3151 = vmatpush2.xpose.msra.mxu0 0.0
    %3152 = vmatprep.subr.mxu0 0.0
    %3153 = vmatpush2.xpose.msra.mxu0 0.0
    %3154 = vmatprep.subr.mxu0 0.0
    %3155 = vmatpush2.xpose.msra.mxu0 0.0
    %3156 = vmatprep.subr.mxu0 0.0
    %3157 = vmatpush2.xpose.msra.mxu0 0.0
    %3158 = vmatprep.subr.mxu0 0.0
    %3159 = vmatpush2.xpose.msra.mxu0 0.0
    %3160 = vmatprep.subr.mxu0 0.0
    %3161 = vmatpush2.xpose.msra.mxu0 0.0
    %3162 = vmatprep.subr.mxu0 0.0
    %3163 = vmatpush2.xpose.msra.mxu0 0.0
    %3164 = vmatprep.mubr.f32.mxu0 0.0
    %3165 = vmatmul.mubr.f32.gmra.mxu0 %v3098
    %v3166 = vpop.f32.mrf.mxu0
    %v3167 = vadd.f32 0.0, %v3166
    %v3168 = vpop.f32.mrf.mxu0
    %3169 = vdwg.mxu0
    %v3171 = vsel %vm189, %v3096, 0
    %3173 = vmatprep.subr.mxu0 0.0
    %3174 = vmatpush1.xpose.msra.mxu0 0.0
    %3175 = vmatprep.subr.mxu0 0.0
    %3176 = vmatpush1.xpose.msra.mxu0 0.0
    %3177 = vmatprep.subr.mxu0 0.0
    %3178 = vmatpush1.xpose.msra.mxu0 0.0
    %3179 = vmatprep.subr.mxu0 0.0
    %3180 = vmatpush1.xpose.msra.mxu0 0.0
    %3181 = vmatprep.subr.mxu0 0.0
    %3182 = vmatpush1.xpose.msra.mxu0 0.0
    %3183 = vmatprep.subr.mxu0 0.0
    %3184 = vmatpush1.xpose.msra.mxu0 0.0
    %3185 = vmatprep.subr.mxu0 0.0
    %3186 = vmatpush1.xpose.msra.mxu0 0.0
    %3187 = vmatprep.subr.mxu0 0.0
    %3188 = vmatpush1.xpose.msra.mxu0 0.0
    %3189 = vmatprep.subr.mxu0 0.0
    %3190 = vmatpush1.xpose.msra.mxu0 0.0
    %3191 = vmatprep.subr.mxu0 0.0
    %3192 = vmatpush1.xpose.msra.mxu0 0.0
    %3193 = vmatprep.subr.mxu0 0.0
    %3194 = vmatpush1.xpose.msra.mxu0 0.0
    %3195 = vmatprep.subr.mxu0 0.0
    %3196 = vmatpush1.xpose.msra.mxu0 0.0
    %3197 = vmatprep.subr.mxu0 0.0
    %3198 = vmatpush1.xpose.msra.mxu0 0.0
    %3199 = vmatprep.subr.mxu0 0.0
    %3200 = vmatpush1.xpose.msra.mxu0 0.0
    %3201 = vmatprep.subr.mxu0 0.0
    %3202 = vmatpush1.xpose.msra.mxu0 %v2202
    %3203 = vmatprep.subr.mxu0 0.0
    %3204 = vmatpush1.xpose.msra.mxu0 %v2199
    %3205 = vmatprep.subr.mxu0 0.0
    %3206 = vmatpush2.xpose.msra.mxu0 0.0
    %3207 = vmatprep.subr.mxu0 0.0
    %3208 = vmatpush2.xpose.msra.mxu0 0.0
    %3209 = vmatprep.subr.mxu0 0.0
    %3210 = vmatpush2.xpose.msra.mxu0 0.0
    %3211 = vmatprep.subr.mxu0 0.0
    %3212 = vmatpush2.xpose.msra.mxu0 0.0
    %3213 = vmatprep.subr.mxu0 0.0
    %3214 = vmatpush2.xpose.msra.mxu0 0.0
    %3215 = vmatprep.subr.mxu0 0.0
    %3216 = vmatpush2.xpose.msra.mxu0 0.0
    %3217 = vmatprep.subr.mxu0 0.0
    %3218 = vmatpush2.xpose.msra.mxu0 0.0
    %3219 = vmatprep.subr.mxu0 0.0
    %3220 = vmatpush2.xpose.msra.mxu0 0.0
    %3221 = vmatprep.subr.mxu0 0.0
    %3222 = vmatpush2.xpose.msra.mxu0 0.0
    %3223 = vmatprep.subr.mxu0 0.0
    %3224 = vmatpush2.xpose.msra.mxu0 0.0
    %3225 = vmatprep.subr.mxu0 0.0
    %3226 = vmatpush2.xpose.msra.mxu0 0.0
    %3227 = vmatprep.subr.mxu0 0.0
    %3228 = vmatpush2.xpose.msra.mxu0 0.0
    %3229 = vmatprep.subr.mxu0 0.0
    %3230 = vmatpush2.xpose.msra.mxu0 0.0
    %3231 = vmatprep.subr.mxu0 0.0
    %3232 = vmatpush2.xpose.msra.mxu0 0.0
    %3233 = vmatprep.subr.mxu0 0.0
    %3234 = vmatpush2.xpose.msra.mxu0 0.0
    %3235 = vmatprep.subr.mxu0 0.0
    %3236 = vmatpush2.xpose.msra.mxu0 0.0
    %3237 = vmatprep.mubr.f32.mxu0 0.0
    %3238 = vmatmul.mubr.f32.gmra.mxu0 %v3171
    %v3239 = vpop.f32.mrf.mxu0
    %v3240 = vadd.f32 0.0, %v3239
    %v3241 = vpop.f32.mrf.mxu0
    %3242 = vdwg.mxu0
    %v3243 = vmul.f32 %v3167, 0.35355338
    %v3244 = vmul.f32 %v3240, 0.35355338
    %v3245 = vsel %vm2276, %v3243, -inf
    %3246 = vmax.xlane.f32.xlu0 %v3245
    %v3247 = vpop.xlane.xlu0 %3246
    %v3248 = vsel %vm2276, %v3244, -inf
    %3249 = vmax.xlane.f32.xlu0 %v3248
    %v3250 = vpop.xlane.xlu0 %3249
    %v3251 = vsub.f32 %v3243, %v3247
    %v3252 = vsub.f32 %v3244, %v3250
    %v3253 = vmul.f32 %v3251, 1.442695
    %v3254 = vpow.pop %v3253
    %v3255 = vmul.f32 %v3252, 1.442695
    %v3256 = vpow.pop %v3255
    %v3257 = vsel %vm2276, %v3254, 0.0
    %3258 = vadd.xlane.f32.xlu0 %v3257
    %v3259 = vpop.xlane.xlu0 %3258
    %v3260 = vsel %vm2276, %v3256, 0.0
    %3261 = vadd.xlane.f32.xlu0 %v3260
    %v3262 = vpop.xlane.xlu0 %3261
    %v3263 = vrcp.pop %v3259
    %v3264 = vmul.f32 %v3254, %v3263
    %v3265 = vrcp.pop %v3262
    %v3266 = vmul.f32 %v3256, %v3265
    %v3267 = vmul.f32 %v2092, %v182
    %v3268 = vmul.f32 %v2097, %v182
    %v3269 = vmul.f32 %v2102, %v182
    %v3270 = vmul.f32 %v2107, %v182
    %v3272 = vsel %vm2276, %v3264, 0
    %3274 = vmatprep.subr.mxu0 0.0
    %3275 = vmatpush1.msra.mxu0 0.0
    %3276 = vmatprep.subr.mxu0 0.0
    %3277 = vmatpush1.msra.mxu0 0.0
    %3278 = vmatprep.subr.mxu0 0.0
    %3279 = vmatpush1.msra.mxu0 0.0
    %3280 = vmatprep.subr.mxu0 0.0
    %3281 = vmatpush1.msra.mxu0 0.0
    %3282 = vmatprep.subr.mxu0 0.0
    %3283 = vmatpush1.msra.mxu0 0.0
    %3284 = vmatprep.subr.mxu0 0.0
    %3285 = vmatpush1.msra.mxu0 0.0
    %3286 = vmatprep.subr.mxu0 0.0
    %3287 = vmatpush1.msra.mxu0 0.0
    %3288 = vmatprep.subr.mxu0 0.0
    %3289 = vmatpush1.msra.mxu0 0.0
    %3290 = vmatprep.subr.mxu0 0.0
    %3291 = vmatpush1.msra.mxu0 0.0
    %3292 = vmatprep.subr.mxu0 0.0
    %3293 = vmatpush1.msra.mxu0 0.0
    %3294 = vmatprep.subr.mxu0 0.0
    %3295 = vmatpush1.msra.mxu0 0.0
    %3296 = vmatprep.subr.mxu0 0.0
    %3297 = vmatpush1.msra.mxu0 0.0
    %3298 = vmatprep.subr.mxu0 0.0
    %3299 = vmatpush1.msra.mxu0 0.0
    %3300 = vmatprep.subr.mxu0 0.0
    %3301 = vmatpush1.msra.mxu0 0.0
    %3302 = vmatprep.subr.mxu0 0.0
    %3303 = vmatpush1.msra.mxu0 %v3268
    %3304 = vmatprep.subr.mxu0 0.0
    %3305 = vmatpush1.msra.mxu0 %v3267
    %3306 = vmatprep.subr.mxu0 0.0
    %3307 = vmatpush2.msra.mxu0 0.0
    %3308 = vmatprep.subr.mxu0 0.0
    %3309 = vmatpush2.msra.mxu0 0.0
    %3310 = vmatprep.subr.mxu0 0.0
    %3311 = vmatpush2.msra.mxu0 0.0
    %3312 = vmatprep.subr.mxu0 0.0
    %3313 = vmatpush2.msra.mxu0 0.0
    %3314 = vmatprep.subr.mxu0 0.0
    %3315 = vmatpush2.msra.mxu0 0.0
    %3316 = vmatprep.subr.mxu0 0.0
    %3317 = vmatpush2.msra.mxu0 0.0
    %3318 = vmatprep.subr.mxu0 0.0
    %3319 = vmatpush2.msra.mxu0 0.0
    %3320 = vmatprep.subr.mxu0 0.0
    %3321 = vmatpush2.msra.mxu0 0.0
    %3322 = vmatprep.subr.mxu0 0.0
    %3323 = vmatpush2.msra.mxu0 0.0
    %3324 = vmatprep.subr.mxu0 0.0
    %3325 = vmatpush2.msra.mxu0 0.0
    %3326 = vmatprep.subr.mxu0 0.0
    %3327 = vmatpush2.msra.mxu0 0.0
    %3328 = vmatprep.subr.mxu0 0.0
    %3329 = vmatpush2.msra.mxu0 0.0
    %3330 = vmatprep.subr.mxu0 0.0
    %3331 = vmatpush2.msra.mxu0 0.0
    %3332 = vmatprep.subr.mxu0 0.0
    %3333 = vmatpush2.msra.mxu0 0.0
    %3334 = vmatprep.subr.mxu0 0.0
    %3335 = vmatpush2.msra.mxu0 0.0
    %3336 = vmatprep.subr.mxu0 0.0
    %3337 = vmatpush2.msra.mxu0 0.0
    %3338 = vmatprep.mubr.f32.mxu0 0.0
    %3339 = vmatmul.mubr.f32.gmra.mxu0 %v3272
    %v3340 = vpop.f32.mrf.mxu0
    %v3341 = vadd.f32 0.0, %v3340
    %v3342 = vpop.f32.mrf.mxu0
    %3343 = vdwg.mxu0
    %v3345 = vsel %vm2276, %v3266, 0
    %3347 = vmatprep.subr.mxu0 0.0
    %3348 = vmatpush1.msra.mxu0 0.0
    %3349 = vmatprep.subr.mxu0 0.0
    %3350 = vmatpush1.msra.mxu0 0.0
    %3351 = vmatprep.subr.mxu0 0.0
    %3352 = vmatpush1.msra.mxu0 0.0
    %3353 = vmatprep.subr.mxu0 0.0
    %3354 = vmatpush1.msra.mxu0 0.0
    %3355 = vmatprep.subr.mxu0 0.0
    %3356 = vmatpush1.msra.mxu0 0.0
    %3357 = vmatprep.subr.mxu0 0.0
    %3358 = vmatpush1.msra.mxu0 0.0
    %3359 = vmatprep.subr.mxu0 0.0
    %3360 = vmatpush1.msra.mxu0 0.0
    %3361 = vmatprep.subr.mxu0 0.0
    %3362 = vmatpush1.msra.mxu0 0.0
    %3363 = vmatprep.subr.mxu0 0.0
    %3364 = vmatpush1.msra.mxu0 0.0
    %3365 = vmatprep.subr.mxu0 0.0
    %3366 = vmatpush1.msra.mxu0 0.0
    %3367 = vmatprep.subr.mxu0 0.0
    %3368 = vmatpush1.msra.mxu0 0.0
    %3369 = vmatprep.subr.mxu0 0.0
    %3370 = vmatpush1.msra.mxu0 0.0
    %3371 = vmatprep.subr.mxu0 0.0
    %3372 = vmatpush1.msra.mxu0 0.0
    %3373 = vmatprep.subr.mxu0 0.0
    %3374 = vmatpush1.msra.mxu0 0.0
    %3375 = vmatprep.subr.mxu0 0.0
    %3376 = vmatpush1.msra.mxu0 %v3270
    %3377 = vmatprep.subr.mxu0 0.0
    %3378 = vmatpush1.msra.mxu0 %v3269
    %3379 = vmatprep.subr.mxu0 0.0
    %3380 = vmatpush2.msra.mxu0 0.0
    %3381 = vmatprep.subr.mxu0 0.0
    %3382 = vmatpush2.msra.mxu0 0.0
    %3383 = vmatprep.subr.mxu0 0.0
    %3384 = vmatpush2.msra.mxu0 0.0
    %3385 = vmatprep.subr.mxu0 0.0
    %3386 = vmatpush2.msra.mxu0 0.0
    %3387 = vmatprep.subr.mxu0 0.0
    %3388 = vmatpush2.msra.mxu0 0.0
    %3389 = vmatprep.subr.mxu0 0.0
    %3390 = vmatpush2.msra.mxu0 0.0
    %3391 = vmatprep.subr.mxu0 0.0
    %3392 = vmatpush2.msra.mxu0 0.0
    %3393 = vmatprep.subr.mxu0 0.0
    %3394 = vmatpush2.msra.mxu0 0.0
    %3395 = vmatprep.subr.mxu0 0.0
    %3396 = vmatpush2.msra.mxu0 0.0
    %3397 = vmatprep.subr.mxu0 0.0
    %3398 = vmatpush2.msra.mxu0 0.0
    %3399 = vmatprep.subr.mxu0 0.0
    %3400 = vmatpush2.msra.mxu0 0.0
    %3401 = vmatprep.subr.mxu0 0.0
    %3402 = vmatpush2.msra.mxu0 0.0
    %3403 = vmatprep.subr.mxu0 0.0
    %3404 = vmatpush2.msra.mxu0 0.0
    %3405 = vmatprep.subr.mxu0 0.0
    %3406 = vmatpush2.msra.mxu0 0.0
    %3407 = vmatprep.subr.mxu0 0.0
    %3408 = vmatpush2.msra.mxu0 0.0
    %3409 = vmatprep.subr.mxu0 0.0
    %3410 = vmatpush2.msra.mxu0 0.0
    %3411 = vmatprep.mubr.f32.mxu0 0.0
    %3412 = vmatmul.mubr.f32.gmra.mxu0 %v3345
    %v3413 = vpop.f32.mrf.mxu0
    %v3414 = vadd.f32 0.0, %v3413
    %v3415 = vpop.f32.mrf.mxu0
    %3416 = vdwg.mxu0
    %v3417 = vadd.f32 %v3093, %v3341
    %v3418 = vadd.f32 %v3094, %v3414
    %v3419 = vlaneseq
    %v3420 = vshrl.u32 %v3419, 7
    %v3421 = vsub.s32 3, %v3420
    %v3422 = vrot.slane %v160, %v3421
    %v3424 = vsel %vm189, %v3417, 0
    %v3427 = vsel %vm189, %v3418, 0
    %3429 = vmatprep.subr.mxu0 0.0
    %3430 = vmatpush1.msra.mxu0 0.0
    %3431 = vmatprep.subr.mxu0 0.0
    %3432 = vmatpush1.msra.mxu0 0.0
    %3433 = vmatprep.subr.mxu0 0.0
    %3434 = vmatpush1.msra.mxu0 0.0
    %3435 = vmatprep.subr.mxu0 0.0
    %3436 = vmatpush1.msra.mxu0 0.0
    %3437 = vmatprep.subr.mxu0 0.0
    %3438 = vmatpush1.msra.mxu0 0.0
    %3439 = vmatprep.subr.mxu0 0.0
    %3440 = vmatpush1.msra.mxu0 0.0
    %3441 = vmatprep.subr.mxu0 0.0
    %3442 = vmatpush1.msra.mxu0 0.0
    %3443 = vmatprep.subr.mxu0 0.0
    %3444 = vmatpush1.msra.mxu0 0.0
    %3445 = vmatprep.subr.mxu0 0.0
    %3446 = vmatpush1.msra.mxu0 0.0
    %3447 = vmatprep.subr.mxu0 0.0
    %3448 = vmatpush1.msra.mxu0 0.0
    %3449 = vmatprep.subr.mxu0 0.0
    %3450 = vmatpush1.msra.mxu0 0.0
    %3451 = vmatprep.subr.mxu0 0.0
    %3452 = vmatpush1.msra.mxu0 0.0
    %3453 = vmatprep.subr.mxu0 0.0
    %3454 = vmatpush1.msra.mxu0 %v2113
    %3455 = vmatprep.subr.mxu0 0.0
    %3456 = vmatpush1.msra.mxu0 %v2112
    %3457 = vmatprep.subr.mxu0 0.0
    %3458 = vmatpush1.msra.mxu0 %v2111
    %3459 = vmatprep.subr.mxu0 0.0
    %3460 = vmatpush1.msra.mxu0 %v2110
    %3461 = vmatprep.subr.mxu0 0.0
    %3462 = vmatpush2.msra.mxu0 0.0
    %3463 = vmatprep.subr.mxu0 0.0
    %3464 = vmatpush2.msra.mxu0 0.0
    %3465 = vmatprep.subr.mxu0 0.0
    %3466 = vmatpush2.msra.mxu0 0.0
    %3467 = vmatprep.subr.mxu0 0.0
    %3468 = vmatpush2.msra.mxu0 0.0
    %3469 = vmatprep.subr.mxu0 0.0
    %3470 = vmatpush2.msra.mxu0 0.0
    %3471 = vmatprep.subr.mxu0 0.0
    %3472 = vmatpush2.msra.mxu0 0.0
    %3473 = vmatprep.subr.mxu0 0.0
    %3474 = vmatpush2.msra.mxu0 0.0
    %3475 = vmatprep.subr.mxu0 0.0
    %3476 = vmatpush2.msra.mxu0 0.0
    %3477 = vmatprep.subr.mxu0 0.0
    %3478 = vmatpush2.msra.mxu0 0.0
    %3479 = vmatprep.subr.mxu0 0.0
    %3480 = vmatpush2.msra.mxu0 0.0
    %3481 = vmatprep.subr.mxu0 0.0
    %3482 = vmatpush2.msra.mxu0 0.0
    %3483 = vmatprep.subr.mxu0 0.0
    %3484 = vmatpush2.msra.mxu0 0.0
    %3485 = vmatprep.subr.mxu0 0.0
    %3486 = vmatpush2.msra.mxu0 0.0
    %3487 = vmatprep.subr.mxu0 0.0
    %3488 = vmatpush2.msra.mxu0 0.0
    %3489 = vmatprep.subr.mxu0 0.0
    %3490 = vmatpush2.msra.mxu0 0.0
    %3491 = vmatprep.subr.mxu0 0.0
    %3492 = vmatpush2.msra.mxu0 0.0
    %3493 = vmatprep.mubr.f32.mxu0 0.0
    %3494 = vmatmul.mubr.f32.gmra.mxu0 %v3424
    %v3495 = vpop.f32.mrf.mxu0
    %v3496 = vadd.f32 %v3422, %v3495
    %v3497 = vpop.f32.mrf.mxu0
    %3498 = vmatprep.mubr.f32.mxu0 0.0
    %3499 = vmatmul.mubr.f32.gmra.mxu0 %v3427
    %v3500 = vpop.f32.mrf.mxu0
    %v3501 = vadd.f32 %v3422, %v3500
    %v3502 = vpop.f32.mrf.mxu0
    %3503 = vdwg.mxu0
    %v3504 = vadd.f32 %v1803, %v3496
    %v3505 = vadd.f32 %v1804, %v3501
    %v3506 = vsel %vm189, %v3504, 0.0
    %3507 = vadd.xlane.f32.xlu0 %v3506
    %v3508 = vpop.xlane.xlu0 %3507
    %v3509 = vsel %vm189, %v3505, 0.0
    %3510 = vadd.xlane.f32.xlu0 %v3509
    %v3511 = vpop.xlane.xlu0 %3510
    %v3512 = vmul.f32 %v3508, %v1768
    %v3513 = vmul.f32 %v3511, %v1768
    %v3514 = vmul.f32 %v3504, %v3504
    %v3515 = vmul.f32 %v3505, %v3505
    %v3516 = vsel %vm189, %v3514, 0.0
    %3517 = vadd.xlane.f32.xlu0 %v3516
    %v3518 = vpop.xlane.xlu0 %3517
    %v3519 = vsel %vm189, %v3515, 0.0
    %3520 = vadd.xlane.f32.xlu0 %v3519
    %v3521 = vpop.xlane.xlu0 %3520
    %v3522 = vmul.f32 %v3518, %v1768
    %v3523 = vmul.f32 %v3521, %v1768
    %v3524 = vmul.f32 %v3512, %v3512
    %v3525 = vmul.f32 %v3513, %v3513
    %v3526 = vsub.f32 %v3522, %v3524
    %v3527 = vsub.f32 %v3523, %v3525
    %v3528 = vsub.f32 %v3504, %v3512
    %v3529 = vsub.f32 %v3505, %v3513
    %v3530 = vadd.f32 %v3526, 1e-05
    %v3531 = vadd.f32 %v3527, 1e-05
    %v3532 = vrsqrt.pop %v3530
    %v3533 = vrsqrt.pop %v3531
    %v3534 = vmul.f32 %v3528, %v3532
    %v3535 = vmul.f32 %v3529, %v3533
    %v3536 = vlaneseq
    %v3537 = vshrl.u32 %v3536, 7
    %v3538 = vsub.s32 1, %v3537
    %v3539 = vrot.slane %v157, %v3538
    %v3540 = vmul.f32 %v3534, %v3539
    %v3541 = vmul.f32 %v3535, %v3539
    %v3542 = vlaneseq
    %v3543 = vshrl.u32 %v3542, 7
    %v3544 = vsub.s32 1, %v3543
    %v3545 = vrot.slane %v158, %v3544
    %v3546 = vadd.f32 %v3540, %v3545
    %v3547 = vadd.f32 %v3541, %v3545
    %v3548 = vld [vmem:[%s13] sm:$0xff]
    %v3549 = vld [vmem:[%s13 + $0x8] sm:$0xff]
    %v3550 = vld [vmem:[%s13 + $0x10] sm:$0xff]
    %v3551 = vld [vmem:[%s13 + $0x18] sm:$0xff]
    %v3552 = vld [vmem:[#allocation7] sm:$0x1]
    %v3554 = vlaneseq
    %v3555 = vshrl.u32 %v3554, 7
    %v3556 = vsub.s32 0, %v3555
    %v3557 = vrot.slane %v3552, %v3556
    %v3560 = vsel %vm189, %v3546, 0
    %v3563 = vsel %vm189, %v3547, 0
    %3565 = vmatprep.subr.mxu0 0.0
    %3566 = vmatpush1.msra.mxu0 0.0
    %3567 = vmatprep.subr.mxu0 0.0
    %3568 = vmatpush1.msra.mxu0 0.0
    %3569 = vmatprep.subr.mxu0 0.0
    %3570 = vmatpush1.msra.mxu0 0.0
    %3571 = vmatprep.subr.mxu0 0.0
    %3572 = vmatpush1.msra.mxu0 0.0
    %3573 = vmatprep.subr.mxu0 0.0
    %3574 = vmatpush1.msra.mxu0 0.0
    %3575 = vmatprep.subr.mxu0 0.0
    %3576 = vmatpush1.msra.mxu0 0.0
    %3577 = vmatprep.subr.mxu0 0.0
    %3578 = vmatpush1.msra.mxu0 0.0
    %3579 = vmatprep.subr.mxu0 0.0
    %3580 = vmatpush1.msra.mxu0 0.0
    %3581 = vmatprep.subr.mxu0 0.0
    %3582 = vmatpush1.msra.mxu0 0.0
    %3583 = vmatprep.subr.mxu0 0.0
    %3584 = vmatpush1.msra.mxu0 0.0
    %3585 = vmatprep.subr.mxu0 0.0
    %3586 = vmatpush1.msra.mxu0 0.0
    %3587 = vmatprep.subr.mxu0 0.0
    %3588 = vmatpush1.msra.mxu0 0.0
    %3589 = vmatprep.subr.mxu0 0.0
    %3590 = vmatpush1.msra.mxu0 %v3551
    %3591 = vmatprep.subr.mxu0 0.0
    %3592 = vmatpush1.msra.mxu0 %v3550
    %3593 = vmatprep.subr.mxu0 0.0
    %3594 = vmatpush1.msra.mxu0 %v3549
    %3595 = vmatprep.subr.mxu0 0.0
    %3596 = vmatpush1.msra.mxu0 %v3548
    %3597 = vmatprep.subr.mxu0 0.0
    %3598 = vmatpush2.msra.mxu0 0.0
    %3599 = vmatprep.subr.mxu0 0.0
    %3600 = vmatpush2.msra.mxu0 0.0
    %3601 = vmatprep.subr.mxu0 0.0
    %3602 = vmatpush2.msra.mxu0 0.0
    %3603 = vmatprep.subr.mxu0 0.0
    %3604 = vmatpush2.msra.mxu0 0.0
    %3605 = vmatprep.subr.mxu0 0.0
    %3606 = vmatpush2.msra.mxu0 0.0
    %3607 = vmatprep.subr.mxu0 0.0
    %3608 = vmatpush2.msra.mxu0 0.0
    %3609 = vmatprep.subr.mxu0 0.0
    %3610 = vmatpush2.msra.mxu0 0.0
    %3611 = vmatprep.subr.mxu0 0.0
    %3612 = vmatpush2.msra.mxu0 0.0
    %3613 = vmatprep.subr.mxu0 0.0
    %3614 = vmatpush2.msra.mxu0 0.0
    %3615 = vmatprep.subr.mxu0 0.0
    %3616 = vmatpush2.msra.mxu0 0.0
    %3617 = vmatprep.subr.mxu0 0.0
    %3618 = vmatpush2.msra.mxu0 0.0
    %3619 = vmatprep.subr.mxu0 0.0
    %3620 = vmatpush2.msra.mxu0 0.0
    %3621 = vmatprep.subr.mxu0 0.0
    %3622 = vmatpush2.msra.mxu0 0.0
    %3623 = vmatprep.subr.mxu0 0.0
    %3624 = vmatpush2.msra.mxu0 0.0
    %3625 = vmatprep.subr.mxu0 0.0
    %3626 = vmatpush2.msra.mxu0 0.0
    %3627 = vmatprep.subr.mxu0 0.0
    %3628 = vmatpush2.msra.mxu0 0.0
    %3629 = vmatprep.mubr.f32.mxu0 0.0
    %3630 = vmatmul.mubr.f32.gmra.mxu0 %v3560
    %v3631 = vpop.f32.mrf.mxu0
    %v3632 = vadd.f32 %v3557, %v3631
    %v3633 = vpop.f32.mrf.mxu0
    %3634 = vmatprep.mubr.f32.mxu0 0.0
    %3635 = vmatmul.mubr.f32.gmra.mxu0 %v3563
    %v3636 = vpop.f32.mrf.mxu0
    %v3637 = vadd.f32 %v3557, %v3636
    %v3638 = vpop.f32.mrf.mxu0
    %3639 = vdwg.mxu0
    %v3640 = vmax.f32 %v3632, 0.0
    %v3641 = vmax.f32 %v3637, 0.0
    %v3642 = vld [vmem:[%s15] sm:$0xff]
    %v3643 = vld [vmem:[%s15 + $0x8] sm:$0xff]
    %v3644 = vld [vmem:[%s15 + $0x10] sm:$0xff]
    %v3645 = vld [vmem:[%s15 + $0x18] sm:$0xff]
    %v3646 = vld [vmem:[%s15 + $0x20] sm:$0xff]
    %v3647 = vld [vmem:[%s15 + $0x28] sm:$0xff]
    %v3648 = vld [vmem:[%s15 + $0x30] sm:$0xff]
    %v3649 = vld [vmem:[%s15 + $0x38] sm:$0xff]
    %v3650 = vld [vmem:[#allocation9] sm:$0x1]
    %v3652 = vlaneseq
    %v3653 = vshrl.u32 %v3652, 7
    %v3654 = vsub.s32 0, %v3653
    %v3655 = vrot.slane %v3650, %v3654
    %vm3657 = vcmask 523264
    %v3659 = vsel %vm3657, %v3640, 0
    %v3662 = vsel %vm3657, %v3641, 0
    %3664 = vmatprep.subr.mxu0 0.0
    %3665 = vmatpush1.msra.mxu0 0.0
    %3666 = vmatprep.subr.mxu0 0.0
    %3667 = vmatpush1.msra.mxu0 0.0
    %3668 = vmatprep.subr.mxu0 0.0
    %3669 = vmatpush1.msra.mxu0 0.0
    %3670 = vmatprep.subr.mxu0 0.0
    %3671 = vmatpush1.msra.mxu0 0.0
    %3672 = vmatprep.subr.mxu0 0.0
    %3673 = vmatpush1.msra.mxu0 0.0
    %3674 = vmatprep.subr.mxu0 0.0
    %3675 = vmatpush1.msra.mxu0 0.0
    %3676 = vmatprep.subr.mxu0 0.0
    %3677 = vmatpush1.msra.mxu0 0.0
    %3678 = vmatprep.subr.mxu0 0.0
    %3679 = vmatpush1.msra.mxu0 0.0
    %3680 = vmatprep.subr.mxu0 0.0
    %3681 = vmatpush1.msra.mxu0 %v3649
    %3682 = vmatprep.subr.mxu0 0.0
    %3683 = vmatpush1.msra.mxu0 %v3648
    %3684 = vmatprep.subr.mxu0 0.0
    %3685 = vmatpush1.msra.mxu0 %v3647
    %3686 = vmatprep.subr.mxu0 0.0
    %3687 = vmatpush1.msra.mxu0 %v3646
    %3688 = vmatprep.subr.mxu0 0.0
    %3689 = vmatpush1.msra.mxu0 %v3645
    %3690 = vmatprep.subr.mxu0 0.0
    %3691 = vmatpush1.msra.mxu0 %v3644
    %3692 = vmatprep.subr.mxu0 0.0
    %3693 = vmatpush1.msra.mxu0 %v3643
    %3694 = vmatprep.subr.mxu0 0.0
    %3695 = vmatpush1.msra.mxu0 %v3642
    %3696 = vmatprep.subr.mxu0 0.0
    %3697 = vmatpush2.msra.mxu0 0.0
    %3698 = vmatprep.subr.mxu0 0.0
    %3699 = vmatpush2.msra.mxu0 0.0
    %3700 = vmatprep.subr.mxu0 0.0
    %3701 = vmatpush2.msra.mxu0 0.0
    %3702 = vmatprep.subr.mxu0 0.0
    %3703 = vmatpush2.msra.mxu0 0.0
    %3704 = vmatprep.subr.mxu0 0.0
    %3705 = vmatpush2.msra.mxu0 0.0
    %3706 = vmatprep.subr.mxu0 0.0
    %3707 = vmatpush2.msra.mxu0 0.0
    %3708 = vmatprep.subr.mxu0 0.0
    %3709 = vmatpush2.msra.mxu0 0.0
    %3710 = vmatprep.subr.mxu0 0.0
    %3711 = vmatpush2.msra.mxu0 0.0
    %3712 = vmatprep.subr.mxu0 0.0
    %3713 = vmatpush2.msra.mxu0 0.0
    %3714 = vmatprep.subr.mxu0 0.0
    %3715 = vmatpush2.msra.mxu0 0.0
    %3716 = vmatprep.subr.mxu0 0.0
    %3717 = vmatpush2.msra.mxu0 0.0
    %3718 = vmatprep.subr.mxu0 0.0
    %3719 = vmatpush2.msra.mxu0 0.0
    %3720 = vmatprep.subr.mxu0 0.0
    %3721 = vmatpush2.msra.mxu0 0.0
    %3722 = vmatprep.subr.mxu0 0.0
    %3723 = vmatpush2.msra.mxu0 0.0
    %3724 = vmatprep.subr.mxu0 0.0
    %3725 = vmatpush2.msra.mxu0 0.0
    %3726 = vmatprep.subr.mxu0 0.0
    %3727 = vmatpush2.msra.mxu0 0.0
    %3728 = vmatprep.mubr.f32.mxu0 0.0
    %3729 = vmatmul.mubr.f32.gmra.mxu0 %v3659
    %v3730 = vpop.f32.mrf.mxu0
    %v3731 = vadd.f32 %v3655, %v3730
    %v3732 = vpop.f32.mrf.mxu0
    %3733 = vmatprep.mubr.f32.mxu0 0.0
    %3734 = vmatmul.mubr.f32.gmra.mxu0 %v3662
    %v3735 = vpop.f32.mrf.mxu0
    %v3736 = vadd.f32 %v3655, %v3735
    %v3737 = vpop.f32.mrf.mxu0
    %3738 = vdwg.mxu0
    %v3739 = vadd.f32 %v3546, %v3731
    %v3740 = vadd.f32 %v3547, %v3736
    %v3741 = vsel %vm189, %v3739, 0.0
    %3742 = vadd.xlane.f32.xlu0 %v3741
    %v3743 = vpop.xlane.xlu0 %3742
    %v3744 = vsel %vm189, %v3740, 0.0
    %3745 = vadd.xlane.f32.xlu0 %v3744
    %v3746 = vpop.xlane.xlu0 %3745
    %v3747 = vmul.f32 %v3743, %v1768
    %v3748 = vmul.f32 %v3746, %v1768
    %v3749 = vmul.f32 %v3739, %v3739
    %v3750 = vmul.f32 %v3740, %v3740
    %v3751 = vsel %vm189, %v3749, 0.0
    %3752 = vadd.xlane.f32.xlu0 %v3751
    %v3753 = vpop.xlane.xlu0 %3752
    %v3754 = vsel %vm189, %v3750, 0.0
    %3755 = vadd.xlane.f32.xlu0 %v3754
    %v3756 = vpop.xlane.xlu0 %3755
    %v3757 = vmul.f32 %v3753, %v1768
    %v3758 = vmul.f32 %v3756, %v1768
    %v3759 = vmul.f32 %v3747, %v3747
    %v3760 = vmul.f32 %v3748, %v3748
    %v3761 = vsub.f32 %v3757, %v3759
    %v3762 = vsub.f32 %v3758, %v3760
    %v3763 = vsub.f32 %v3739, %v3747
    %v3764 = vsub.f32 %v3740, %v3748
    %v3765 = vadd.f32 %v3761, 1e-05
    %v3766 = vadd.f32 %v3762, 1e-05
    %v3767 = vrsqrt.pop %v3765
    %v3768 = vrsqrt.pop %v3766
    %v3769 = vmul.f32 %v3763, %v3767
    %v3770 = vmul.f32 %v3764, %v3768
    %v3771 = vlaneseq
    %v3772 = vshrl.u32 %v3771, 7
    %v3773 = vsub.s32 2, %v3772
    %v3774 = vrot.slane %v157, %v3773
    %v3775 = vmul.f32 %v3769, %v3774
    %v3776 = vmul.f32 %v3770, %v3774
    %v3777 = vlaneseq
    %v3778 = vshrl.u32 %v3777, 7
    %v3779 = vsub.s32 2, %v3778
    %v3780 = vrot.slane %v158, %v3779
    %v3781 = vadd.f32 %v3775, %v3780
    %v3782 = vadd.f32 %v3776, %v3780
    %3783 = vst.msk [vmem:[%s19] sm:$0xff] %vm189, %v3781
    %3784 = vst.msk [vmem:[%s19 + $0x8] sm:$0xff] %vm189, %v3782
    // Predicated region
    $region106: #{_decoder_layer_impl.1} parent=1 // pred_check
      _
    $region107: #{_decoder_layer_impl.1} parent=1 // pred_check_branch
      %3786 = sbr.rel (0) target = $region109
    $region108: #{_decoder_layer_impl.1} parent=1 // pred_region
      _
    $region109: #{_decoder_layer_impl.1} parent=1 // pred_fallthru
      _
    // Predicated region
    $region110: #{_decoder_layer_impl.1} parent=1 // pred_check
      _
    $region111: #{_decoder_layer_impl.1} parent=1 // pred_check_branch
      %3788 = sbr.rel (0) target = $region113
    $region112: #{_decoder_layer_impl.1} parent=1 // pred_region
      _
    $region113: #{_decoder_layer_impl.1} parent=1 // pred_fallthru
      _
    %3789 = vsyncpa [#allocation3], 1
    %3790 = vsyncpa [#allocation5], 1
    %3791 = vsyncpa [#allocation8], 1
    %3792 = vsyncpa [#allocation11], 1

</llo_original>
